<compile_context>
chip_gen: v7x
topology: tpu7x:2x2x1
jax: 0.10.0
libtpu: 0.0.40
codegen_flags: <defaults>
</compile_context>

<pallas_src>
import jax
import jax.numpy as jnp
from jax.experimental import pallas as pl
from jax.experimental.pallas import tpu as pltpu

IMAGENET_MEAN = (0.485, 0.456, 0.406)
IMAGENET_STD = (0.229, 0.224, 0.225)

FREQ_DIM = 512
CLIP_DIM = 768
FUSED_DIM = FREQ_DIM + CLIP_DIM          # 1280 merged output columns
N_SPLIT = 2                              # megacore split of the output columns
N_PER_CORE = FUSED_DIM // N_SPLIT        # 640 (shard 0 straddles the 512 branch boundary)


def _hybrid_kernel(freq_ref, clip_ref, std_ref, mean_ref, w_ref, fcw_ref,
                   dotf_ref, dotc_ref, sosf_ref, sosc_ref, acc_ref):
    n = pl.program_id(0)                 # output-column shard (parallel axis)
    k = pl.program_id(1)                 # K reduction step (arbitrary axis)

    @pl.when(k == 0)
    def _():
        acc_ref[...] = jnp.zeros_like(acc_ref)

    # CLIP-branch de-normalization: Normalize(mean=[-m/s], std=[1/s]) + clamp(0,1)
    # is exactly clamp(x*std + mean, 0, 1).  Inputs stream as bf16; the denorm
    # arithmetic runs in f32 and is cast back to bf16 right before the MXU.
    denorm = jnp.clip(
        clip_ref[...].astype(jnp.float32) * std_ref[...] + mean_ref[...],
        0.0, 1.0).astype(jnp.bfloat16)

    w = w_ref[...]                       # (tk, 640) bf16 merged-weight shard

    # Merged-weight global columns [0, 512) belong to the FreqNet projection
    # (LHS = freq image); [512, 1280) to the CLIP projection (LHS = denorm).
    # Shard n=0 owns globals [0, 640) -> straddles the boundary; n=1 owns
    # [640, 1280) -> pure CLIP.
    @pl.when(n == 0)
    def _():
        acc_ref[:, :FREQ_DIM] += jnp.dot(
            freq_ref[...], w[:, :FREQ_DIM], preferred_element_type=jnp.float32)
        acc_ref[:, FREQ_DIM:] += jnp.dot(
            denorm, w[:, FREQ_DIM:], preferred_element_type=jnp.float32)

    @pl.when(n == 1)
    def _():
        acc_ref[...] += jnp.dot(denorm, w, preferred_element_type=jnp.float32)

    # Finalize: per-branch partial fc dot products and sums of squares for this
    # shard (VPU multiply + lane reduce; no N=1 MXU matmul).
    @pl.when(k == pl.num_programs(1) - 1)
    def _():
        acc = acc_ref[...]                                   # (B, 640) f32
        fcw = fcw_ref[...]                                   # (1, 640) f32
        col = jax.lax.broadcasted_iota(jnp.int32, acc.shape, 1) + n * N_PER_CORE
        is_freq = col < FREQ_DIM
        prod = acc * fcw
        sq = acc * acc
        zero = jnp.zeros_like(prod)
        dotf_ref[...] = jnp.sum(jnp.where(is_freq, prod, zero), -1, keepdims=True)[None]
        dotc_ref[...] = jnp.sum(jnp.where(is_freq, zero, prod), -1, keepdims=True)[None]
        sosf_ref[...] = jnp.sum(jnp.where(is_freq, sq, zero), -1, keepdims=True)[None]
        sosc_ref[...] = jnp.sum(jnp.where(is_freq, zero, sq), -1, keepdims=True)[None]


def _round_up(x, m):
    return ((x + m - 1) // m) * m


def _vmem_capacity_bytes():
    try:
        return int(pltpu.get_tpu_info().vmem_capacity_bytes)
    except Exception:
        return 64 * 1024 * 1024          # conservative (v7x per-core) fallback


def _per_k_buffer_bytes(B):
    # One pipeline buffer's VMEM bytes per K element: bf16 weight shard columns,
    # two bf16 activation rows, f32 std/mean rows.
    return N_PER_CORE * 2 + 2 * B * 2 + 2 * 4


def _choose_k_tiling(K, B, vmem_cap):
    budget = int(vmem_cap * 0.45)                      # leave room for acc/out/compiler scratch
    tk_cap = max(256, (budget // (2 * _per_k_buffer_bytes(B))) // 256 * 256)
    if K <= tk_cap:
        return K, 1                                    # single full-K block (legal for any K)
    for tk in range(tk_cap, 255, -256):                # largest multiple-of-256 divisor
        if K % tk == 0:
            return tk, K // tk
    tk = tk_cap                                        # no divisor: cdiv grid + zero-padded K
    return tk, pl.cdiv(K, tk)


def _vmem_limit_bytes(tk, B, vmem_cap):
    need = 2 * tk * _per_k_buffer_bytes(B)             # double-buffered input tiles
    need += B * N_PER_CORE * 4                         # f32 accumulator scratch
    need += 2 * (4 * B * 4)                            # tiny stat outputs
    need += 2 * N_PER_CORE * 4                         # fc head row blocks
    return min(vmem_cap, max(32 << 20, need + (8 << 20)))


def hybrid_forward(freq_input, clip_input, w_merged, fc_w, fc_b):
    """freq_input, clip_input: (B, 3, H, W) float32, ImageNet-normalized.

    w_merged: (K, 1280) bf16 fused backbone projections; fc_w: (1, 1280) f32;
    fc_b: () f32.
    """
    B, C, H, W = freq_input.shape
    K = C * H * W
    HW = H * W

    # bf16 activation streaming (halves activation HBM bytes); accumulation stays f32.
    freq_flat = freq_input.reshape(B, K).astype(jnp.bfloat16)
    clip_flat = clip_input.reshape(B, K).astype(jnp.bfloat16)

    # Per-flattened-column denormalization scale / offset (channel is the slow axis).
    std_row = jnp.repeat(jnp.asarray(IMAGENET_STD, jnp.float32), HW).reshape(1, K)
    mean_row = jnp.repeat(jnp.asarray(IMAGENET_MEAN, jnp.float32), HW).reshape(1, K)

    vmem_cap = _vmem_capacity_bytes()
    tk, kt = _choose_k_tiling(K, B, vmem_cap)
    K_pad = tk * kt
    if K_pad != K:
        # Zero-padded K is exact (zero activations contribute nothing).
        # TODO(synk): for repeated inference hoist this pad (esp. the weight pad)
        # out of the per-call path.
        kp = ((0, 0), (0, K_pad - K))
        freq_flat = jnp.pad(freq_flat, kp)
        clip_flat = jnp.pad(clip_flat, kp)
        std_row = jnp.pad(std_row, kp)
        mean_row = jnp.pad(mean_row, kp)
        w_merged = jnp.pad(w_merged, ((0, K_pad - K), (0, 0)))

    cost = pl.CostEstimate(
        flops=2 * B * K_pad * FUSED_DIM + 8 * B * FUSED_DIM,
        transcendentals=0,
        bytes_accessed=(K_pad * FUSED_DIM * 2                # merged bf16 weight (streamed once)
                        + N_SPLIT * 2 * B * K_pad * 2        # both activation streams, per shard
                        + N_SPLIT * 2 * K_pad * 4            # std / mean rows, per shard
                        + FUSED_DIM * 4                      # fc head row
                        + 4 * N_SPLIT * B * 4))              # partial-stat outputs

    stat_shape = jax.ShapeDtypeStruct((N_SPLIT, B, 1), jnp.float32)
    stat_spec = pl.BlockSpec((1, B, 1), lambda n, k: (n, 0, 0))

    dot_f, dot_c, sos_f, sos_c = pl.pallas_call(
        _hybrid_kernel,
        out_shape=(stat_shape, stat_shape, stat_shape, stat_shape),
        grid=(N_SPLIT, kt),
        in_specs=[
            pl.BlockSpec((B, tk), lambda n, k: (0, k)),            # freq image (bf16)
            pl.BlockSpec((B, tk), lambda n, k: (0, k)),            # clip image (bf16)
            pl.BlockSpec((1, tk), lambda n, k: (0, k)),            # per-col std (f32)
            pl.BlockSpec((1, tk), lambda n, k: (0, k)),            # per-col mean (f32)
            pl.BlockSpec((tk, N_PER_CORE), lambda n, k: (k, n)),   # merged backbone W (bf16)
            pl.BlockSpec((1, N_PER_CORE), lambda n, k: (0, n)),    # fc head row shard (f32)
        ],
        out_specs=(stat_spec, stat_spec, stat_spec, stat_spec),
        scratch_shapes=[
            pltpu.VMEM((B, N_PER_CORE), jnp.float32),              # f32 accumulator shard
        ],
        compiler_params=pltpu.CompilerParams(
            dimension_semantics=("parallel", "arbitrary"),
            vmem_limit_bytes=_vmem_limit_bytes(tk, B, vmem_cap)),
        cost_estimate=cost,
    )(freq_flat, clip_flat, std_row, mean_row, w_merged, fc_w)

    # Tiny epilogue combining the two megacore shards: per-branch L2 norms factor
    # out of the linear head, so only 4 scalars per row cross the kernel boundary.
    df = jnp.sum(dot_f, axis=0)[:, 0]
    dc = jnp.sum(dot_c, axis=0)[:, 0]
    sf = jnp.sum(sos_f, axis=0)[:, 0]
    sc = jnp.sum(sos_c, axis=0)[:, 0]
    eps = 1e-12                                           # F.normalize eps
    logits = (df * jax.lax.rsqrt(jnp.maximum(sf, eps * eps))
              + dc * jax.lax.rsqrt(jnp.maximum(sc, eps * eps))
              + fc_b)
    return logits                                         # == logits.squeeze()


def init_params(key, K):
    k1, k2, k3 = jax.random.split(key, 3)
    # Synthetic stand-ins for FreqNet / CLIP image-encoder projections, fused
    # column-wise into one (K, 1280) bf16 array -> one weight DMA per K tile.
    w_merged = (jax.random.normal(k1, (K, FUSED_DIM), jnp.float32)
                / jnp.sqrt(K)).astype(jnp.bfloat16)
    # nn.Linear(1280, 1): uniform(-1/sqrt(fan_in), 1/sqrt(fan_in)).
    bound = 1.0 / (FUSED_DIM ** 0.5)
    fc_w = jax.random.uniform(k2, (1, FUSED_DIM), jnp.float32, -bound, bound)
    fc_b = jax.random.uniform(k3, (), jnp.float32, -bound, bound)
    return w_merged, fc_w, fc_b


if __name__ == "__main__":
    B, C, H, W = 2, 3, 16, 16
    key = jax.random.PRNGKey(0)
    k_img, k_params = jax.random.split(key)

    # The reference module feeds the same ImageNet-normalized images to both
    # branches (the clip branch is denormalized inside the kernel); the wrapper
    # still takes them separately to preserve forward(freq_input, clip_input).
    images = jax.random.normal(k_img, (B, C, H, W), jnp.float32)
    freq_input = images
    clip_input = images

    w_merged, fc_w, fc_b = init_params(k_params, C * H * W)

    logits = hybrid_forward(freq_input, clip_input, w_merged, fc_w, fc_b)
    jax.block_until_ready(logits)
    assert logits.shape == (B,), logits.shape
    assert bool(jnp.all(jnp.isfinite(logits)))
    print("KERNEL_OK")
</pallas_src>

<mosaic_0001>
module attributes {stable_mosaic.version = 11 : i64} {
  func.func @_hybrid_kernel(%arg0: i32, %arg1: i32, %arg2: memref<2x768xbf16, #tpu.memory_space<vmem>>, %arg3: memref<2x768xbf16, #tpu.memory_space<vmem>>, %arg4: memref<1x768xf32, #tpu.memory_space<vmem>>, %arg5: memref<1x768xf32, #tpu.memory_space<vmem>>, %arg6: memref<768x640xbf16, #tpu.memory_space<vmem>>, %arg7: memref<1x640xf32, #tpu.memory_space<vmem>>, %arg8: memref<1x2x1xf32, #tpu.memory_space<vmem>>, %arg9: memref<1x2x1xf32, #tpu.memory_space<vmem>>, %arg10: memref<1x2x1xf32, #tpu.memory_space<vmem>>, %arg11: memref<1x2x1xf32, #tpu.memory_space<vmem>>, %arg12: memref<2x640xf32, #tpu.memory_space<vmem>>) attributes {dimension_semantics = [#tpu.dimension_semantics<parallel>, #tpu.dimension_semantics<arbitrary>], iteration_bounds = array<i64: 2, 1>, scalar_prefetch = 0 : i64, scratch_operands = 1 : i64, tpu.core_type = #tpu.core_type<tc>, window_params = [{transform_indices = @transform_0, window_bounds = array<i64: 2, 768>}, {transform_indices = @transform_1, window_bounds = array<i64: 2, 768>}, {transform_indices = @transform_2, window_bounds = array<i64: 1, 768>}, {transform_indices = @transform_3, window_bounds = array<i64: 1, 768>}, {transform_indices = @transform_4, window_bounds = array<i64: 768, 640>}, {transform_indices = @transform_5, window_bounds = array<i64: 1, 640>}, {transform_indices = @transform_6, window_bounds = array<i64: 1, 2, 1>}, {transform_indices = @transform_7, window_bounds = array<i64: 1, 2, 1>}, {transform_indices = @transform_8, window_bounds = array<i64: 1, 2, 1>}, {transform_indices = @transform_9, window_bounds = array<i64: 1, 2, 1>}]} {
    %c0_i32 = arith.constant 0 : i32
    %0 = arith.cmpi eq, %arg1, %c0_i32 : i32
    %1 = arith.extui %0 : i1 to i32
    %c0_i32_0 = arith.constant 0 : i32
    %2 = arith.cmpi ne, %1, %c0_i32_0 : i32
    scf.if %2 {
      %cst_14 = arith.constant 0.000000e+00 : f32
      %26 = vector.broadcast %cst_14 : f32 to vector<2x640xf32>
      %c0_15 = arith.constant 0 : index
      %c0_16 = arith.constant 0 : index
      %27 = vector.load %arg12[%c0_15, %c0_16] : memref<2x640xf32, #tpu.memory_space<vmem>>, vector<2x640xf32>
      tpu.vector_store %arg12[%c0_15, %c0_16], %26 {strides = array<i32>} : memref<2x640xf32, #tpu.memory_space<vmem>>, vector<2x640xf32>,
    } else {
    }
    %c0 = arith.constant 0 : index
    %c0_1 = arith.constant 0 : index
    %3 = vector.load %arg3[%c0, %c0_1] : memref<2x768xbf16, #tpu.memory_space<vmem>>, vector<2x768xbf16>
    %4 = arith.extf %3 : vector<2x768xbf16> to vector<2x768xf32>
    %c0_2 = arith.constant 0 : index
    %c0_3 = arith.constant 0 : index
    %5 = vector.load %arg4[%c0_2, %c0_3] : memref<1x768xf32, #tpu.memory_space<vmem>>, vector<1x768xf32>
    %6 = vector.broadcast %5 : vector<1x768xf32> to vector<2x768xf32>
    %7 = arith.mulf %4, %6 : vector<2x768xf32>
    %c0_4 = arith.constant 0 : index
    %c0_5 = arith.constant 0 : index
    %8 = vector.load %arg5[%c0_4, %c0_5] : memref<1x768xf32, #tpu.memory_space<vmem>>, vector<1x768xf32>
    %9 = vector.broadcast %8 : vector<1x768xf32> to vector<2x768xf32>
    %10 = arith.addf %7, %9 : vector<2x768xf32>
    %cst = arith.constant 0.000000e+00 : f32
    %cst_6 = arith.constant 1.000000e+00 : f32
    %11 = vector.broadcast %cst : f32 to vector<2x768xf32>
    %12 = arith.maximumf %11, %10 : vector<2x768xf32>
    %13 = vector.broadcast %cst_6 : f32 to vector<2x768xf32>
    %14 = arith.minimumf %13, %12 : vector<2x768xf32>
    %15 = arith.truncf %14 : vector<2x768xf32> to vector<2x768xbf16>
    %c0_7 = arith.constant 0 : index
    %c0_8 = arith.constant 0 : index
    %16 = vector.load %arg6[%c0_7, %c0_8] : memref<768x640xbf16, #tpu.memory_space<vmem>>, vector<768x640xbf16>
    %c0_i32_9 = arith.constant 0 : i32
    %17 = arith.cmpi eq, %arg0, %c0_i32_9 : i32
    %18 = arith.extui %17 : i1 to i32
    %c0_i32_10 = arith.constant 0 : i32
    %19 = arith.cmpi ne, %18, %c0_i32_10 : i32
    scf.if %19 {
      %c0_14 = arith.constant 0 : index
      %c0_15 = arith.constant 0 : index
      %26 = vector.load %arg12[%c0_14, %c0_15] : memref<2x640xf32, #tpu.memory_space<vmem>>, vector<2x512xf32>
      %c0_16 = arith.constant 0 : index
      %c0_17 = arith.constant 0 : index
      %27 = vector.load %arg2[%c0_16, %c0_17] : memref<2x768xbf16, #tpu.memory_space<vmem>>, vector<2x768xbf16>
      %28 = vector.extract_strided_slice %16 {offsets = [0, 0], sizes = [768, 512], strides = [1, 1]} : vector<768x640xbf16> to vector<768x512xbf16>
      %cst_18 = arith.constant dense<0.000000e+00> : vector<2x512xf32>
      %29 = tpu.matmul %27, %28, %cst_18 {dimension_numbers = #tpu.dot_dimension_numbers<[1], [0], [0], [1], [0, 0, 1, 1], [], []>} : vector<2x768xbf16>, vector<768x512xbf16>, vector<2x512xf32> -> vector<2x512xf32>
      %30 = arith.addf %26, %29 : vector<2x512xf32>
      %c0_19 = arith.constant 0 : index
      %c0_20 = arith.constant 0 : index
      %31 = vector.load %arg12[%c0_19, %c0_20] : memref<2x640xf32, #tpu.memory_space<vmem>>, vector<2x512xf32>
      tpu.vector_store %arg12[%c0_19, %c0_20], %30 {strides = array<i32>} : memref<2x640xf32, #tpu.memory_space<vmem>>, vector<2x512xf32>,
      %c0_21 = arith.constant 0 : index
      %c512 = arith.constant 512 : index
      %32 = vector.load %arg12[%c0_21, %c512] : memref<2x640xf32, #tpu.memory_space<vmem>>, vector<2x128xf32>
      %33 = vector.extract_strided_slice %16 {offsets = [0, 512], sizes = [768, 128], strides = [1, 1]} : vector<768x640xbf16> to vector<768x128xbf16>
      %cst_22 = arith.constant dense<0.000000e+00> : vector<2x128xf32>
      %34 = tpu.matmul %15, %33, %cst_22 {dimension_numbers = #tpu.dot_dimension_numbers<[1], [0], [0], [1], [0, 0, 1, 1], [], []>} : vector<2x768xbf16>, vector<768x128xbf16>, vector<2x128xf32> -> vector<2x128xf32>
      %35 = arith.addf %32, %34 : vector<2x128xf32>
      %c0_23 = arith.constant 0 : index
      %c512_24 = arith.constant 512 : index
      %36 = vector.load %arg12[%c0_23, %c512_24] : memref<2x640xf32, #tpu.memory_space<vmem>>, vector<2x128xf32>
      tpu.vector_store %arg12[%c0_23, %c512_24], %35 {strides = array<i32>} : memref<2x640xf32, #tpu.memory_space<vmem>>, vector<2x128xf32>,
    } else {
    }
    %c1_i32 = arith.constant 1 : i32
    %20 = arith.cmpi eq, %arg0, %c1_i32 : i32
    %21 = arith.extui %20 : i1 to i32
    %c0_i32_11 = arith.constant 0 : i32
    %22 = arith.cmpi ne, %21, %c0_i32_11 : i32
    scf.if %22 {
      %c0_14 = arith.constant 0 : index
      %c0_15 = arith.constant 0 : index
      %26 = vector.load %arg12[%c0_14, %c0_15] : memref<2x640xf32, #tpu.memory_space<vmem>>, vector<2x640xf32>
      %cst_16 = arith.constant dense<0.000000e+00> : vector<2x640xf32>
      %27 = tpu.matmul %15, %16, %cst_16 {dimension_numbers = #tpu.dot_dimension_numbers<[1], [0], [0], [1], [0, 0, 1, 1], [], []>} : vector<2x768xbf16>, vector<768x640xbf16>, vector<2x640xf32> -> vector<2x640xf32>
      %28 = arith.addf %26, %27 : vector<2x640xf32>
      %c0_17 = arith.constant 0 : index
      %c0_18 = arith.constant 0 : index
      %29 = vector.load %arg12[%c0_17, %c0_18] : memref<2x640xf32, #tpu.memory_space<vmem>>, vector<2x640xf32>
      tpu.vector_store %arg12[%c0_17, %c0_18], %28 {strides = array<i32>} : memref<2x640xf32, #tpu.memory_space<vmem>>, vector<2x640xf32>,
    } else {
    }
    %c0_i32_12 = arith.constant 0 : i32
    %23 = arith.cmpi eq, %arg1, %c0_i32_12 : i32
    %24 = arith.extui %23 : i1 to i32
    %c0_i32_13 = arith.constant 0 : i32
    %25 = arith.cmpi ne, %24, %c0_i32_13 : i32
    scf.if %25 {
      %c0_14 = arith.constant 0 : index
      %c0_15 = arith.constant 0 : index
      %26 = vector.load %arg12[%c0_14, %c0_15] : memref<2x640xf32, #tpu.memory_space<vmem>>, vector<2x640xf32>
      %c0_16 = arith.constant 0 : index
      %c0_17 = arith.constant 0 : index
      %27 = vector.load %arg7[%c0_16, %c0_17] : memref<1x640xf32, #tpu.memory_space<vmem>>, vector<1x640xf32>
      %28 = tpu.iota {dimensions = array<i32: 1>} : vector<2x640xi32>
      %c640_i32 = arith.constant 640 : i32
      %29 = arith.muli %arg0, %c640_i32 : i32
      %30 = vector.broadcast %29 : i32 to vector<2x640xi32>
      %31 = arith.addi %28, %30 : vector<2x640xi32>
      %c512_i32 = arith.constant 512 : i32
      %32 = vector.broadcast %c512_i32 : i32 to vector<2x640xi32>
      %33 = arith.cmpi slt, %31, %32 : vector<2x640xi32>
      %34 = vector.broadcast %27 : vector<1x640xf32> to vector<2x640xf32>
      %35 = arith.mulf %26, %34 : vector<2x640xf32>
      %36 = arith.mulf %26, %26 : vector<2x640xf32>
      %cst_18 = arith.constant 0.000000e+00 : f32
      %37 = vector.broadcast %cst_18 : f32 to vector<2x640xf32>
      %38 = arith.select %33, %35, %37 : vector<2x640xi1>, vector<2x640xf32>
      %cst_19 = arith.constant dense<0.000000e+00> : vector<2xf32>
      %39 = vector.multi_reduction <add>, %38, %cst_19 [1] : vector<2x640xf32> to vector<2xf32>
      %40 = vector.shape_cast %39 : vector<2xf32> to vector<2x1xf32>
      %41 = vector.shape_cast %40 : vector<2x1xf32> to vector<1x2x1xf32>
      %c0_20 = arith.constant 0 : index
      %c0_21 = arith.constant 0 : index
      %c0_22 = arith.constant 0 : index
      %42 = vector.load %arg8[%c0_20, %c0_21, %c0_22] : memref<1x2x1xf32, #tpu.memory_space<vmem>>, vector<1x2x1xf32>
      tpu.vector_store %arg8[%c0_20, %c0_21, %c0_22], %41 {strides = array<i32>} : memref<1x2x1xf32, #tpu.memory_space<vmem>>, vector<1x2x1xf32>,
      %43 = arith.select %33, %37, %35 : vector<2x640xi1>, vector<2x640xf32>
      %cst_23 = arith.constant dense<0.000000e+00> : vector<2xf32>
      %44 = vector.multi_reduction <add>, %43, %cst_23 [1] : vector<2x640xf32> to vector<2xf32>
      %45 = vector.shape_cast %44 : vector<2xf32> to vector<2x1xf32>
      %46 = vector.shape_cast %45 : vector<2x1xf32> to vector<1x2x1xf32>
      %c0_24 = arith.constant 0 : index
      %c0_25 = arith.constant 0 : index
      %c0_26 = arith.constant 0 : index
      %47 = vector.load %arg9[%c0_24, %c0_25, %c0_26] : memref<1x2x1xf32, #tpu.memory_space<vmem>>, vector<1x2x1xf32>
      tpu.vector_store %arg9[%c0_24, %c0_25, %c0_26], %46 {strides = array<i32>} : memref<1x2x1xf32, #tpu.memory_space<vmem>>, vector<1x2x1xf32>,
      %48 = arith.select %33, %36, %37 : vector<2x640xi1>, vector<2x640xf32>
      %cst_27 = arith.constant dense<0.000000e+00> : vector<2xf32>
      %49 = vector.multi_reduction <add>, %48, %cst_27 [1] : vector<2x640xf32> to vector<2xf32>
      %50 = vector.shape_cast %49 : vector<2xf32> to vector<2x1xf32>
      %51 = vector.shape_cast %50 : vector<2x1xf32> to vector<1x2x1xf32>
      %c0_28 = arith.constant 0 : index
      %c0_29 = arith.constant 0 : index
      %c0_30 = arith.constant 0 : index
      %52 = vector.load %arg10[%c0_28, %c0_29, %c0_30] : memref<1x2x1xf32, #tpu.memory_space<vmem>>, vector<1x2x1xf32>
      tpu.vector_store %arg10[%c0_28, %c0_29, %c0_30], %51 {strides = array<i32>} : memref<1x2x1xf32, #tpu.memory_space<vmem>>, vector<1x2x1xf32>,
      %53 = arith.select %33, %37, %36 : vector<2x640xi1>, vector<2x640xf32>
      %cst_31 = arith.constant dense<0.000000e+00> : vector<2xf32>
      %54 = vector.multi_reduction <add>, %53, %cst_31 [1] : vector<2x640xf32> to vector<2xf32>
      %55 = vector.shape_cast %54 : vector<2xf32> to vector<2x1xf32>
      %56 = vector.shape_cast %55 : vector<2x1xf32> to vector<1x2x1xf32>
      %c0_32 = arith.constant 0 : index
      %c0_33 = arith.constant 0 : index
      %c0_34 = arith.constant 0 : index
      %57 = vector.load %arg11[%c0_32, %c0_33, %c0_34] : memref<1x2x1xf32, #tpu.memory_space<vmem>>, vector<1x2x1xf32>
      tpu.vector_store %arg11[%c0_32, %c0_33, %c0_34], %56 {strides = array<i32>} : memref<1x2x1xf32, #tpu.memory_space<vmem>>, vector<1x2x1xf32>,
    } else {
    }
    return
  }
  func.func @transform_0(%arg0: i32, %arg1: i32) -> (i32, i32) {
    %c0_i32 = arith.constant 0 : i32
    %c0_i32_0 = arith.constant 0 : i32
    return %c0_i32, %arg1 : i32, i32
  }
  func.func @transform_1(%arg0: i32, %arg1: i32) -> (i32, i32) {
    %c0_i32 = arith.constant 0 : i32
    %c0_i32_0 = arith.constant 0 : i32
    return %c0_i32, %arg1 : i32, i32
  }
  func.func @transform_2(%arg0: i32, %arg1: i32) -> (i32, i32) {
    %c0_i32 = arith.constant 0 : i32
    %c0_i32_0 = arith.constant 0 : i32
    return %c0_i32, %arg1 : i32, i32
  }
  func.func @transform_3(%arg0: i32, %arg1: i32) -> (i32, i32) {
    %c0_i32 = arith.constant 0 : i32
    %c0_i32_0 = arith.constant 0 : i32
    return %c0_i32, %arg1 : i32, i32
  }
  func.func @transform_4(%arg0: i32, %arg1: i32) -> (i32, i32) {
    %c0_i32 = arith.constant 0 : i32
    return %arg1, %arg0 : i32, i32
  }
  func.func @transform_5(%arg0: i32, %arg1: i32) -> (i32, i32) {
    %c0_i32 = arith.constant 0 : i32
    %c0_i32_0 = arith.constant 0 : i32
    return %c0_i32, %arg0 : i32, i32
  }
  func.func @transform_6(%arg0: i32, %arg1: i32) -> (i32, i32, i32) {
    %c0_i32 = arith.constant 0 : i32
    %c0_i32_0 = arith.constant 0 : i32
    %c0_i32_1 = arith.constant 0 : i32
    return %arg0, %c0_i32, %c0_i32_0 : i32, i32, i32
  }
  func.func @transform_7(%arg0: i32, %arg1: i32) -> (i32, i32, i32) {
    %c0_i32 = arith.constant 0 : i32
    %c0_i32_0 = arith.constant 0 : i32
    %c0_i32_1 = arith.constant 0 : i32
    return %arg0, %c0_i32, %c0_i32_0 : i32, i32, i32
  }
  func.func @transform_8(%arg0: i32, %arg1: i32) -> (i32, i32, i32) {
    %c0_i32 = arith.constant 0 : i32
    %c0_i32_0 = arith.constant 0 : i32
    %c0_i32_1 = arith.constant 0 : i32
    return %arg0, %c0_i32, %c0_i32_0 : i32, i32, i32
  }
  func.func @transform_9(%arg0: i32, %arg1: i32) -> (i32, i32, i32) {
    %c0_i32 = arith.constant 0 : i32
    %c0_i32_0 = arith.constant 0 : i32
    %c0_i32_1 = arith.constant 0 : i32
    return %arg0, %c0_i32, %c0_i32_0 : i32, i32, i32
  }
}

</mosaic_0001>

<llo_original>
// kernel: tpu_custom_call.1
$region0: #{tpu_custom_call.1}
  #allocation0 [shape = 'u32[]', space=smem, size = 0x4, offset = 0x4, fixed_abs, tag = 'smem constant byte address 0x4 - core index']
  #allocation1 [shape = 'u32[144,128]{1,0:T(1,128)}', space=vmem, size = 0x12000, scoped, tag = 'internal scratch']
  #allocation2 [shape = 'f32[2,640]{1,0:T(2,128)}', space=vmem, size = 0x1400, scoped, tag = 'scratch operand']
  %s0 = inlined_call_operand.hbm [shape: bf16[2,768], index: 0, kind: input, shape index: {}]
  %s1 = inlined_call_operand.hbm [shape: bf16[2,768], index: 1, kind: input, shape index: {}]
  %s2 = inlined_call_operand.hbm [shape: f32[1,768], index: 2, kind: input, shape index: {}]
  %s3 = inlined_call_operand.hbm [shape: f32[1,768], index: 3, kind: input, shape index: {}]
  %s4 = inlined_call_operand.hbm [shape: bf16[768,1280], index: 4, kind: input, shape index: {}]
  %s5 = inlined_call_operand.hbm [shape: f32[1,1280], index: 5, kind: input, shape index: {}]
  %s6 = inlined_call_operand.vmem [shape: f32[2,2,1], index: 6, kind: output, shape index: {0}]
  %s7 = inlined_call_operand.vmem [shape: f32[2,2,1], index: 7, kind: output, shape index: {1}]
  %s8 = inlined_call_operand.vmem [shape: f32[2,2,1], index: 8, kind: output, shape index: {2}]
  %s9 = inlined_call_operand.vmem [shape: f32[2,2,1], index: 9, kind: output, shape index: {3}]
  %10 = xla_tuple %s6, %s7, %s8, %s9
  %s11 = sld [smem:[#allocation0]]
  $region121: #{tpu_custom_call.1} parent=0
    _
  %s13 = ssub.s32 1, %s11
  %s14 = scalar_select 0, %s13, %s11
  $region1: #{tpu_custom_call.1} parent=0
    #allocation3 [shape = 'u8[3072]{0}', space=vmem, size = 0xc00, scoped, tag = 'input window, operand 0, single buffered']
    #allocation4 [shape = 's32[2]{0}', space=sflag, size = 0x8, scoped, tag = 'scoped memory for tpu_custom_call.1']
    #allocation5 [shape = 'u8[3072]{0}', space=vmem, size = 0xc00, scoped, tag = 'input window, operand 1, single buffered']
    #allocation6 [shape = 's32[1]{0}', space=sflag, size = 0x4, scoped, tag = 'scoped memory for tpu_custom_call.1']
    #allocation7 [shape = 'u8[3072]{0}', space=vmem, size = 0xc00, scoped, tag = 'input window, operand 2, single buffered']
    #allocation8 [shape = 'u8[3072]{0}', space=vmem, size = 0xc00, scoped, tag = 'input window, operand 3, single buffered']
    #allocation9 [shape = 's32[1]{0}', space=sflag, size = 0x4, scoped, tag = 'scoped memory for tpu_custom_call.1']
    #allocation10 [shape = 'u8[1966080]{0}', space=vmem, size = 0x1e0000, scoped, tag = 'input window, operand 4']
    #allocation11 [shape = 'u8[5120]{0}', space=vmem, size = 0x1400, scoped, tag = 'input window, operand 5']
    %15 = vsyncpa [#allocation4], 0
    %16 = vsyncpa [#allocation6], 0
    %17 = vsyncpa [#allocation9], 0
    loop: start=0, step=1, limit=4
    $region2: #{tpu_custom_call.1} parent=1 // loop_pre_header
      _
    $region3: #{tpu_custom_call.1} parent=1 // loop_header
      %s19 = sphi 0, %s23
      %p20 = scmp.ge.s32.totalorder %s19, 4
      %s26 = sphi 0, %s38
      %s27 = sphi 0, %s34
      %s28 = sphi 0, %s26
      %s29 = sphi 0, %s27
      %s30 = sphi 0, %s28
      %s31 = sphi 0, %s29
      %s41 = sphi 0, %s43
      %s44 = sphi 0, %s41
      %s45 = sphi 0, %s44
      %s61 = sphi 0, %s45
      %s67 = sphi 0, %s69
      %s70 = sphi 0, %s67
      %s71 = sphi 0, %s70
      %s87 = sphi 0, %s71
      %s93 = sphi 0, %s95
      %s96 = sphi 0, %s93
      %s97 = sphi 0, %s96
      %s113 = sphi 0, %s97
      %s119 = sphi 0, %s121
      %s122 = sphi 0, %s119
      %s123 = sphi 0, %s122
      %s139 = sphi 0, %s123
      %s147 = sphi 0, %s149
      %s150 = sphi 0, %s147
      %s151 = sphi 0, %s150
      %s167 = sphi 0, %s151
      %s173 = sphi 0, %s175
      %s176 = sphi 0, %s173
      %s177 = sphi 0, %s176
      %s193 = sphi 0, %s177
      %s199 = sphi 0, %s201
      %s202 = sphi 0, %s199
      %s203 = sphi 0, %s202
      %s219 = sphi 0, %s203
      %s225 = sphi 0, %s227
      %s228 = sphi 0, %s225
      %s229 = sphi 0, %s228
      %s245 = sphi 0, %s229
      %s251 = sphi 0, %s253
      %s254 = sphi 0, %s251
      %s255 = sphi 0, %s254
      %s271 = sphi 0, %s255
      %s277 = sphi 0, %s279
      %s280 = sphi 0, %s277
      %s281 = sphi 0, %s280
      %s297 = sphi 0, %s281
    $region4: #{tpu_custom_call.1} parent=1 // loop_header_branch
      %22 = sbr.rel (%p20) target = $region8
    $region5: #{tpu_custom_call.1} parent=1 // loop_body
      %s24 = ssub.s32 %s19, 1
      %s25 = ssub.s32 %s19, 2
      %s32 = sadd.s32 1, %s27
      %p33 = scmp.ge.s32.totalorder %s32, 1
      %s34 = scalar_select %p33, 0, %s32
      %s35 = sadd.s32 1, %s26
      %s36 = scalar_select %p33, %s35, %s26
      %p37 = scmp.ge.s32.totalorder %s36, 2
      %s38 = scalar_select %p37, 0, %s36
      %s39 = ssub.s32 %s27, %s34
      %p40 = scmp.eq.s32.totalorder %s39, 0
      %s42 = sadd.s32 %s41, 1
      %s43 = scalar_select %p40, %s41, %s42
      %p46 = pneg %p40
      %p47 = scmp.eq.s32.totalorder %s19, 1
      %p48 = por %p46, %p47
      %p49 = scmp.ne.s32.totalorder %s41, %s44
      %p50 = scmp.eq.s32.totalorder %s19, 0
      %p51 = por %p49, %p50
      %p52 = scmp.ne.s32.totalorder %s41, %s44
      %p53 = scmp.eq.s32.totalorder %s24, 1
      %p54 = por %p52, %p53
      %p55 = scmp.ne.s32.totalorder %s44, %s45
      %p56 = scmp.eq.s32.totalorder %s24, 0
      %p57 = por %p55, %p56
      %p58 = scmp.ne.s32.totalorder %s44, %s45
      %p59 = scmp.eq.s32.totalorder %s25, 1
      %p60 = por %p58, %p59
      %p62 = scmp.ne.s32.totalorder %s45, %s61
      %p63 = scmp.eq.s32.totalorder %s25, 0
      %p64 = por %p62, %p63
      %s65 = ssub.s32 %s27, %s34
      %p66 = scmp.eq.s32.totalorder %s65, 0
      %s68 = sadd.s32 %s67, 1
      %s69 = scalar_select %p66, %s67, %s68
      %p72 = pneg %p66
      %p73 = scmp.eq.s32.totalorder %s19, 1
      %p74 = por %p72, %p73
      %p75 = scmp.ne.s32.totalorder %s67, %s70
      %p76 = scmp.eq.s32.totalorder %s19, 0
      %p77 = por %p75, %p76
      %p78 = scmp.ne.s32.totalorder %s67, %s70
      %p79 = scmp.eq.s32.totalorder %s24, 1
      %p80 = por %p78, %p79
      %p81 = scmp.ne.s32.totalorder %s70, %s71
      %p82 = scmp.eq.s32.totalorder %s24, 0
      %p83 = por %p81, %p82
      %p84 = scmp.ne.s32.totalorder %s70, %s71
      %p85 = scmp.eq.s32.totalorder %s25, 1
      %p86 = por %p84, %p85
      %p88 = scmp.ne.s32.totalorder %s71, %s87
      %p89 = scmp.eq.s32.totalorder %s25, 0
      %p90 = por %p88, %p89
      %s91 = ssub.s32 %s27, %s34
      %p92 = scmp.eq.s32.totalorder %s91, 0
      %s94 = sadd.s32 %s93, 1
      %s95 = scalar_select %p92, %s93, %s94
      %p98 = pneg %p92
      %p99 = scmp.eq.s32.totalorder %s19, 1
      %p100 = por %p98, %p99
      %p101 = scmp.ne.s32.totalorder %s93, %s96
      %p102 = scmp.eq.s32.totalorder %s19, 0
      %p103 = por %p101, %p102
      %p104 = scmp.ne.s32.totalorder %s93, %s96
      %p105 = scmp.eq.s32.totalorder %s24, 1
      %p106 = por %p104, %p105
      %p107 = scmp.ne.s32.totalorder %s96, %s97
      %p108 = scmp.eq.s32.totalorder %s24, 0
      %p109 = por %p107, %p108
      %p110 = scmp.ne.s32.totalorder %s96, %s97
      %p111 = scmp.eq.s32.totalorder %s25, 1
      %p112 = por %p110, %p111
      %p114 = scmp.ne.s32.totalorder %s97, %s113
      %p115 = scmp.eq.s32.totalorder %s25, 0
      %p116 = por %p114, %p115
      %s117 = ssub.s32 %s27, %s34
      %p118 = scmp.eq.s32.totalorder %s117, 0
      %s120 = sadd.s32 %s119, 1
      %s121 = scalar_select %p118, %s119, %s120
      %p124 = pneg %p118
      %p125 = scmp.eq.s32.totalorder %s19, 1
      %p126 = por %p124, %p125
      %p127 = scmp.ne.s32.totalorder %s119, %s122
      %p128 = scmp.eq.s32.totalorder %s19, 0
      %p129 = por %p127, %p128
      %p130 = scmp.ne.s32.totalorder %s119, %s122
      %p131 = scmp.eq.s32.totalorder %s24, 1
      %p132 = por %p130, %p131
      %p133 = scmp.ne.s32.totalorder %s122, %s123
      %p134 = scmp.eq.s32.totalorder %s24, 0
      %p135 = por %p133, %p134
      %p136 = scmp.ne.s32.totalorder %s122, %s123
      %p137 = scmp.eq.s32.totalorder %s25, 1
      %p138 = por %p136, %p137
      %p140 = scmp.ne.s32.totalorder %s123, %s139
      %p141 = scmp.eq.s32.totalorder %s25, 0
      %p142 = por %p140, %p141
      %s143 = ssub.s32 %s27, %s34
      %s144 = ssub.s32 %s26, %s38
      %s145 = sor.u32 %s143, %s144
      %p146 = scmp.eq.s32.totalorder %s145, 0
      %s148 = sadd.s32 %s147, 1
      %s149 = scalar_select %p146, %s147, %s148
      %p152 = pneg %p146
      %p153 = scmp.eq.s32.totalorder %s19, 1
      %p154 = por %p152, %p153
      %p155 = scmp.ne.s32.totalorder %s147, %s150
      %p156 = scmp.eq.s32.totalorder %s19, 0
      %p157 = por %p155, %p156
      %p158 = scmp.ne.s32.totalorder %s147, %s150
      %p159 = scmp.eq.s32.totalorder %s24, 1
      %p160 = por %p158, %p159
      %p161 = scmp.ne.s32.totalorder %s150, %s151
      %p162 = scmp.eq.s32.totalorder %s24, 0
      %p163 = por %p161, %p162
      %p164 = scmp.ne.s32.totalorder %s150, %s151
      %p165 = scmp.eq.s32.totalorder %s25, 1
      %p166 = por %p164, %p165
      %p168 = scmp.ne.s32.totalorder %s151, %s167
      %p169 = scmp.eq.s32.totalorder %s25, 0
      %p170 = por %p168, %p169
      %s171 = ssub.s32 %s26, %s38
      %p172 = scmp.eq.s32.totalorder %s171, 0
      %s174 = sadd.s32 %s173, 1
      %s175 = scalar_select %p172, %s173, %s174
      %p178 = pneg %p172
      %p179 = scmp.eq.s32.totalorder %s19, 1
      %p180 = por %p178, %p179
      %p181 = scmp.ne.s32.totalorder %s173, %s176
      %p182 = scmp.eq.s32.totalorder %s19, 0
      %p183 = por %p181, %p182
      %p184 = scmp.ne.s32.totalorder %s173, %s176
      %p185 = scmp.eq.s32.totalorder %s24, 1
      %p186 = por %p184, %p185
      %p187 = scmp.ne.s32.totalorder %s176, %s177
      %p188 = scmp.eq.s32.totalorder %s24, 0
      %p189 = por %p187, %p188
      %p190 = scmp.ne.s32.totalorder %s176, %s177
      %p191 = scmp.eq.s32.totalorder %s25, 1
      %p192 = por %p190, %p191
      %p194 = scmp.ne.s32.totalorder %s177, %s193
      %p195 = scmp.eq.s32.totalorder %s25, 0
      %p196 = por %p194, %p195
      %s197 = ssub.s32 %s26, %s38
      %p198 = scmp.eq.s32.totalorder %s197, 0
      %s200 = sadd.s32 %s199, 1
      %s201 = scalar_select %p198, %s199, %s200
      %p204 = pneg %p198
      %p205 = scmp.eq.s32.totalorder %s19, 1
      %p206 = por %p204, %p205
      %p207 = scmp.ne.s32.totalorder %s199, %s202
      %p208 = scmp.eq.s32.totalorder %s19, 0
      %p209 = por %p207, %p208
      %p210 = scmp.ne.s32.totalorder %s199, %s202
      %p211 = scmp.eq.s32.totalorder %s24, 1
      %p212 = por %p210, %p211
      %p213 = scmp.ne.s32.totalorder %s202, %s203
      %p214 = scmp.eq.s32.totalorder %s24, 0
      %p215 = por %p213, %p214
      %p216 = scmp.ne.s32.totalorder %s202, %s203
      %p217 = scmp.eq.s32.totalorder %s25, 1
      %p218 = por %p216, %p217
      %p220 = scmp.ne.s32.totalorder %s203, %s219
      %p221 = scmp.eq.s32.totalorder %s25, 0
      %p222 = por %p220, %p221
      %s223 = ssub.s32 %s26, %s38
      %p224 = scmp.eq.s32.totalorder %s223, 0
      %s226 = sadd.s32 %s225, 1
      %s227 = scalar_select %p224, %s225, %s226
      %p230 = pneg %p224
      %p231 = scmp.eq.s32.totalorder %s19, 1
      %p232 = por %p230, %p231
      %p233 = scmp.ne.s32.totalorder %s225, %s228
      %p234 = scmp.eq.s32.totalorder %s19, 0
      %p235 = por %p233, %p234
      %p236 = scmp.ne.s32.totalorder %s225, %s228
      %p237 = scmp.eq.s32.totalorder %s24, 1
      %p238 = por %p236, %p237
      %p239 = scmp.ne.s32.totalorder %s228, %s229
      %p240 = scmp.eq.s32.totalorder %s24, 0
      %p241 = por %p239, %p240
      %p242 = scmp.ne.s32.totalorder %s228, %s229
      %p243 = scmp.eq.s32.totalorder %s25, 1
      %p244 = por %p242, %p243
      %p246 = scmp.ne.s32.totalorder %s229, %s245
      %p247 = scmp.eq.s32.totalorder %s25, 0
      %p248 = por %p246, %p247
      %s249 = ssub.s32 %s26, %s38
      %p250 = scmp.eq.s32.totalorder %s249, 0
      %s252 = sadd.s32 %s251, 1
      %s253 = scalar_select %p250, %s251, %s252
      %p256 = pneg %p250
      %p257 = scmp.eq.s32.totalorder %s19, 1
      %p258 = por %p256, %p257
      %p259 = scmp.ne.s32.totalorder %s251, %s254
      %p260 = scmp.eq.s32.totalorder %s19, 0
      %p261 = por %p259, %p260
      %p262 = scmp.ne.s32.totalorder %s251, %s254
      %p263 = scmp.eq.s32.totalorder %s24, 1
      %p264 = por %p262, %p263
      %p265 = scmp.ne.s32.totalorder %s254, %s255
      %p266 = scmp.eq.s32.totalorder %s24, 0
      %p267 = por %p265, %p266
      %p268 = scmp.ne.s32.totalorder %s254, %s255
      %p269 = scmp.eq.s32.totalorder %s25, 1
      %p270 = por %p268, %p269
      %p272 = scmp.ne.s32.totalorder %s255, %s271
      %p273 = scmp.eq.s32.totalorder %s25, 0
      %p274 = por %p272, %p273
      %s275 = ssub.s32 %s26, %s38
      %p276 = scmp.eq.s32.totalorder %s275, 0
      %s278 = sadd.s32 %s277, 1
      %s279 = scalar_select %p276, %s277, %s278
      %p282 = pneg %p276
      %p283 = scmp.eq.s32.totalorder %s19, 1
      %p284 = por %p282, %p283
      %p285 = scmp.ne.s32.totalorder %s277, %s280
      %p286 = scmp.eq.s32.totalorder %s19, 0
      %p287 = por %p285, %p286
      %p288 = scmp.ne.s32.totalorder %s277, %s280
      %p289 = scmp.eq.s32.totalorder %s24, 1
      %p290 = por %p288, %p289
      %p291 = scmp.ne.s32.totalorder %s280, %s281
      %p292 = scmp.eq.s32.totalorder %s24, 0
      %p293 = por %p291, %p292
      %p294 = scmp.ne.s32.totalorder %s280, %s281
      %p295 = scmp.eq.s32.totalorder %s25, 1
      %p296 = por %p294, %p295
      %p298 = scmp.ne.s32.totalorder %s281, %s297
      %p299 = scmp.eq.s32.totalorder %s25, 0
      %p300 = por %p298, %p299
      %p301 = scmp.le.s32.totalorder 1, %s19
      %p302 = scmp.lt.s32.totalorder %s19, 3
      %p303 = pnand %p301, %p302
      %p304 = pneg %p303
      // Predicated region
      $region9: #{tpu_custom_call.1} parent=5 // pred_check
        _
      $region10: #{tpu_custom_call.1} parent=5 // pred_check_branch
        %306 = sbr.rel (%p303) target = $region12
      $region11: #{tpu_custom_call.1} parent=5 // pred_region
        %s307 = ssub.s32 %s19, 1
        // Predicated region
        $region13: #{tpu_custom_call.1} parent=11 // pred_check
          %p308 = pneg %p57
        $region14: #{tpu_custom_call.1} parent=11 // pred_check_branch
          %310 = sbr.rel (%p308) target = $region16
        $region15: #{tpu_custom_call.1} parent=11 // pred_region
          %s311 = smul.u32 6, %s29
          %s313 = ssub.s32 96, 96
          %314 = vsyncadd [#allocation4], %s313
          %s315 = smul.addr %s311, 16
          %s316 = scalar_lea.hbm %s0, %s315
          %s318 = sshll.u32 [#allocation3], 4
          %s319 = int_to_ptr.vmem [resolvable:$true] %s318
          %321 = dma.hbm_to_vmem [thread:$0]  %s316, 96, %s319, [#allocation4]
        $region16: #{tpu_custom_call.1} parent=11 // pred_fallthru
          _
        // Predicated region
        $region17: #{tpu_custom_call.1} parent=11 // pred_check
          %p322 = pneg %p83
        $region18: #{tpu_custom_call.1} parent=11 // pred_check_branch
          %324 = sbr.rel (%p322) target = $region20
        $region19: #{tpu_custom_call.1} parent=11 // pred_region
          %s325 = smul.u32 6, %s29
          %s327 = ssub.s32 96, 96
          %328 = vsyncadd [#allocation6], %s327
          %s329 = smul.addr %s325, 16
          %s330 = scalar_lea.hbm %s1, %s329
          %s332 = sshll.u32 [#allocation5], 4
          %s333 = int_to_ptr.vmem [resolvable:$true] %s332
          %335 = dma.hbm_to_vmem [thread:$0]  %s330, 96, %s333, [#allocation6]
        $region20: #{tpu_custom_call.1} parent=11 // pred_fallthru
          _
        // Predicated region
        $region21: #{tpu_custom_call.1} parent=11 // pred_check
          %p336 = pneg %p109
        $region22: #{tpu_custom_call.1} parent=11 // pred_check_branch
          %338 = sbr.rel (%p336) target = $region24
        $region23: #{tpu_custom_call.1} parent=11 // pred_region
          %s339 = smul.u32 6, %s29
          %s341 = ssub.s32 96, 96
          %342 = vsyncadd [#allocation6], %s341
          %s343 = smul.addr %s339, 16
          %s344 = scalar_lea.hbm %s2, %s343
          %s346 = sshll.u32 [#allocation7], 4
          %s347 = int_to_ptr.vmem [resolvable:$true] %s346
          %349 = dma.hbm_to_vmem [thread:$0]  %s344, 96, %s347, [#allocation6]
        $region24: #{tpu_custom_call.1} parent=11 // pred_fallthru
          _
        // Predicated region
        $region25: #{tpu_custom_call.1} parent=11 // pred_check
          %p350 = pneg %p135
        $region26: #{tpu_custom_call.1} parent=11 // pred_check_branch
          %352 = sbr.rel (%p350) target = $region28
        $region27: #{tpu_custom_call.1} parent=11 // pred_region
          %s353 = smul.u32 6, %s29
          %s355 = ssub.s32 96, 96
          %356 = vsyncadd [#allocation9], %s355
          %s357 = smul.addr %s353, 16
          %s358 = scalar_lea.hbm %s3, %s357
          %s360 = sshll.u32 [#allocation8], 4
          %s361 = int_to_ptr.vmem [resolvable:$true] %s360
          %363 = dma.hbm_to_vmem [thread:$0]  %s358, 96, %s361, [#allocation9]
        $region28: #{tpu_custom_call.1} parent=11 // pred_fallthru
          _
      $region12: #{tpu_custom_call.1} parent=5 // pred_fallthru
        _
      %p364 = scmp.lt.s32.totalorder %s19, 2
      // Predicated region
      $region29: #{tpu_custom_call.1} parent=5 // pred_check
        %p365 = pneg %p364
      $region30: #{tpu_custom_call.1} parent=5 // pred_check_branch
        %367 = sbr.rel (%p365) target = $region32
      $region31: #{tpu_custom_call.1} parent=5 // pred_region
        // Predicated region
        $region33: #{tpu_custom_call.1} parent=31 // pred_check
          %p368 = pneg %p157
        $region34: #{tpu_custom_call.1} parent=31 // pred_check_branch
          %370 = sbr.rel (%p368) target = $region36
        $region35: #{tpu_custom_call.1} parent=31 // pred_region
          %s371 = sand.u32 %s19, 1
          %s372 = scalar_lea.sflag [#allocation4], %s371
          %s373 = sand.u32 %s147, 1
          %s374 = smul.addr %s373, 1920
          %s375 = scalar_lea.vmem [#allocation10], %s374
          %s376 = smul.u32 96, %s27
          %s377 = smul.u32 5, %s26
          %s379 = ssub.s32 30720, 30720
          %380 = vsyncadd %s372, %s379
          %s381 = smul.addr %s376, 10
          %s382 = sadd.s32 %s377, %s381
          %s383 = smul.addr %s382, 64
          %s384 = scalar_lea.hbm %s4, %s383
          %s385 = sshll.u32 %s375, 4
          %s386 = int_to_ptr.vmem [resolvable:$true] %s385
          %391 = dma.hbm_to_vmem [thread:$0]  %s384, 30720, %s386, %s372, 640, 320, 20
        $region36: #{tpu_custom_call.1} parent=31 // pred_fallthru
          _
        // Predicated region
        $region37: #{tpu_custom_call.1} parent=31 // pred_check
          %p392 = pneg %p183
        $region38: #{tpu_custom_call.1} parent=31 // pred_check_branch
          %394 = sbr.rel (%p392) target = $region40
        $region39: #{tpu_custom_call.1} parent=31 // pred_region
          %s395 = sand.u32 %s19, 1
          %s396 = scalar_lea.sflag [#allocation4], %s395
          %s397 = sand.u32 %s173, 1
          %s398 = smul.addr %s397, 5
          %s399 = scalar_lea.vmem [#allocation11], %s398
          %s400 = smul.u32 5, %s26
          %s402 = ssub.s32 80, 80
          %403 = vsyncadd %s396, %s402
          %s404 = smul.addr %s400, 16
          %s405 = scalar_lea.hbm %s5, %s404
          %s407 = sshll.u32 %s399, 4
          %s408 = int_to_ptr.vmem [resolvable:$true] %s407
          %410 = dma.hbm_to_vmem [thread:$0]  %s405, 80, %s408, %s396
        $region40: #{tpu_custom_call.1} parent=31 // pred_fallthru
          _
      $region32: #{tpu_custom_call.1} parent=5 // pred_fallthru
        _
      %p411 = scmp.le.s32.totalorder 1, %s19
      %p412 = scmp.lt.s32.totalorder %s19, 3
      %p413 = pnand %p411, %p412
      %p414 = pneg %p413
      // Predicated region
      $region41: #{tpu_custom_call.1} parent=5 // pred_check
        _
      $region42: #{tpu_custom_call.1} parent=5 // pred_check_branch
        %416 = sbr.rel (%p413) target = $region44
      $region43: #{tpu_custom_call.1} parent=5 // pred_region
        %s417 = ssub.s32 %s19, 1
        // Predicated region
        $region45: #{tpu_custom_call.1} parent=43 // pred_check
          %p418 = pneg %p57
        $region46: #{tpu_custom_call.1} parent=43 // pred_check_branch
          %420 = sbr.rel (%p418) target = $region48
        $region47: #{tpu_custom_call.1} parent=43 // pred_region
          %421 = dma.done [#allocation4], 96
        $region48: #{tpu_custom_call.1} parent=43 // pred_fallthru
          _
        // Predicated region
        $region49: #{tpu_custom_call.1} parent=43 // pred_check
          %p422 = pneg %p83
        $region50: #{tpu_custom_call.1} parent=43 // pred_check_branch
          %424 = sbr.rel (%p422) target = $region52
        $region51: #{tpu_custom_call.1} parent=43 // pred_region
          %425 = dma.done [#allocation6], 96
        $region52: #{tpu_custom_call.1} parent=43 // pred_fallthru
          _
        // Predicated region
        $region53: #{tpu_custom_call.1} parent=43 // pred_check
          %p426 = pneg %p109
        $region54: #{tpu_custom_call.1} parent=43 // pred_check_branch
          %428 = sbr.rel (%p426) target = $region56
        $region55: #{tpu_custom_call.1} parent=43 // pred_region
          %429 = dma.done [#allocation6], 96
        $region56: #{tpu_custom_call.1} parent=43 // pred_fallthru
          _
        // Predicated region
        $region57: #{tpu_custom_call.1} parent=43 // pred_check
          %p430 = pneg %p135
        $region58: #{tpu_custom_call.1} parent=43 // pred_check_branch
          %432 = sbr.rel (%p430) target = $region60
        $region59: #{tpu_custom_call.1} parent=43 // pred_region
          %433 = dma.done [#allocation9], 96
        $region60: #{tpu_custom_call.1} parent=43 // pred_fallthru
          _
        %s434 = sand.u32 %s24, 1
        %s435 = scalar_lea.sflag [#allocation4], %s434
        %s436 = sand.u32 %s150, 1
        %s437 = smul.addr %s436, 1920
        %s438 = scalar_lea.vmem [#allocation10], %s437
        // Predicated region
        $region61: #{tpu_custom_call.1} parent=43 // pred_check
          %p439 = pneg %p163
        $region62: #{tpu_custom_call.1} parent=43 // pred_check_branch
          %441 = sbr.rel (%p439) target = $region64
        $region63: #{tpu_custom_call.1} parent=43 // pred_region
          %442 = dma.done %s435, 30720
        $region64: #{tpu_custom_call.1} parent=43 // pred_fallthru
          _
        %s443 = sand.u32 %s24, 1
        %s444 = scalar_lea.sflag [#allocation4], %s443
        %s445 = sand.u32 %s176, 1
        %s446 = smul.addr %s445, 5
        %s447 = scalar_lea.vmem [#allocation11], %s446
        // Predicated region
        $region65: #{tpu_custom_call.1} parent=43 // pred_check
          %p448 = pneg %p189
        $region66: #{tpu_custom_call.1} parent=43 // pred_check_branch
          %450 = sbr.rel (%p448) target = $region68
        $region67: #{tpu_custom_call.1} parent=43 // pred_region
          %451 = dma.done %s444, 80
        $region68: #{tpu_custom_call.1} parent=43 // pred_fallthru
          _
        %p452 = pneg %p57
        %p453 = pneg %p54
        %p454 = pneg %p83
        %p455 = pneg %p80
        %p456 = pneg %p109
        %p457 = pneg %p106
        %p458 = pneg %p135
        %p459 = pneg %p132
        %s460 = sand.u32 %s24, 1
        %s461 = scalar_lea.sflag [#allocation4], %s460
        %s462 = sand.u32 %s150, 1
        %s463 = smul.addr %s462, 1920
        %s464 = scalar_lea.vmem [#allocation10], %s463
        %p465 = pneg %p163
        %p466 = pneg %p160
        %s467 = sand.u32 %s24, 1
        %s468 = scalar_lea.sflag [#allocation4], %s467
        %s469 = sand.u32 %s176, 1
        %s470 = smul.addr %s469, 5
        %s471 = scalar_lea.vmem [#allocation11], %s470
        %p472 = pneg %p189
        %p473 = pneg %p186
        %p474 = pneg %p215
        %p475 = pneg %p212
        %p476 = scmp.lt.s32.totalorder %s28, 1
        %s477 = scalar_select %p476, %s28, 1
        %s478 = smul.addr %s477, 2
        %s479 = scalar_lea.vmem %s6, %s478
        %p480 = pneg %p241
        %p481 = pneg %p238
        %p482 = scmp.lt.s32.totalorder %s28, 1
        %s483 = scalar_select %p482, %s28, 1
        %s484 = smul.addr %s483, 2
        %s485 = scalar_lea.vmem %s7, %s484
        %p486 = pneg %p267
        %p487 = pneg %p264
        %p488 = scmp.lt.s32.totalorder %s28, 1
        %s489 = scalar_select %p488, %s28, 1
        %s490 = smul.addr %s489, 2
        %s491 = scalar_lea.vmem %s8, %s490
        %p492 = pneg %p293
        %p493 = pneg %p290
        %p494 = scmp.lt.s32.totalorder %s28, 1
        %s495 = scalar_select %p494, %s28, 1
        %s496 = smul.addr %s495, 2
        %s497 = scalar_lea.vmem %s9, %s496
        %s498 = smul.u32 6, %s29
        %s499 = smul.u32 6, %s29
        %s500 = smul.u32 6, %s29
        %s501 = smul.u32 6, %s29
        %s502 = smul.u32 96, %s29
        %s503 = smul.u32 5, %s28
        %s504 = smul.u32 5, %s28
        %p505 = scmp.lt.s32.totalorder %s28, 1
        %s506 = scalar_select %p505, %s28, 1
        %s507 = smul.addr %s506, 2
        %s508 = scalar_lea.vmem %s6, %s507
        %p509 = scmp.lt.s32.totalorder %s28, 1
        %s510 = scalar_select %p509, %s28, 1
        %s511 = smul.addr %s510, 2
        %s512 = scalar_lea.vmem %s7, %s511
        %p513 = scmp.lt.s32.totalorder %s28, 1
        %s514 = scalar_select %p513, %s28, 1
        %s515 = smul.addr %s514, 2
        %s516 = scalar_lea.vmem %s8, %s515
        %p517 = scmp.lt.s32.totalorder %s28, 1
        %s518 = scalar_select %p517, %s28, 1
        %s519 = smul.addr %s518, 2
        %s520 = scalar_lea.vmem %s9, %s519
        %p522 = scmp.eq.s32.totalorder %s29, 0
        // Predicated region
        $region69: #{tpu_custom_call.1} parent=43 // pred_check
          %p523 = pneg %p522
        $region70: #{tpu_custom_call.1} parent=43 // pred_check_branch
          %525 = sbr.rel (%p523) target = $region72
        $region71: #{tpu_custom_call.1} parent=43 // pred_region
          %526 = vst [vmem:[#allocation2] sm:$0xff] 0.0
          %527 = vst [vmem:[#allocation2 + $0x8] sm:$0x3] 0.0
        $region72: #{tpu_custom_call.1} parent=43 // pred_fallthru
          _
        %v528 = vld [vmem:[#allocation5] sm:$0x3f]
        %v529 = vunpack.c.l.bf16 %v528
        %v530 = vunpack.c.h.bf16 %v528
        %v531 = vld [vmem:[#allocation7] sm:$0x3f]
        %v533 = vlaneseq
        %v534 = vshrl.u32 %v533, 7
        %v535 = vsub.s32 0, %v534
        %v536 = vrot.slane %v531, %v535
        %v537 = vlaneseq
        %v538 = vshrl.u32 %v537, 7
        %v539 = vsub.s32 1, %v538
        %v540 = vrot.slane %v531, %v539
        %v541 = vlaneseq
        %v542 = vshrl.u32 %v541, 7
        %v543 = vsub.s32 2, %v542
        %v544 = vrot.slane %v531, %v543
        %v545 = vlaneseq
        %v546 = vshrl.u32 %v545, 7
        %v547 = vsub.s32 3, %v546
        %v548 = vrot.slane %v531, %v547
        %v549 = vlaneseq
        %v550 = vshrl.u32 %v549, 7
        %v551 = vsub.s32 4, %v550
        %v552 = vrot.slane %v531, %v551
        %v553 = vlaneseq
        %v554 = vshrl.u32 %v553, 7
        %v555 = vsub.s32 5, %v554
        %v556 = vrot.slane %v531, %v555
        %v557 = vcombine.low %v536, %v540
        %v558 = vcombine.low %v544, %v548
        %v560 = vunpack.c.l.s4 1983009808
        %v561 = vunpack.c.0.s8 %v560
        %v562 = vlaneseq
        %v563 = vshrl.u32 %v562, 7
        %v564 = vsub.s32 %v561, %v563
        %v565 = vrot.slane %v557, %v564
        %v567 = vunpack.c.l.s4 1983009808
        %v568 = vunpack.c.0.s8 %v567
        %v569 = vlaneseq
        %v570 = vshrl.u32 %v569, 7
        %v571 = vsub.s32 %v568, %v570
        %v572 = vrot.slane %v558, %v571
        %v573 = vcombine.low %v565, %v572
        %v574 = vcombine.low %v552, %v556
        %v576 = vunpack.c.l.s4 1983009808
        %v577 = vunpack.c.0.s8 %v576
        %v578 = vlaneseq
        %v579 = vshrl.u32 %v578, 7
        %v580 = vsub.s32 %v577, %v579
        %v581 = vrot.slane %v574, %v580
        %v584 = vmul.f32 %v529, %v573
        %v585 = vmul.f32 %v530, %v581
        %v586 = vld [vmem:[#allocation8] sm:$0x3f]
        %v588 = vlaneseq
        %v589 = vshrl.u32 %v588, 7
        %v590 = vsub.s32 0, %v589
        %v591 = vrot.slane %v586, %v590
        %v592 = vlaneseq
        %v593 = vshrl.u32 %v592, 7
        %v594 = vsub.s32 1, %v593
        %v595 = vrot.slane %v586, %v594
        %v596 = vlaneseq
        %v597 = vshrl.u32 %v596, 7
        %v598 = vsub.s32 2, %v597
        %v599 = vrot.slane %v586, %v598
        %v600 = vlaneseq
        %v601 = vshrl.u32 %v600, 7
        %v602 = vsub.s32 3, %v601
        %v603 = vrot.slane %v586, %v602
        %v604 = vlaneseq
        %v605 = vshrl.u32 %v604, 7
        %v606 = vsub.s32 4, %v605
        %v607 = vrot.slane %v586, %v606
        %v608 = vlaneseq
        %v609 = vshrl.u32 %v608, 7
        %v610 = vsub.s32 5, %v609
        %v611 = vrot.slane %v586, %v610
        %v612 = vcombine.low %v591, %v595
        %v613 = vcombine.low %v599, %v603
        %v615 = vunpack.c.l.s4 1983009808
        %v616 = vunpack.c.0.s8 %v615
        %v617 = vlaneseq
        %v618 = vshrl.u32 %v617, 7
        %v619 = vsub.s32 %v616, %v618
        %v620 = vrot.slane %v612, %v619
        %v622 = vunpack.c.l.s4 1983009808
        %v623 = vunpack.c.0.s8 %v622
        %v624 = vlaneseq
        %v625 = vshrl.u32 %v624, 7
        %v626 = vsub.s32 %v623, %v625
        %v627 = vrot.slane %v613, %v626
        %v628 = vcombine.low %v620, %v627
        %v629 = vcombine.low %v607, %v611
        %v631 = vunpack.c.l.s4 1983009808
        %v632 = vunpack.c.0.s8 %v631
        %v633 = vlaneseq
        %v634 = vshrl.u32 %v633, 7
        %v635 = vsub.s32 %v632, %v634
        %v636 = vrot.slane %v629, %v635
        %v639 = vadd.f32 %v584, %v628
        %v640 = vadd.f32 %v585, %v636
        %v641 = vmax.f32 %v639, 0.0
        %v642 = vmax.f32 %v640, 0.0
        %v643 = vmin.f32 %v641, 1.0
        %v644 = vmin.f32 %v642, 1.0
        %v647 = vcombine.high %v643, %v643
        %v649 = vunpack.c.l.s4 1983009808
        %v650 = vunpack.c.0.s8 %v649
        %v651 = vlaneseq
        %v652 = vshrl.u32 %v651, 7
        %v653 = vsub.s32 %v650, %v652
        %v654 = vrot.slane %v643, %v653
        %v656 = vunpack.c.l.s4 1983009808
        %v657 = vunpack.c.0.s8 %v656
        %v658 = vlaneseq
        %v659 = vshrl.u32 %v658, 7
        %v660 = vsub.s32 %v657, %v659
        %v661 = vrot.slane %v647, %v660
        %v662 = vcombine.high %v654, %v654
        %v663 = vcombine.high %v661, %v661
        %v665 = vunpack.c.l.s4 1983009808
        %v666 = vunpack.c.0.s8 %v665
        %v667 = vlaneseq
        %v668 = vshrl.u32 %v667, 7
        %v669 = vsub.s32 %v666, %v668
        %v670 = vrot.slane %v644, %v669
        %v671 = vcombine.high %v670, %v670
        %v678 = vpack.c.bf16 %v654, %v654
        %v679 = vpack.c.bf16 %v662, %v662
        %v680 = vpack.c.bf16 %v661, %v661
        %v681 = vpack.c.bf16 %v663, %v663
        %v682 = vpack.c.bf16 %v670, %v670
        %v683 = vpack.c.bf16 %v671, %v671
        %v684 = vld [vmem:[%s438] sm:$0xff]
        %v685 = vld [vmem:[%s438 + $0x8] sm:$0xff]
        %v686 = vld [vmem:[%s438 + $0x10] sm:$0xf]
        %v687 = vld [vmem:[%s438 + $0x14] sm:$0xff]
        %v688 = vld [vmem:[%s438 + $0x1c] sm:$0xff]
        %v689 = vld [vmem:[%s438 + $0x24] sm:$0xf]
        %v690 = vld [vmem:[%s438 + $0x28] sm:$0xff]
        %v691 = vld [vmem:[%s438 + $0x30] sm:$0xff]
        %v692 = vld [vmem:[%s438 + $0x38] sm:$0xf]
        %v693 = vld [vmem:[%s438 + $0x3c] sm:$0xff]
        %v694 = vld [vmem:[%s438 + $0x44] sm:$0xff]
        %v695 = vld [vmem:[%s438 + $0x4c] sm:$0xf]
        %v696 = vld [vmem:[%s438 + $0x50] sm:$0xff]
        %v697 = vld [vmem:[%s438 + $0x58] sm:$0xff]
        %v698 = vld [vmem:[%s438 + $0x60] sm:$0xf]
        %v699 = vld [vmem:[%s438 + $0x64] sm:$0xff]
        %v700 = vld [vmem:[%s438 + $0x6c] sm:$0xff]
        %v701 = vld [vmem:[%s438 + $0x74] sm:$0xf]
        %v702 = vld [vmem:[%s438 + $0x78] sm:$0xff]
        %v703 = vld [vmem:[%s438 + $0x80] sm:$0xff]
        %v704 = vld [vmem:[%s438 + $0x88] sm:$0xf]
        %v705 = vld [vmem:[%s438 + $0x8c] sm:$0xff]
        %v706 = vld [vmem:[%s438 + $0x94] sm:$0xff]
        %v707 = vld [vmem:[%s438 + $0x9c] sm:$0xf]
        %v708 = vld [vmem:[%s438 + $0xa0] sm:$0xff]
        %v709 = vld [vmem:[%s438 + $0xa8] sm:$0xff]
        %v710 = vld [vmem:[%s438 + $0xb0] sm:$0xf]
        %v711 = vld [vmem:[%s438 + $0xb4] sm:$0xff]
        %v712 = vld [vmem:[%s438 + $0xbc] sm:$0xff]
        %v713 = vld [vmem:[%s438 + $0xc4] sm:$0xf]
        %v714 = vld [vmem:[%s438 + $0xc8] sm:$0xff]
        %v715 = vld [vmem:[%s438 + $0xd0] sm:$0xff]
        %v716 = vld [vmem:[%s438 + $0xd8] sm:$0xf]
        %v717 = vld [vmem:[%s438 + $0xdc] sm:$0xff]
        %v718 = vld [vmem:[%s438 + $0xe4] sm:$0xff]
        %v719 = vld [vmem:[%s438 + $0xec] sm:$0xf]
        %v720 = vld [vmem:[%s438 + $0xf0] sm:$0xff]
        %v721 = vld [vmem:[%s438 + $0xf8] sm:$0xff]
        %v722 = vld [vmem:[%s438 + $0x100] sm:$0xf]
        %v723 = vld [vmem:[%s438 + $0x104] sm:$0xff]
        %v724 = vld [vmem:[%s438 + $0x10c] sm:$0xff]
        %v725 = vld [vmem:[%s438 + $0x114] sm:$0xf]
        %v726 = vld [vmem:[%s438 + $0x118] sm:$0xff]
        %v727 = vld [vmem:[%s438 + $0x120] sm:$0xff]
        %v728 = vld [vmem:[%s438 + $0x128] sm:$0xf]
        %v729 = vld [vmem:[%s438 + $0x12c] sm:$0xff]
        %v730 = vld [vmem:[%s438 + $0x134] sm:$0xff]
        %v731 = vld [vmem:[%s438 + $0x13c] sm:$0xf]
        %v732 = vld [vmem:[%s438 + $0x140] sm:$0xff]
        %v733 = vld [vmem:[%s438 + $0x148] sm:$0xff]
        %v734 = vld [vmem:[%s438 + $0x150] sm:$0xf]
        %v735 = vld [vmem:[%s438 + $0x154] sm:$0xff]
        %v736 = vld [vmem:[%s438 + $0x15c] sm:$0xff]
        %v737 = vld [vmem:[%s438 + $0x164] sm:$0xf]
        %v738 = vld [vmem:[%s438 + $0x168] sm:$0xff]
        %v739 = vld [vmem:[%s438 + $0x170] sm:$0xff]
        %v740 = vld [vmem:[%s438 + $0x178] sm:$0xf]
        %v741 = vld [vmem:[%s438 + $0x17c] sm:$0xff]
        %v742 = vld [vmem:[%s438 + $0x184] sm:$0xff]
        %v743 = vld [vmem:[%s438 + $0x18c] sm:$0xf]
        %v744 = vld [vmem:[%s438 + $0x190] sm:$0xff]
        %v745 = vld [vmem:[%s438 + $0x198] sm:$0xff]
        %v746 = vld [vmem:[%s438 + $0x1a0] sm:$0xf]
        %v747 = vld [vmem:[%s438 + $0x1a4] sm:$0xff]
        %v748 = vld [vmem:[%s438 + $0x1ac] sm:$0xff]
        %v749 = vld [vmem:[%s438 + $0x1b4] sm:$0xf]
        %v750 = vld [vmem:[%s438 + $0x1b8] sm:$0xff]
        %v751 = vld [vmem:[%s438 + $0x1c0] sm:$0xff]
        %v752 = vld [vmem:[%s438 + $0x1c8] sm:$0xf]
        %v753 = vld [vmem:[%s438 + $0x1cc] sm:$0xff]
        %v754 = vld [vmem:[%s438 + $0x1d4] sm:$0xff]
        %v755 = vld [vmem:[%s438 + $0x1dc] sm:$0xf]
        %v756 = vld [vmem:[%s438 + $0x1e0] sm:$0xff]
        %v757 = vld [vmem:[%s438 + $0x1e8] sm:$0xff]
        %v758 = vld [vmem:[%s438 + $0x1f0] sm:$0xf]
        %v759 = vld [vmem:[%s438 + $0x1f4] sm:$0xff]
        %v760 = vld [vmem:[%s438 + $0x1fc] sm:$0xff]
        %v761 = vld [vmem:[%s438 + $0x204] sm:$0xf]
        %v762 = vld [vmem:[%s438 + $0x208] sm:$0xff]
        %v763 = vld [vmem:[%s438 + $0x210] sm:$0xff]
        %v764 = vld [vmem:[%s438 + $0x218] sm:$0xf]
        %v765 = vld [vmem:[%s438 + $0x21c] sm:$0xff]
        %v766 = vld [vmem:[%s438 + $0x224] sm:$0xff]
        %v767 = vld [vmem:[%s438 + $0x22c] sm:$0xf]
        %v768 = vld [vmem:[%s438 + $0x230] sm:$0xff]
        %v769 = vld [vmem:[%s438 + $0x238] sm:$0xff]
        %v770 = vld [vmem:[%s438 + $0x240] sm:$0xf]
        %v771 = vld [vmem:[%s438 + $0x244] sm:$0xff]
        %v772 = vld [vmem:[%s438 + $0x24c] sm:$0xff]
        %v773 = vld [vmem:[%s438 + $0x254] sm:$0xf]
        %v774 = vld [vmem:[%s438 + $0x258] sm:$0xff]
        %v775 = vld [vmem:[%s438 + $0x260] sm:$0xff]
        %v776 = vld [vmem:[%s438 + $0x268] sm:$0xf]
        %v777 = vld [vmem:[%s438 + $0x26c] sm:$0xff]
        %v778 = vld [vmem:[%s438 + $0x274] sm:$0xff]
        %v779 = vld [vmem:[%s438 + $0x27c] sm:$0xf]
        %v780 = vld [vmem:[%s438 + $0x280] sm:$0xff]
        %v781 = vld [vmem:[%s438 + $0x288] sm:$0xff]
        %v782 = vld [vmem:[%s438 + $0x290] sm:$0xf]
        %v783 = vld [vmem:[%s438 + $0x294] sm:$0xff]
        %v784 = vld [vmem:[%s438 + $0x29c] sm:$0xff]
        %v785 = vld [vmem:[%s438 + $0x2a4] sm:$0xf]
        %v786 = vld [vmem:[%s438 + $0x2a8] sm:$0xff]
        %v787 = vld [vmem:[%s438 + $0x2b0] sm:$0xff]
        %v788 = vld [vmem:[%s438 + $0x2b8] sm:$0xf]
        %v789 = vld [vmem:[%s438 + $0x2bc] sm:$0xff]
        %v790 = vld [vmem:[%s438 + $0x2c4] sm:$0xff]
        %v791 = vld [vmem:[%s438 + $0x2cc] sm:$0xf]
        %v792 = vld [vmem:[%s438 + $0x2d0] sm:$0xff]
        %v793 = vld [vmem:[%s438 + $0x2d8] sm:$0xff]
        %v794 = vld [vmem:[%s438 + $0x2e0] sm:$0xf]
        %v795 = vld [vmem:[%s438 + $0x2e4] sm:$0xff]
        %v796 = vld [vmem:[%s438 + $0x2ec] sm:$0xff]
        %v797 = vld [vmem:[%s438 + $0x2f4] sm:$0xf]
        %v798 = vld [vmem:[%s438 + $0x2f8] sm:$0xff]
        %v799 = vld [vmem:[%s438 + $0x300] sm:$0xff]
        %v800 = vld [vmem:[%s438 + $0x308] sm:$0xf]
        %v801 = vld [vmem:[%s438 + $0x30c] sm:$0xff]
        %v802 = vld [vmem:[%s438 + $0x314] sm:$0xff]
        %v803 = vld [vmem:[%s438 + $0x31c] sm:$0xf]
        %v804 = vld [vmem:[%s438 + $0x320] sm:$0xff]
        %v805 = vld [vmem:[%s438 + $0x328] sm:$0xff]
        %v806 = vld [vmem:[%s438 + $0x330] sm:$0xf]
        %v807 = vld [vmem:[%s438 + $0x334] sm:$0xff]
        %v808 = vld [vmem:[%s438 + $0x33c] sm:$0xff]
        %v809 = vld [vmem:[%s438 + $0x344] sm:$0xf]
        %v810 = vld [vmem:[%s438 + $0x348] sm:$0xff]
        %v811 = vld [vmem:[%s438 + $0x350] sm:$0xff]
        %v812 = vld [vmem:[%s438 + $0x358] sm:$0xf]
        %v813 = vld [vmem:[%s438 + $0x35c] sm:$0xff]
        %v814 = vld [vmem:[%s438 + $0x364] sm:$0xff]
        %v815 = vld [vmem:[%s438 + $0x36c] sm:$0xf]
        %v816 = vld [vmem:[%s438 + $0x370] sm:$0xff]
        %v817 = vld [vmem:[%s438 + $0x378] sm:$0xff]
        %v818 = vld [vmem:[%s438 + $0x380] sm:$0xf]
        %v819 = vld [vmem:[%s438 + $0x384] sm:$0xff]
        %v820 = vld [vmem:[%s438 + $0x38c] sm:$0xff]
        %v821 = vld [vmem:[%s438 + $0x394] sm:$0xf]
        %v822 = vld [vmem:[%s438 + $0x398] sm:$0xff]
        %v823 = vld [vmem:[%s438 + $0x3a0] sm:$0xff]
        %v824 = vld [vmem:[%s438 + $0x3a8] sm:$0xf]
        %v825 = vld [vmem:[%s438 + $0x3ac] sm:$0xff]
        %v826 = vld [vmem:[%s438 + $0x3b4] sm:$0xff]
        %v827 = vld [vmem:[%s438 + $0x3bc] sm:$0xf]
        %v828 = vld [vmem:[%s438 + $0x3c0] sm:$0xff]
        %v829 = vld [vmem:[%s438 + $0x3c8] sm:$0xff]
        %v830 = vld [vmem:[%s438 + $0x3d0] sm:$0xf]
        %v831 = vld [vmem:[%s438 + $0x3d4] sm:$0xff]
        %v832 = vld [vmem:[%s438 + $0x3dc] sm:$0xff]
        %v833 = vld [vmem:[%s438 + $0x3e4] sm:$0xf]
        %v834 = vld [vmem:[%s438 + $0x3e8] sm:$0xff]
        %v835 = vld [vmem:[%s438 + $0x3f0] sm:$0xff]
        %v836 = vld [vmem:[%s438 + $0x3f8] sm:$0xf]
        %v837 = vld [vmem:[%s438 + $0x3fc] sm:$0xff]
        %v838 = vld [vmem:[%s438 + $0x404] sm:$0xff]
        %v839 = vld [vmem:[%s438 + $0x40c] sm:$0xf]
        %v840 = vld [vmem:[%s438 + $0x410] sm:$0xff]
        %v841 = vld [vmem:[%s438 + $0x418] sm:$0xff]
        %v842 = vld [vmem:[%s438 + $0x420] sm:$0xf]
        %v843 = vld [vmem:[%s438 + $0x424] sm:$0xff]
        %v844 = vld [vmem:[%s438 + $0x42c] sm:$0xff]
        %v845 = vld [vmem:[%s438 + $0x434] sm:$0xf]
        %v846 = vld [vmem:[%s438 + $0x438] sm:$0xff]
        %v847 = vld [vmem:[%s438 + $0x440] sm:$0xff]
        %v848 = vld [vmem:[%s438 + $0x448] sm:$0xf]
        %v849 = vld [vmem:[%s438 + $0x44c] sm:$0xff]
        %v850 = vld [vmem:[%s438 + $0x454] sm:$0xff]
        %v851 = vld [vmem:[%s438 + $0x45c] sm:$0xf]
        %v852 = vld [vmem:[%s438 + $0x460] sm:$0xff]
        %v853 = vld [vmem:[%s438 + $0x468] sm:$0xff]
        %v854 = vld [vmem:[%s438 + $0x470] sm:$0xf]
        %v855 = vld [vmem:[%s438 + $0x474] sm:$0xff]
        %v856 = vld [vmem:[%s438 + $0x47c] sm:$0xff]
        %v857 = vld [vmem:[%s438 + $0x484] sm:$0xf]
        %v858 = vld [vmem:[%s438 + $0x488] sm:$0xff]
        %v859 = vld [vmem:[%s438 + $0x490] sm:$0xff]
        %v860 = vld [vmem:[%s438 + $0x498] sm:$0xf]
        %v861 = vld [vmem:[%s438 + $0x49c] sm:$0xff]
        %v862 = vld [vmem:[%s438 + $0x4a4] sm:$0xff]
        %v863 = vld [vmem:[%s438 + $0x4ac] sm:$0xf]
        %v864 = vld [vmem:[%s438 + $0x4b0] sm:$0xff]
        %v865 = vld [vmem:[%s438 + $0x4b8] sm:$0xff]
        %v866 = vld [vmem:[%s438 + $0x4c0] sm:$0xf]
        %v867 = vld [vmem:[%s438 + $0x4c4] sm:$0xff]
        %v868 = vld [vmem:[%s438 + $0x4cc] sm:$0xff]
        %v869 = vld [vmem:[%s438 + $0x4d4] sm:$0xf]
        %v870 = vld [vmem:[%s438 + $0x4d8] sm:$0xff]
        %v871 = vld [vmem:[%s438 + $0x4e0] sm:$0xff]
        %v872 = vld [vmem:[%s438 + $0x4e8] sm:$0xf]
        %v873 = vld [vmem:[%s438 + $0x4ec] sm:$0xff]
        %v874 = vld [vmem:[%s438 + $0x4f4] sm:$0xff]
        %v875 = vld [vmem:[%s438 + $0x4fc] sm:$0xf]
        %v876 = vld [vmem:[%s438 + $0x500] sm:$0xff]
        %v877 = vld [vmem:[%s438 + $0x508] sm:$0xff]
        %v878 = vld [vmem:[%s438 + $0x510] sm:$0xf]
        %v879 = vld [vmem:[%s438 + $0x514] sm:$0xff]
        %v880 = vld [vmem:[%s438 + $0x51c] sm:$0xff]
        %v881 = vld [vmem:[%s438 + $0x524] sm:$0xf]
        %v882 = vld [vmem:[%s438 + $0x528] sm:$0xff]
        %v883 = vld [vmem:[%s438 + $0x530] sm:$0xff]
        %v884 = vld [vmem:[%s438 + $0x538] sm:$0xf]
        %v885 = vld [vmem:[%s438 + $0x53c] sm:$0xff]
        %v886 = vld [vmem:[%s438 + $0x544] sm:$0xff]
        %v887 = vld [vmem:[%s438 + $0x54c] sm:$0xf]
        %v888 = vld [vmem:[%s438 + $0x550] sm:$0xff]
        %v889 = vld [vmem:[%s438 + $0x558] sm:$0xff]
        %v890 = vld [vmem:[%s438 + $0x560] sm:$0xf]
        %v891 = vld [vmem:[%s438 + $0x564] sm:$0xff]
        %v892 = vld [vmem:[%s438 + $0x56c] sm:$0xff]
        %v893 = vld [vmem:[%s438 + $0x574] sm:$0xf]
        %v894 = vld [vmem:[%s438 + $0x578] sm:$0xff]
        %v895 = vld [vmem:[%s438 + $0x580] sm:$0xff]
        %v896 = vld [vmem:[%s438 + $0x588] sm:$0xf]
        %v897 = vld [vmem:[%s438 + $0x58c] sm:$0xff]
        %v898 = vld [vmem:[%s438 + $0x594] sm:$0xff]
        %v899 = vld [vmem:[%s438 + $0x59c] sm:$0xf]
        %v900 = vld [vmem:[%s438 + $0x5a0] sm:$0xff]
        %v901 = vld [vmem:[%s438 + $0x5a8] sm:$0xff]
        %v902 = vld [vmem:[%s438 + $0x5b0] sm:$0xf]
        %v903 = vld [vmem:[%s438 + $0x5b4] sm:$0xff]
        %v904 = vld [vmem:[%s438 + $0x5bc] sm:$0xff]
        %v905 = vld [vmem:[%s438 + $0x5c4] sm:$0xf]
        %v906 = vld [vmem:[%s438 + $0x5c8] sm:$0xff]
        %v907 = vld [vmem:[%s438 + $0x5d0] sm:$0xff]
        %v908 = vld [vmem:[%s438 + $0x5d8] sm:$0xf]
        %v909 = vld [vmem:[%s438 + $0x5dc] sm:$0xff]
        %v910 = vld [vmem:[%s438 + $0x5e4] sm:$0xff]
        %v911 = vld [vmem:[%s438 + $0x5ec] sm:$0xf]
        %v912 = vld [vmem:[%s438 + $0x5f0] sm:$0xff]
        %v913 = vld [vmem:[%s438 + $0x5f8] sm:$0xff]
        %v914 = vld [vmem:[%s438 + $0x600] sm:$0xf]
        %v915 = vld [vmem:[%s438 + $0x604] sm:$0xff]
        %v916 = vld [vmem:[%s438 + $0x60c] sm:$0xff]
        %v917 = vld [vmem:[%s438 + $0x614] sm:$0xf]
        %v918 = vld [vmem:[%s438 + $0x618] sm:$0xff]
        %v919 = vld [vmem:[%s438 + $0x620] sm:$0xff]
        %v920 = vld [vmem:[%s438 + $0x628] sm:$0xf]
        %v921 = vld [vmem:[%s438 + $0x62c] sm:$0xff]
        %v922 = vld [vmem:[%s438 + $0x634] sm:$0xff]
        %v923 = vld [vmem:[%s438 + $0x63c] sm:$0xf]
        %v924 = vld [vmem:[%s438 + $0x640] sm:$0xff]
        %v925 = vld [vmem:[%s438 + $0x648] sm:$0xff]
        %v926 = vld [vmem:[%s438 + $0x650] sm:$0xf]
        %v927 = vld [vmem:[%s438 + $0x654] sm:$0xff]
        %v928 = vld [vmem:[%s438 + $0x65c] sm:$0xff]
        %v929 = vld [vmem:[%s438 + $0x664] sm:$0xf]
        %v930 = vld [vmem:[%s438 + $0x668] sm:$0xff]
        %v931 = vld [vmem:[%s438 + $0x670] sm:$0xff]
        %v932 = vld [vmem:[%s438 + $0x678] sm:$0xf]
        %v933 = vld [vmem:[%s438 + $0x67c] sm:$0xff]
        %v934 = vld [vmem:[%s438 + $0x684] sm:$0xff]
        %v935 = vld [vmem:[%s438 + $0x68c] sm:$0xf]
        %v936 = vld [vmem:[%s438 + $0x690] sm:$0xff]
        %v937 = vld [vmem:[%s438 + $0x698] sm:$0xff]
        %v938 = vld [vmem:[%s438 + $0x6a0] sm:$0xf]
        %v939 = vld [vmem:[%s438 + $0x6a4] sm:$0xff]
        %v940 = vld [vmem:[%s438 + $0x6ac] sm:$0xff]
        %v941 = vld [vmem:[%s438 + $0x6b4] sm:$0xf]
        %v942 = vld [vmem:[%s438 + $0x6b8] sm:$0xff]
        %v943 = vld [vmem:[%s438 + $0x6c0] sm:$0xff]
        %v944 = vld [vmem:[%s438 + $0x6c8] sm:$0xf]
        %v945 = vld [vmem:[%s438 + $0x6cc] sm:$0xff]
        %v946 = vld [vmem:[%s438 + $0x6d4] sm:$0xff]
        %v947 = vld [vmem:[%s438 + $0x6dc] sm:$0xf]
        %v948 = vld [vmem:[%s438 + $0x6e0] sm:$0xff]
        %v949 = vld [vmem:[%s438 + $0x6e8] sm:$0xff]
        %v950 = vld [vmem:[%s438 + $0x6f0] sm:$0xf]
        %v951 = vld [vmem:[%s438 + $0x6f4] sm:$0xff]
        %v952 = vld [vmem:[%s438 + $0x6fc] sm:$0xff]
        %v953 = vld [vmem:[%s438 + $0x704] sm:$0xf]
        %v954 = vld [vmem:[%s438 + $0x708] sm:$0xff]
        %v955 = vld [vmem:[%s438 + $0x710] sm:$0xff]
        %v956 = vld [vmem:[%s438 + $0x718] sm:$0xf]
        %v957 = vld [vmem:[%s438 + $0x71c] sm:$0xff]
        %v958 = vld [vmem:[%s438 + $0x724] sm:$0xff]
        %v959 = vld [vmem:[%s438 + $0x72c] sm:$0xf]
        %v960 = vld [vmem:[%s438 + $0x730] sm:$0xff]
        %v961 = vld [vmem:[%s438 + $0x738] sm:$0xff]
        %v962 = vld [vmem:[%s438 + $0x740] sm:$0xf]
        %v963 = vld [vmem:[%s438 + $0x744] sm:$0xff]
        %v964 = vld [vmem:[%s438 + $0x74c] sm:$0xff]
        %v965 = vld [vmem:[%s438 + $0x754] sm:$0xf]
        %v966 = vld [vmem:[%s438 + $0x758] sm:$0xff]
        %v967 = vld [vmem:[%s438 + $0x760] sm:$0xff]
        %v968 = vld [vmem:[%s438 + $0x768] sm:$0xf]
        %v969 = vld [vmem:[%s438 + $0x76c] sm:$0xff]
        %v970 = vld [vmem:[%s438 + $0x774] sm:$0xff]
        %v971 = vld [vmem:[%s438 + $0x77c] sm:$0xf]
        %p972 = scmp.eq.s32.totalorder %s28, 0
        // Predicated region
        $region73: #{tpu_custom_call.1} parent=43 // pred_check
          %p973 = pneg %p972
        $region74: #{tpu_custom_call.1} parent=43 // pred_check_branch
          %975 = sbr.rel (%p973) target = $region76
        $region75: #{tpu_custom_call.1} parent=43 // pred_region
          %v976 = vld [vmem:[#allocation2] sm:$0xff]
          %v977 = vld [vmem:[#allocation3] sm:$0x3f]
          %v979 = vcombine.high %v977, %v977
          %v981 = vunpack.c.l.s4 1966171168
          %v982 = vunpack.c.0.s8 %v981
          %v983 = vlaneseq
          %v984 = vshrl.u32 %v983, 7
          %v985 = vsub.s32 %v982, %v984
          %v986 = vrot.slane %v977, %v985
          %v988 = vunpack.c.l.s4 1966171168
          %v989 = vunpack.c.0.s8 %v988
          %v990 = vlaneseq
          %v991 = vshrl.u32 %v990, 7
          %v992 = vsub.s32 %v989, %v991
          %v993 = vrot.slane %v979, %v992
          %v994 = vcombine.high %v986, %v986
          %v995 = vcombine.high %v993, %v993
          %v997 = vunpack.c.l.s4 1966171168
          %v998 = vunpack.c.0.s8 %v997
          %v999 = vlaneseq
          %v1000 = vshrl.u32 %v999, 7
          %v1001 = vsub.s32 %v998, %v1000
          %v1002 = vrot.slane %v986, %v1001
          %v1004 = vunpack.c.l.s4 1966171168
          %v1005 = vunpack.c.0.s8 %v1004
          %v1006 = vlaneseq
          %v1007 = vshrl.u32 %v1006, 7
          %v1008 = vsub.s32 %v1005, %v1007
          %v1009 = vrot.slane %v993, %v1008
          %v1011 = vunpack.c.l.s4 1966171168
          %v1012 = vunpack.c.0.s8 %v1011
          %v1013 = vlaneseq
          %v1014 = vshrl.u32 %v1013, 7
          %v1015 = vsub.s32 %v1012, %v1014
          %v1016 = vrot.slane %v994, %v1015
          %v1018 = vunpack.c.l.s4 1966171168
          %v1019 = vunpack.c.0.s8 %v1018
          %v1020 = vlaneseq
          %v1021 = vshrl.u32 %v1020, 7
          %v1022 = vsub.s32 %v1019, %v1021
          %v1023 = vrot.slane %v995, %v1022
          %v1024 = vcombine.high %v1002, %v1002
          %v1025 = vcombine.high %v1016, %v1016
          %v1224 = vunpack.c.l.b16 %v684
          %v1225 = vunpack.c.h.b16 %v684
          %v1226 = vunpack.c.l.b16 %v685
          %v1227 = vunpack.c.h.b16 %v685
          %v1228 = vunpack.c.l.b16 %v687
          %v1229 = vunpack.c.h.b16 %v687
          %v1230 = vunpack.c.l.b16 %v688
          %v1231 = vunpack.c.h.b16 %v688
          %v1232 = vunpack.c.l.b16 %v690
          %v1233 = vunpack.c.h.b16 %v690
          %v1234 = vunpack.c.l.b16 %v691
          %v1235 = vunpack.c.h.b16 %v691
          %v1236 = vunpack.c.l.b16 %v693
          %v1237 = vunpack.c.h.b16 %v693
          %v1238 = vunpack.c.l.b16 %v694
          %v1239 = vunpack.c.h.b16 %v694
          %v1240 = vunpack.c.l.b16 %v696
          %v1241 = vunpack.c.h.b16 %v696
          %v1242 = vunpack.c.l.b16 %v697
          %v1243 = vunpack.c.h.b16 %v697
          %v1244 = vunpack.c.l.b16 %v699
          %v1245 = vunpack.c.h.b16 %v699
          %v1246 = vunpack.c.l.b16 %v700
          %v1247 = vunpack.c.h.b16 %v700
          %v1248 = vunpack.c.l.b16 %v702
          %v1249 = vunpack.c.h.b16 %v702
          %v1250 = vunpack.c.l.b16 %v703
          %v1251 = vunpack.c.h.b16 %v703
          %v1252 = vunpack.c.l.b16 %v705
          %v1253 = vunpack.c.h.b16 %v705
          %v1254 = vunpack.c.l.b16 %v706
          %v1255 = vunpack.c.h.b16 %v706
          %v1256 = vunpack.c.l.b16 %v708
          %v1257 = vunpack.c.h.b16 %v708
          %v1258 = vunpack.c.l.b16 %v709
          %v1259 = vunpack.c.h.b16 %v709
          %v1260 = vunpack.c.l.b16 %v711
          %v1261 = vunpack.c.h.b16 %v711
          %v1262 = vunpack.c.l.b16 %v712
          %v1263 = vunpack.c.h.b16 %v712
          %v1264 = vunpack.c.l.b16 %v714
          %v1265 = vunpack.c.h.b16 %v714
          %v1266 = vunpack.c.l.b16 %v715
          %v1267 = vunpack.c.h.b16 %v715
          %v1268 = vunpack.c.l.b16 %v717
          %v1269 = vunpack.c.h.b16 %v717
          %v1270 = vunpack.c.l.b16 %v718
          %v1271 = vunpack.c.h.b16 %v718
          %v1272 = vunpack.c.l.b16 %v720
          %v1273 = vunpack.c.h.b16 %v720
          %v1274 = vunpack.c.l.b16 %v721
          %v1275 = vunpack.c.h.b16 %v721
          %v1276 = vunpack.c.l.b16 %v723
          %v1277 = vunpack.c.h.b16 %v723
          %v1278 = vunpack.c.l.b16 %v724
          %v1279 = vunpack.c.h.b16 %v724
          %v1280 = vunpack.c.l.b16 %v726
          %v1281 = vunpack.c.h.b16 %v726
          %v1282 = vunpack.c.l.b16 %v727
          %v1283 = vunpack.c.h.b16 %v727
          %v1284 = vunpack.c.l.b16 %v729
          %v1285 = vunpack.c.h.b16 %v729
          %v1286 = vunpack.c.l.b16 %v730
          %v1287 = vunpack.c.h.b16 %v730
          %v1288 = vunpack.c.l.b16 %v732
          %v1289 = vunpack.c.h.b16 %v732
          %v1290 = vunpack.c.l.b16 %v733
          %v1291 = vunpack.c.h.b16 %v733
          %v1292 = vunpack.c.l.b16 %v735
          %v1293 = vunpack.c.h.b16 %v735
          %v1294 = vunpack.c.l.b16 %v736
          %v1295 = vunpack.c.h.b16 %v736
          %v1296 = vunpack.c.l.b16 %v738
          %v1297 = vunpack.c.h.b16 %v738
          %v1298 = vunpack.c.l.b16 %v739
          %v1299 = vunpack.c.h.b16 %v739
          %v1300 = vunpack.c.l.b16 %v741
          %v1301 = vunpack.c.h.b16 %v741
          %v1302 = vunpack.c.l.b16 %v742
          %v1303 = vunpack.c.h.b16 %v742
          %v1304 = vunpack.c.l.b16 %v744
          %v1305 = vunpack.c.h.b16 %v744
          %v1306 = vunpack.c.l.b16 %v745
          %v1307 = vunpack.c.h.b16 %v745
          %v1308 = vunpack.c.l.b16 %v747
          %v1309 = vunpack.c.h.b16 %v747
          %v1310 = vunpack.c.l.b16 %v748
          %v1311 = vunpack.c.h.b16 %v748
          %v1312 = vunpack.c.l.b16 %v750
          %v1313 = vunpack.c.h.b16 %v750
          %v1314 = vunpack.c.l.b16 %v751
          %v1315 = vunpack.c.h.b16 %v751
          %v1316 = vunpack.c.l.b16 %v753
          %v1317 = vunpack.c.h.b16 %v753
          %v1318 = vunpack.c.l.b16 %v754
          %v1319 = vunpack.c.h.b16 %v754
          %v1320 = vunpack.c.l.b16 %v756
          %v1321 = vunpack.c.h.b16 %v756
          %v1322 = vunpack.c.l.b16 %v757
          %v1323 = vunpack.c.h.b16 %v757
          %v1324 = vunpack.c.l.b16 %v759
          %v1325 = vunpack.c.h.b16 %v759
          %v1326 = vunpack.c.l.b16 %v760
          %v1327 = vunpack.c.h.b16 %v760
          %v1328 = vunpack.c.l.b16 %v762
          %v1329 = vunpack.c.h.b16 %v762
          %v1330 = vunpack.c.l.b16 %v763
          %v1331 = vunpack.c.h.b16 %v763
          %v1332 = vunpack.c.l.b16 %v765
          %v1333 = vunpack.c.h.b16 %v765
          %v1334 = vunpack.c.l.b16 %v766
          %v1335 = vunpack.c.h.b16 %v766
          %v1336 = vunpack.c.l.b16 %v768
          %v1337 = vunpack.c.h.b16 %v768
          %v1338 = vunpack.c.l.b16 %v769
          %v1339 = vunpack.c.h.b16 %v769
          %v1340 = vunpack.c.l.b16 %v771
          %v1341 = vunpack.c.h.b16 %v771
          %v1342 = vunpack.c.l.b16 %v772
          %v1343 = vunpack.c.h.b16 %v772
          %v1344 = vunpack.c.l.b16 %v774
          %v1345 = vunpack.c.h.b16 %v774
          %v1346 = vunpack.c.l.b16 %v775
          %v1347 = vunpack.c.h.b16 %v775
          %v1348 = vunpack.c.l.b16 %v777
          %v1349 = vunpack.c.h.b16 %v777
          %v1350 = vunpack.c.l.b16 %v778
          %v1351 = vunpack.c.h.b16 %v778
          %v1352 = vunpack.c.l.b16 %v780
          %v1353 = vunpack.c.h.b16 %v780
          %v1354 = vunpack.c.l.b16 %v781
          %v1355 = vunpack.c.h.b16 %v781
          %v1356 = vunpack.c.l.b16 %v783
          %v1357 = vunpack.c.h.b16 %v783
          %v1358 = vunpack.c.l.b16 %v784
          %v1359 = vunpack.c.h.b16 %v784
          %v1360 = vunpack.c.l.b16 %v786
          %v1361 = vunpack.c.h.b16 %v786
          %v1362 = vunpack.c.l.b16 %v787
          %v1363 = vunpack.c.h.b16 %v787
          %v1364 = vunpack.c.l.b16 %v789
          %v1365 = vunpack.c.h.b16 %v789
          %v1366 = vunpack.c.l.b16 %v790
          %v1367 = vunpack.c.h.b16 %v790
          %v1368 = vunpack.c.l.b16 %v792
          %v1369 = vunpack.c.h.b16 %v792
          %v1370 = vunpack.c.l.b16 %v793
          %v1371 = vunpack.c.h.b16 %v793
          %v1372 = vunpack.c.l.b16 %v795
          %v1373 = vunpack.c.h.b16 %v795
          %v1374 = vunpack.c.l.b16 %v796
          %v1375 = vunpack.c.h.b16 %v796
          %v1376 = vunpack.c.l.b16 %v798
          %v1377 = vunpack.c.h.b16 %v798
          %v1378 = vunpack.c.l.b16 %v799
          %v1379 = vunpack.c.h.b16 %v799
          %v1380 = vunpack.c.l.b16 %v801
          %v1381 = vunpack.c.h.b16 %v801
          %v1382 = vunpack.c.l.b16 %v802
          %v1383 = vunpack.c.h.b16 %v802
          %v1384 = vunpack.c.l.b16 %v804
          %v1385 = vunpack.c.h.b16 %v804
          %v1386 = vunpack.c.l.b16 %v805
          %v1387 = vunpack.c.h.b16 %v805
          %v1388 = vunpack.c.l.b16 %v807
          %v1389 = vunpack.c.h.b16 %v807
          %v1390 = vunpack.c.l.b16 %v808
          %v1391 = vunpack.c.h.b16 %v808
          %v1392 = vunpack.c.l.b16 %v810
          %v1393 = vunpack.c.h.b16 %v810
          %v1394 = vunpack.c.l.b16 %v811
          %v1395 = vunpack.c.h.b16 %v811
          %v1396 = vunpack.c.l.b16 %v813
          %v1397 = vunpack.c.h.b16 %v813
          %v1398 = vunpack.c.l.b16 %v814
          %v1399 = vunpack.c.h.b16 %v814
          %v1400 = vunpack.c.l.b16 %v816
          %v1401 = vunpack.c.h.b16 %v816
          %v1402 = vunpack.c.l.b16 %v817
          %v1403 = vunpack.c.h.b16 %v817
          %v1404 = vunpack.c.l.b16 %v819
          %v1405 = vunpack.c.h.b16 %v819
          %v1406 = vunpack.c.l.b16 %v820
          %v1407 = vunpack.c.h.b16 %v820
          %v1408 = vunpack.c.l.b16 %v822
          %v1409 = vunpack.c.h.b16 %v822
          %v1410 = vunpack.c.l.b16 %v823
          %v1411 = vunpack.c.h.b16 %v823
          %v1412 = vunpack.c.l.b16 %v825
          %v1413 = vunpack.c.h.b16 %v825
          %v1414 = vunpack.c.l.b16 %v826
          %v1415 = vunpack.c.h.b16 %v826
          %v1416 = vunpack.c.l.b16 %v828
          %v1417 = vunpack.c.h.b16 %v828
          %v1418 = vunpack.c.l.b16 %v829
          %v1419 = vunpack.c.h.b16 %v829
          %v1420 = vunpack.c.l.b16 %v831
          %v1421 = vunpack.c.h.b16 %v831
          %v1422 = vunpack.c.l.b16 %v832
          %v1423 = vunpack.c.h.b16 %v832
          %v1424 = vunpack.c.l.b16 %v834
          %v1425 = vunpack.c.h.b16 %v834
          %v1426 = vunpack.c.l.b16 %v835
          %v1427 = vunpack.c.h.b16 %v835
          %v1428 = vunpack.c.l.b16 %v837
          %v1429 = vunpack.c.h.b16 %v837
          %v1430 = vunpack.c.l.b16 %v838
          %v1431 = vunpack.c.h.b16 %v838
          %v1432 = vunpack.c.l.b16 %v840
          %v1433 = vunpack.c.h.b16 %v840
          %v1434 = vunpack.c.l.b16 %v841
          %v1435 = vunpack.c.h.b16 %v841
          %v1436 = vunpack.c.l.b16 %v843
          %v1437 = vunpack.c.h.b16 %v843
          %v1438 = vunpack.c.l.b16 %v844
          %v1439 = vunpack.c.h.b16 %v844
          %v1440 = vunpack.c.l.b16 %v846
          %v1441 = vunpack.c.h.b16 %v846
          %v1442 = vunpack.c.l.b16 %v847
          %v1443 = vunpack.c.h.b16 %v847
          %v1444 = vunpack.c.l.b16 %v849
          %v1445 = vunpack.c.h.b16 %v849
          %v1446 = vunpack.c.l.b16 %v850
          %v1447 = vunpack.c.h.b16 %v850
          %v1448 = vunpack.c.l.b16 %v852
          %v1449 = vunpack.c.h.b16 %v852
          %v1450 = vunpack.c.l.b16 %v853
          %v1451 = vunpack.c.h.b16 %v853
          %v1452 = vunpack.c.l.b16 %v855
          %v1453 = vunpack.c.h.b16 %v855
          %v1454 = vunpack.c.l.b16 %v856
          %v1455 = vunpack.c.h.b16 %v856
          %v1456 = vunpack.c.l.b16 %v858
          %v1457 = vunpack.c.h.b16 %v858
          %v1458 = vunpack.c.l.b16 %v859
          %v1459 = vunpack.c.h.b16 %v859
          %v1460 = vunpack.c.l.b16 %v861
          %v1461 = vunpack.c.h.b16 %v861
          %v1462 = vunpack.c.l.b16 %v862
          %v1463 = vunpack.c.h.b16 %v862
          %v1464 = vunpack.c.l.b16 %v864
          %v1465 = vunpack.c.h.b16 %v864
          %v1466 = vunpack.c.l.b16 %v865
          %v1467 = vunpack.c.h.b16 %v865
          %v1468 = vunpack.c.l.b16 %v867
          %v1469 = vunpack.c.h.b16 %v867
          %v1470 = vunpack.c.l.b16 %v868
          %v1471 = vunpack.c.h.b16 %v868
          %v1472 = vunpack.c.l.b16 %v870
          %v1473 = vunpack.c.h.b16 %v870
          %v1474 = vunpack.c.l.b16 %v871
          %v1475 = vunpack.c.h.b16 %v871
          %v1476 = vunpack.c.l.b16 %v873
          %v1477 = vunpack.c.h.b16 %v873
          %v1478 = vunpack.c.l.b16 %v874
          %v1479 = vunpack.c.h.b16 %v874
          %v1480 = vunpack.c.l.b16 %v876
          %v1481 = vunpack.c.h.b16 %v876
          %v1482 = vunpack.c.l.b16 %v877
          %v1483 = vunpack.c.h.b16 %v877
          %v1484 = vunpack.c.l.b16 %v879
          %v1485 = vunpack.c.h.b16 %v879
          %v1486 = vunpack.c.l.b16 %v880
          %v1487 = vunpack.c.h.b16 %v880
          %v1488 = vunpack.c.l.b16 %v882
          %v1489 = vunpack.c.h.b16 %v882
          %v1490 = vunpack.c.l.b16 %v883
          %v1491 = vunpack.c.h.b16 %v883
          %v1492 = vunpack.c.l.b16 %v885
          %v1493 = vunpack.c.h.b16 %v885
          %v1494 = vunpack.c.l.b16 %v886
          %v1495 = vunpack.c.h.b16 %v886
          %v1496 = vunpack.c.l.b16 %v888
          %v1497 = vunpack.c.h.b16 %v888
          %v1498 = vunpack.c.l.b16 %v889
          %v1499 = vunpack.c.h.b16 %v889
          %v1500 = vunpack.c.l.b16 %v891
          %v1501 = vunpack.c.h.b16 %v891
          %v1502 = vunpack.c.l.b16 %v892
          %v1503 = vunpack.c.h.b16 %v892
          %v1504 = vunpack.c.l.b16 %v894
          %v1505 = vunpack.c.h.b16 %v894
          %v1506 = vunpack.c.l.b16 %v895
          %v1507 = vunpack.c.h.b16 %v895
          %v1508 = vunpack.c.l.b16 %v897
          %v1509 = vunpack.c.h.b16 %v897
          %v1510 = vunpack.c.l.b16 %v898
          %v1511 = vunpack.c.h.b16 %v898
          %v1512 = vunpack.c.l.b16 %v900
          %v1513 = vunpack.c.h.b16 %v900
          %v1514 = vunpack.c.l.b16 %v901
          %v1515 = vunpack.c.h.b16 %v901
          %v1516 = vunpack.c.l.b16 %v903
          %v1517 = vunpack.c.h.b16 %v903
          %v1518 = vunpack.c.l.b16 %v904
          %v1519 = vunpack.c.h.b16 %v904
          %v1520 = vunpack.c.l.b16 %v906
          %v1521 = vunpack.c.h.b16 %v906
          %v1522 = vunpack.c.l.b16 %v907
          %v1523 = vunpack.c.h.b16 %v907
          %v1524 = vunpack.c.l.b16 %v909
          %v1525 = vunpack.c.h.b16 %v909
          %v1526 = vunpack.c.l.b16 %v910
          %v1527 = vunpack.c.h.b16 %v910
          %v1528 = vunpack.c.l.b16 %v912
          %v1529 = vunpack.c.h.b16 %v912
          %v1530 = vunpack.c.l.b16 %v913
          %v1531 = vunpack.c.h.b16 %v913
          %v1532 = vunpack.c.l.b16 %v915
          %v1533 = vunpack.c.h.b16 %v915
          %v1534 = vunpack.c.l.b16 %v916
          %v1535 = vunpack.c.h.b16 %v916
          %v1536 = vunpack.c.l.b16 %v918
          %v1537 = vunpack.c.h.b16 %v918
          %v1538 = vunpack.c.l.b16 %v919
          %v1539 = vunpack.c.h.b16 %v919
          %v1540 = vunpack.c.l.b16 %v921
          %v1541 = vunpack.c.h.b16 %v921
          %v1542 = vunpack.c.l.b16 %v922
          %v1543 = vunpack.c.h.b16 %v922
          %v1544 = vunpack.c.l.b16 %v924
          %v1545 = vunpack.c.h.b16 %v924
          %v1546 = vunpack.c.l.b16 %v925
          %v1547 = vunpack.c.h.b16 %v925
          %v1548 = vunpack.c.l.b16 %v927
          %v1549 = vunpack.c.h.b16 %v927
          %v1550 = vunpack.c.l.b16 %v928
          %v1551 = vunpack.c.h.b16 %v928
          %v1552 = vunpack.c.l.b16 %v930
          %v1553 = vunpack.c.h.b16 %v930
          %v1554 = vunpack.c.l.b16 %v931
          %v1555 = vunpack.c.h.b16 %v931
          %v1556 = vunpack.c.l.b16 %v933
          %v1557 = vunpack.c.h.b16 %v933
          %v1558 = vunpack.c.l.b16 %v934
          %v1559 = vunpack.c.h.b16 %v934
          %v1560 = vunpack.c.l.b16 %v936
          %v1561 = vunpack.c.h.b16 %v936
          %v1562 = vunpack.c.l.b16 %v937
          %v1563 = vunpack.c.h.b16 %v937
          %v1564 = vunpack.c.l.b16 %v939
          %v1565 = vunpack.c.h.b16 %v939
          %v1566 = vunpack.c.l.b16 %v940
          %v1567 = vunpack.c.h.b16 %v940
          %v1568 = vunpack.c.l.b16 %v942
          %v1569 = vunpack.c.h.b16 %v942
          %v1570 = vunpack.c.l.b16 %v943
          %v1571 = vunpack.c.h.b16 %v943
          %v1572 = vunpack.c.l.b16 %v945
          %v1573 = vunpack.c.h.b16 %v945
          %v1574 = vunpack.c.l.b16 %v946
          %v1575 = vunpack.c.h.b16 %v946
          %v1576 = vunpack.c.l.b16 %v948
          %v1577 = vunpack.c.h.b16 %v948
          %v1578 = vunpack.c.l.b16 %v949
          %v1579 = vunpack.c.h.b16 %v949
          %v1580 = vunpack.c.l.b16 %v951
          %v1581 = vunpack.c.h.b16 %v951
          %v1582 = vunpack.c.l.b16 %v952
          %v1583 = vunpack.c.h.b16 %v952
          %v1584 = vunpack.c.l.b16 %v954
          %v1585 = vunpack.c.h.b16 %v954
          %v1586 = vunpack.c.l.b16 %v955
          %v1587 = vunpack.c.h.b16 %v955
          %v1588 = vunpack.c.l.b16 %v957
          %v1589 = vunpack.c.h.b16 %v957
          %v1590 = vunpack.c.l.b16 %v958
          %v1591 = vunpack.c.h.b16 %v958
          %v1592 = vunpack.c.l.b16 %v960
          %v1593 = vunpack.c.h.b16 %v960
          %v1594 = vunpack.c.l.b16 %v961
          %v1595 = vunpack.c.h.b16 %v961
          %v1596 = vunpack.c.l.b16 %v963
          %v1597 = vunpack.c.h.b16 %v963
          %v1598 = vunpack.c.l.b16 %v964
          %v1599 = vunpack.c.h.b16 %v964
          %v1600 = vunpack.c.l.b16 %v966
          %v1601 = vunpack.c.h.b16 %v966
          %v1602 = vunpack.c.l.b16 %v967
          %v1603 = vunpack.c.h.b16 %v967
          %v1604 = vunpack.c.l.b16 %v969
          %v1605 = vunpack.c.h.b16 %v969
          %v1606 = vunpack.c.l.b16 %v970
          %v1607 = vunpack.c.h.b16 %v970
          %v1608 = vpack.c.b16 %v1228, %v1224
          %v1609 = vpack.c.b16 %v1229, %v1225
          %v1610 = vpack.c.b16 %v1230, %v1226
          %v1611 = vpack.c.b16 %v1231, %v1227
          %v1612 = vpack.c.b16 %v1236, %v1232
          %v1613 = vpack.c.b16 %v1237, %v1233
          %v1614 = vpack.c.b16 %v1238, %v1234
          %v1615 = vpack.c.b16 %v1239, %v1235
          %v1616 = vpack.c.b16 %v1244, %v1240
          %v1617 = vpack.c.b16 %v1245, %v1241
          %v1618 = vpack.c.b16 %v1246, %v1242
          %v1619 = vpack.c.b16 %v1247, %v1243
          %v1620 = vpack.c.b16 %v1252, %v1248
          %v1621 = vpack.c.b16 %v1253, %v1249
          %v1622 = vpack.c.b16 %v1254, %v1250
          %v1623 = vpack.c.b16 %v1255, %v1251
          %v1624 = vpack.c.b16 %v1260, %v1256
          %v1625 = vpack.c.b16 %v1261, %v1257
          %v1626 = vpack.c.b16 %v1262, %v1258
          %v1627 = vpack.c.b16 %v1263, %v1259
          %v1628 = vpack.c.b16 %v1268, %v1264
          %v1629 = vpack.c.b16 %v1269, %v1265
          %v1630 = vpack.c.b16 %v1270, %v1266
          %v1631 = vpack.c.b16 %v1271, %v1267
          %v1632 = vpack.c.b16 %v1276, %v1272
          %v1633 = vpack.c.b16 %v1277, %v1273
          %v1634 = vpack.c.b16 %v1278, %v1274
          %v1635 = vpack.c.b16 %v1279, %v1275
          %v1636 = vpack.c.b16 %v1284, %v1280
          %v1637 = vpack.c.b16 %v1285, %v1281
          %v1638 = vpack.c.b16 %v1286, %v1282
          %v1639 = vpack.c.b16 %v1287, %v1283
          %v1640 = vpack.c.b16 %v1292, %v1288
          %v1641 = vpack.c.b16 %v1293, %v1289
          %v1642 = vpack.c.b16 %v1294, %v1290
          %v1643 = vpack.c.b16 %v1295, %v1291
          %v1644 = vpack.c.b16 %v1300, %v1296
          %v1645 = vpack.c.b16 %v1301, %v1297
          %v1646 = vpack.c.b16 %v1302, %v1298
          %v1647 = vpack.c.b16 %v1303, %v1299
          %v1648 = vpack.c.b16 %v1308, %v1304
          %v1649 = vpack.c.b16 %v1309, %v1305
          %v1650 = vpack.c.b16 %v1310, %v1306
          %v1651 = vpack.c.b16 %v1311, %v1307
          %v1652 = vpack.c.b16 %v1316, %v1312
          %v1653 = vpack.c.b16 %v1317, %v1313
          %v1654 = vpack.c.b16 %v1318, %v1314
          %v1655 = vpack.c.b16 %v1319, %v1315
          %v1656 = vpack.c.b16 %v1324, %v1320
          %v1657 = vpack.c.b16 %v1325, %v1321
          %v1658 = vpack.c.b16 %v1326, %v1322
          %v1659 = vpack.c.b16 %v1327, %v1323
          %v1660 = vpack.c.b16 %v1332, %v1328
          %v1661 = vpack.c.b16 %v1333, %v1329
          %v1662 = vpack.c.b16 %v1334, %v1330
          %v1663 = vpack.c.b16 %v1335, %v1331
          %v1664 = vpack.c.b16 %v1340, %v1336
          %v1665 = vpack.c.b16 %v1341, %v1337
          %v1666 = vpack.c.b16 %v1342, %v1338
          %v1667 = vpack.c.b16 %v1343, %v1339
          %v1668 = vpack.c.b16 %v1348, %v1344
          %v1669 = vpack.c.b16 %v1349, %v1345
          %v1670 = vpack.c.b16 %v1350, %v1346
          %v1671 = vpack.c.b16 %v1351, %v1347
          %v1672 = vpack.c.b16 %v1356, %v1352
          %v1673 = vpack.c.b16 %v1357, %v1353
          %v1674 = vpack.c.b16 %v1358, %v1354
          %v1675 = vpack.c.b16 %v1359, %v1355
          %v1676 = vpack.c.b16 %v1364, %v1360
          %v1677 = vpack.c.b16 %v1365, %v1361
          %v1678 = vpack.c.b16 %v1366, %v1362
          %v1679 = vpack.c.b16 %v1367, %v1363
          %v1680 = vpack.c.b16 %v1372, %v1368
          %v1681 = vpack.c.b16 %v1373, %v1369
          %v1682 = vpack.c.b16 %v1374, %v1370
          %v1683 = vpack.c.b16 %v1375, %v1371
          %v1684 = vpack.c.b16 %v1380, %v1376
          %v1685 = vpack.c.b16 %v1381, %v1377
          %v1686 = vpack.c.b16 %v1382, %v1378
          %v1687 = vpack.c.b16 %v1383, %v1379
          %v1688 = vpack.c.b16 %v1388, %v1384
          %v1689 = vpack.c.b16 %v1389, %v1385
          %v1690 = vpack.c.b16 %v1390, %v1386
          %v1691 = vpack.c.b16 %v1391, %v1387
          %v1692 = vpack.c.b16 %v1396, %v1392
          %v1693 = vpack.c.b16 %v1397, %v1393
          %v1694 = vpack.c.b16 %v1398, %v1394
          %v1695 = vpack.c.b16 %v1399, %v1395
          %v1696 = vpack.c.b16 %v1404, %v1400
          %v1697 = vpack.c.b16 %v1405, %v1401
          %v1698 = vpack.c.b16 %v1406, %v1402
          %v1699 = vpack.c.b16 %v1407, %v1403
          %v1700 = vpack.c.b16 %v1412, %v1408
          %v1701 = vpack.c.b16 %v1413, %v1409
          %v1702 = vpack.c.b16 %v1414, %v1410
          %v1703 = vpack.c.b16 %v1415, %v1411
          %v1704 = vpack.c.b16 %v1420, %v1416
          %v1705 = vpack.c.b16 %v1421, %v1417
          %v1706 = vpack.c.b16 %v1422, %v1418
          %v1707 = vpack.c.b16 %v1423, %v1419
          %v1708 = vpack.c.b16 %v1428, %v1424
          %v1709 = vpack.c.b16 %v1429, %v1425
          %v1710 = vpack.c.b16 %v1430, %v1426
          %v1711 = vpack.c.b16 %v1431, %v1427
          %v1712 = vpack.c.b16 %v1436, %v1432
          %v1713 = vpack.c.b16 %v1437, %v1433
          %v1714 = vpack.c.b16 %v1438, %v1434
          %v1715 = vpack.c.b16 %v1439, %v1435
          %v1716 = vpack.c.b16 %v1444, %v1440
          %v1717 = vpack.c.b16 %v1445, %v1441
          %v1718 = vpack.c.b16 %v1446, %v1442
          %v1719 = vpack.c.b16 %v1447, %v1443
          %v1720 = vpack.c.b16 %v1452, %v1448
          %v1721 = vpack.c.b16 %v1453, %v1449
          %v1722 = vpack.c.b16 %v1454, %v1450
          %v1723 = vpack.c.b16 %v1455, %v1451
          %v1724 = vpack.c.b16 %v1460, %v1456
          %v1725 = vpack.c.b16 %v1461, %v1457
          %v1726 = vpack.c.b16 %v1462, %v1458
          %v1727 = vpack.c.b16 %v1463, %v1459
          %v1728 = vpack.c.b16 %v1468, %v1464
          %v1729 = vpack.c.b16 %v1469, %v1465
          %v1730 = vpack.c.b16 %v1470, %v1466
          %v1731 = vpack.c.b16 %v1471, %v1467
          %v1732 = vpack.c.b16 %v1476, %v1472
          %v1733 = vpack.c.b16 %v1477, %v1473
          %v1734 = vpack.c.b16 %v1478, %v1474
          %v1735 = vpack.c.b16 %v1479, %v1475
          %v1736 = vpack.c.b16 %v1484, %v1480
          %v1737 = vpack.c.b16 %v1485, %v1481
          %v1738 = vpack.c.b16 %v1486, %v1482
          %v1739 = vpack.c.b16 %v1487, %v1483
          %v1740 = vpack.c.b16 %v1492, %v1488
          %v1741 = vpack.c.b16 %v1493, %v1489
          %v1742 = vpack.c.b16 %v1494, %v1490
          %v1743 = vpack.c.b16 %v1495, %v1491
          %v1744 = vpack.c.b16 %v1500, %v1496
          %v1745 = vpack.c.b16 %v1501, %v1497
          %v1746 = vpack.c.b16 %v1502, %v1498
          %v1747 = vpack.c.b16 %v1503, %v1499
          %v1748 = vpack.c.b16 %v1508, %v1504
          %v1749 = vpack.c.b16 %v1509, %v1505
          %v1750 = vpack.c.b16 %v1510, %v1506
          %v1751 = vpack.c.b16 %v1511, %v1507
          %v1752 = vpack.c.b16 %v1516, %v1512
          %v1753 = vpack.c.b16 %v1517, %v1513
          %v1754 = vpack.c.b16 %v1518, %v1514
          %v1755 = vpack.c.b16 %v1519, %v1515
          %v1756 = vpack.c.b16 %v1524, %v1520
          %v1757 = vpack.c.b16 %v1525, %v1521
          %v1758 = vpack.c.b16 %v1526, %v1522
          %v1759 = vpack.c.b16 %v1527, %v1523
          %v1760 = vpack.c.b16 %v1532, %v1528
          %v1761 = vpack.c.b16 %v1533, %v1529
          %v1762 = vpack.c.b16 %v1534, %v1530
          %v1763 = vpack.c.b16 %v1535, %v1531
          %v1764 = vpack.c.b16 %v1540, %v1536
          %v1765 = vpack.c.b16 %v1541, %v1537
          %v1766 = vpack.c.b16 %v1542, %v1538
          %v1767 = vpack.c.b16 %v1543, %v1539
          %v1768 = vpack.c.b16 %v1548, %v1544
          %v1769 = vpack.c.b16 %v1549, %v1545
          %v1770 = vpack.c.b16 %v1550, %v1546
          %v1771 = vpack.c.b16 %v1551, %v1547
          %v1772 = vpack.c.b16 %v1556, %v1552
          %v1773 = vpack.c.b16 %v1557, %v1553
          %v1774 = vpack.c.b16 %v1558, %v1554
          %v1775 = vpack.c.b16 %v1559, %v1555
          %v1776 = vpack.c.b16 %v1564, %v1560
          %v1777 = vpack.c.b16 %v1565, %v1561
          %v1778 = vpack.c.b16 %v1566, %v1562
          %v1779 = vpack.c.b16 %v1567, %v1563
          %v1780 = vpack.c.b16 %v1572, %v1568
          %v1781 = vpack.c.b16 %v1573, %v1569
          %v1782 = vpack.c.b16 %v1574, %v1570
          %v1783 = vpack.c.b16 %v1575, %v1571
          %v1784 = vpack.c.b16 %v1580, %v1576
          %v1785 = vpack.c.b16 %v1581, %v1577
          %v1786 = vpack.c.b16 %v1582, %v1578
          %v1787 = vpack.c.b16 %v1583, %v1579
          %v1788 = vpack.c.b16 %v1588, %v1584
          %v1789 = vpack.c.b16 %v1589, %v1585
          %v1790 = vpack.c.b16 %v1590, %v1586
          %v1791 = vpack.c.b16 %v1591, %v1587
          %v1792 = vpack.c.b16 %v1596, %v1592
          %v1793 = vpack.c.b16 %v1597, %v1593
          %v1794 = vpack.c.b16 %v1598, %v1594
          %v1795 = vpack.c.b16 %v1599, %v1595
          %v1796 = vpack.c.b16 %v1604, %v1600
          %v1797 = vpack.c.b16 %v1605, %v1601
          %v1798 = vpack.c.b16 %v1606, %v1602
          %v1799 = vpack.c.b16 %v1607, %v1603
          %1992 = vmatprep.subr.bf16.mxu0 %v1609
          %1993 = vmatpush1.bf16.msra.mxu0 %v1608
          %1994 = vmatprep.subr.bf16.mxu0 %v1613
          %1995 = vmatpush1.bf16.msra.mxu0 %v1612
          %1996 = vmatprep.subr.bf16.mxu0 %v1617
          %1997 = vmatpush1.bf16.msra.mxu0 %v1616
          %1998 = vmatprep.subr.bf16.mxu0 %v1621
          %1999 = vmatpush1.bf16.msra.mxu0 %v1620
          %2000 = vmatprep.subr.bf16.mxu0 %v1625
          %2001 = vmatpush1.bf16.msra.mxu0 %v1624
          %2002 = vmatprep.subr.bf16.mxu0 %v1629
          %2003 = vmatpush1.bf16.msra.mxu0 %v1628
          %2004 = vmatprep.subr.bf16.mxu0 %v1633
          %2005 = vmatpush1.bf16.msra.mxu0 %v1632
          %2006 = vmatprep.subr.bf16.mxu0 %v1637
          %2007 = vmatpush1.bf16.msra.mxu0 %v1636
          %2008 = vmatprep.subr.bf16.mxu0 %v1641
          %2009 = vmatpush1.bf16.msra.mxu0 %v1640
          %2010 = vmatprep.subr.bf16.mxu0 %v1645
          %2011 = vmatpush1.bf16.msra.mxu0 %v1644
          %2012 = vmatprep.subr.bf16.mxu0 %v1649
          %2013 = vmatpush1.bf16.msra.mxu0 %v1648
          %2014 = vmatprep.subr.bf16.mxu0 %v1653
          %2015 = vmatpush1.bf16.msra.mxu0 %v1652
          %2016 = vmatprep.subr.bf16.mxu0 %v1657
          %2017 = vmatpush1.bf16.msra.mxu0 %v1656
          %2018 = vmatprep.subr.bf16.mxu0 %v1661
          %2019 = vmatpush1.bf16.msra.mxu0 %v1660
          %2020 = vmatprep.subr.bf16.mxu0 %v1665
          %2021 = vmatpush1.bf16.msra.mxu0 %v1664
          %2022 = vmatprep.subr.bf16.mxu0 %v1669
          %2023 = vmatpush1.bf16.msra.mxu0 %v1668
          %2024 = vmatprep.mubr.bf16.mxu0 %v1016
          %2025 = vmatmul.mubr.bf16.gmra.mrb[0].mxu0 %v1002
          %v2026 = vpop.f32.mrb[0].mxu0
          %v2027 = vadd.f32 0.0, %v2026
          %v2028 = vpop.f32.mrb[0].mxu0
          %v2029 = vadd.f32 0.0, %v2028
          %v2030 = vpop.f32.mrb[0].mxu0
          %v2031 = vpop.f32.mrb[0].mxu0
          %2032 = vdwg.mxu0
          %2033 = vmatprep.subr.bf16.mxu0 %v1673
          %2034 = vmatpush1.bf16.msra.mxu0 %v1672
          %2035 = vmatprep.subr.bf16.mxu0 %v1677
          %2036 = vmatpush1.bf16.msra.mxu0 %v1676
          %2037 = vmatprep.subr.bf16.mxu0 %v1681
          %2038 = vmatpush1.bf16.msra.mxu0 %v1680
          %2039 = vmatprep.subr.bf16.mxu0 %v1685
          %2040 = vmatpush1.bf16.msra.mxu0 %v1684
          %2041 = vmatprep.subr.bf16.mxu0 %v1689
          %2042 = vmatpush1.bf16.msra.mxu0 %v1688
          %2043 = vmatprep.subr.bf16.mxu0 %v1693
          %2044 = vmatpush1.bf16.msra.mxu0 %v1692
          %2045 = vmatprep.subr.bf16.mxu0 %v1697
          %2046 = vmatpush1.bf16.msra.mxu0 %v1696
          %2047 = vmatprep.subr.bf16.mxu0 %v1701
          %2048 = vmatpush1.bf16.msra.mxu0 %v1700
          %2049 = vmatprep.subr.bf16.mxu0 %v1705
          %2050 = vmatpush1.bf16.msra.mxu0 %v1704
          %2051 = vmatprep.subr.bf16.mxu0 %v1709
          %2052 = vmatpush1.bf16.msra.mxu0 %v1708
          %2053 = vmatprep.subr.bf16.mxu0 %v1713
          %2054 = vmatpush1.bf16.msra.mxu0 %v1712
          %2055 = vmatprep.subr.bf16.mxu0 %v1717
          %2056 = vmatpush1.bf16.msra.mxu0 %v1716
          %2057 = vmatprep.subr.bf16.mxu0 %v1721
          %2058 = vmatpush1.bf16.msra.mxu0 %v1720
          %2059 = vmatprep.subr.bf16.mxu0 %v1725
          %2060 = vmatpush1.bf16.msra.mxu0 %v1724
          %2061 = vmatprep.subr.bf16.mxu0 %v1729
          %2062 = vmatpush1.bf16.msra.mxu0 %v1728
          %2063 = vmatprep.subr.bf16.mxu0 %v1733
          %2064 = vmatpush1.bf16.msra.mxu0 %v1732
          %2065 = vmatprep.mubr.bf16.mxu0 %v1025
          %2066 = vmatmul.mubr.bf16.gmra.mrb[0].mxu0 %v1024
          %v2067 = vpop.f32.mrb[0].mxu0
          %v2068 = vadd.f32 %v2027, %v2067
          %v2069 = vpop.f32.mrb[0].mxu0
          %v2070 = vadd.f32 %v2029, %v2069
          %v2071 = vpop.f32.mrb[0].mxu0
          %v2072 = vpop.f32.mrb[0].mxu0
          %2073 = vdwg.mxu0
          %2074 = vmatprep.subr.bf16.mxu0 %v1737
          %2075 = vmatpush1.bf16.msra.mxu0 %v1736
          %2076 = vmatprep.subr.bf16.mxu0 %v1741
          %2077 = vmatpush1.bf16.msra.mxu0 %v1740
          %2078 = vmatprep.subr.bf16.mxu0 %v1745
          %2079 = vmatpush1.bf16.msra.mxu0 %v1744
          %2080 = vmatprep.subr.bf16.mxu0 %v1749
          %2081 = vmatpush1.bf16.msra.mxu0 %v1748
          %2082 = vmatprep.subr.bf16.mxu0 %v1753
          %2083 = vmatpush1.bf16.msra.mxu0 %v1752
          %2084 = vmatprep.subr.bf16.mxu0 %v1757
          %2085 = vmatpush1.bf16.msra.mxu0 %v1756
          %2086 = vmatprep.subr.bf16.mxu0 %v1761
          %2087 = vmatpush1.bf16.msra.mxu0 %v1760
          %2088 = vmatprep.subr.bf16.mxu0 %v1765
          %2089 = vmatpush1.bf16.msra.mxu0 %v1764
          %2090 = vmatprep.subr.bf16.mxu0 %v1769
          %2091 = vmatpush1.bf16.msra.mxu0 %v1768
          %2092 = vmatprep.subr.bf16.mxu0 %v1773
          %2093 = vmatpush1.bf16.msra.mxu0 %v1772
          %2094 = vmatprep.subr.bf16.mxu0 %v1777
          %2095 = vmatpush1.bf16.msra.mxu0 %v1776
          %2096 = vmatprep.subr.bf16.mxu0 %v1781
          %2097 = vmatpush1.bf16.msra.mxu0 %v1780
          %2098 = vmatprep.subr.bf16.mxu0 %v1785
          %2099 = vmatpush1.bf16.msra.mxu0 %v1784
          %2100 = vmatprep.subr.bf16.mxu0 %v1789
          %2101 = vmatpush1.bf16.msra.mxu0 %v1788
          %2102 = vmatprep.subr.bf16.mxu0 %v1793
          %2103 = vmatpush1.bf16.msra.mxu0 %v1792
          %2104 = vmatprep.subr.bf16.mxu0 %v1797
          %2105 = vmatpush1.bf16.msra.mxu0 %v1796
          %2106 = vmatprep.mubr.bf16.mxu0 %v1023
          %2107 = vmatmul.mubr.bf16.gmra.mrb[0].mxu0 %v1009
          %v2108 = vpop.f32.mrb[0].mxu0
          %v2109 = vadd.f32 %v2068, %v2108
          %v2110 = vpop.f32.mrb[0].mxu0
          %v2111 = vadd.f32 %v2070, %v2110
          %v2112 = vpop.f32.mrb[0].mxu0
          %v2113 = vpop.f32.mrb[0].mxu0
          %2114 = vdwg.mxu0
          %2115 = vmatprep.subr.bf16.mxu0 %v1611
          %2116 = vmatpush1.bf16.msra.mxu0 %v1610
          %2117 = vmatprep.subr.bf16.mxu0 %v1615
          %2118 = vmatpush1.bf16.msra.mxu0 %v1614
          %2119 = vmatprep.subr.bf16.mxu0 %v1619
          %2120 = vmatpush1.bf16.msra.mxu0 %v1618
          %2121 = vmatprep.subr.bf16.mxu0 %v1623
          %2122 = vmatpush1.bf16.msra.mxu0 %v1622
          %2123 = vmatprep.subr.bf16.mxu0 %v1627
          %2124 = vmatpush1.bf16.msra.mxu0 %v1626
          %2125 = vmatprep.subr.bf16.mxu0 %v1631
          %2126 = vmatpush1.bf16.msra.mxu0 %v1630
          %2127 = vmatprep.subr.bf16.mxu0 %v1635
          %2128 = vmatpush1.bf16.msra.mxu0 %v1634
          %2129 = vmatprep.subr.bf16.mxu0 %v1639
          %2130 = vmatpush1.bf16.msra.mxu0 %v1638
          %2131 = vmatprep.subr.bf16.mxu0 %v1643
          %2132 = vmatpush1.bf16.msra.mxu0 %v1642
          %2133 = vmatprep.subr.bf16.mxu0 %v1647
          %2134 = vmatpush1.bf16.msra.mxu0 %v1646
          %2135 = vmatprep.subr.bf16.mxu0 %v1651
          %2136 = vmatpush1.bf16.msra.mxu0 %v1650
          %2137 = vmatprep.subr.bf16.mxu0 %v1655
          %2138 = vmatpush1.bf16.msra.mxu0 %v1654
          %2139 = vmatprep.subr.bf16.mxu0 %v1659
          %2140 = vmatpush1.bf16.msra.mxu0 %v1658
          %2141 = vmatprep.subr.bf16.mxu0 %v1663
          %2142 = vmatpush1.bf16.msra.mxu0 %v1662
          %2143 = vmatprep.subr.bf16.mxu0 %v1667
          %2144 = vmatpush1.bf16.msra.mxu0 %v1666
          %2145 = vmatprep.subr.bf16.mxu0 %v1671
          %2146 = vmatpush1.bf16.msra.mxu0 %v1670
          %2147 = vmatprep.mubr.bf16.mxu0 %v1016
          %2148 = vmatmul.mubr.bf16.gmra.mrb[0].mxu0 %v1002
          %v2149 = vpop.f32.mrb[0].mxu0
          %v2150 = vadd.f32 0.0, %v2149
          %v2151 = vpop.f32.mrb[0].mxu0
          %v2152 = vadd.f32 0.0, %v2151
          %v2153 = vpop.f32.mrb[0].mxu0
          %v2154 = vpop.f32.mrb[0].mxu0
          %2155 = vdwg.mxu0
          %2156 = vmatprep.subr.bf16.mxu0 %v1675
          %2157 = vmatpush1.bf16.msra.mxu0 %v1674
          %2158 = vmatprep.subr.bf16.mxu0 %v1679
          %2159 = vmatpush1.bf16.msra.mxu0 %v1678
          %2160 = vmatprep.subr.bf16.mxu0 %v1683
          %2161 = vmatpush1.bf16.msra.mxu0 %v1682
          %2162 = vmatprep.subr.bf16.mxu0 %v1687
          %2163 = vmatpush1.bf16.msra.mxu0 %v1686
          %2164 = vmatprep.subr.bf16.mxu0 %v1691
          %2165 = vmatpush1.bf16.msra.mxu0 %v1690
          %2166 = vmatprep.subr.bf16.mxu0 %v1695
          %2167 = vmatpush1.bf16.msra.mxu0 %v1694
          %2168 = vmatprep.subr.bf16.mxu0 %v1699
          %2169 = vmatpush1.bf16.msra.mxu0 %v1698
          %2170 = vmatprep.subr.bf16.mxu0 %v1703
          %2171 = vmatpush1.bf16.msra.mxu0 %v1702
          %2172 = vmatprep.subr.bf16.mxu0 %v1707
          %2173 = vmatpush1.bf16.msra.mxu0 %v1706
          %2174 = vmatprep.subr.bf16.mxu0 %v1711
          %2175 = vmatpush1.bf16.msra.mxu0 %v1710
          %2176 = vmatprep.subr.bf16.mxu0 %v1715
          %2177 = vmatpush1.bf16.msra.mxu0 %v1714
          %2178 = vmatprep.subr.bf16.mxu0 %v1719
          %2179 = vmatpush1.bf16.msra.mxu0 %v1718
          %2180 = vmatprep.subr.bf16.mxu0 %v1723
          %2181 = vmatpush1.bf16.msra.mxu0 %v1722
          %2182 = vmatprep.subr.bf16.mxu0 %v1727
          %2183 = vmatpush1.bf16.msra.mxu0 %v1726
          %2184 = vmatprep.subr.bf16.mxu0 %v1731
          %2185 = vmatpush1.bf16.msra.mxu0 %v1730
          %2186 = vmatprep.subr.bf16.mxu0 %v1735
          %2187 = vmatpush1.bf16.msra.mxu0 %v1734
          %2188 = vmatprep.mubr.bf16.mxu0 %v1025
          %2189 = vmatmul.mubr.bf16.gmra.mrb[0].mxu0 %v1024
          %v2190 = vpop.f32.mrb[0].mxu0
          %v2191 = vadd.f32 %v2150, %v2190
          %v2192 = vpop.f32.mrb[0].mxu0
          %v2193 = vadd.f32 %v2152, %v2192
          %v2194 = vpop.f32.mrb[0].mxu0
          %v2195 = vpop.f32.mrb[0].mxu0
          %2196 = vdwg.mxu0
          %2197 = vmatprep.subr.bf16.mxu0 %v1739
          %2198 = vmatpush1.bf16.msra.mxu0 %v1738
          %2199 = vmatprep.subr.bf16.mxu0 %v1743
          %2200 = vmatpush1.bf16.msra.mxu0 %v1742
          %2201 = vmatprep.subr.bf16.mxu0 %v1747
          %2202 = vmatpush1.bf16.msra.mxu0 %v1746
          %2203 = vmatprep.subr.bf16.mxu0 %v1751
          %2204 = vmatpush1.bf16.msra.mxu0 %v1750
          %2205 = vmatprep.subr.bf16.mxu0 %v1755
          %2206 = vmatpush1.bf16.msra.mxu0 %v1754
          %2207 = vmatprep.subr.bf16.mxu0 %v1759
          %2208 = vmatpush1.bf16.msra.mxu0 %v1758
          %2209 = vmatprep.subr.bf16.mxu0 %v1763
          %2210 = vmatpush1.bf16.msra.mxu0 %v1762
          %2211 = vmatprep.subr.bf16.mxu0 %v1767
          %2212 = vmatpush1.bf16.msra.mxu0 %v1766
          %2213 = vmatprep.subr.bf16.mxu0 %v1771
          %2214 = vmatpush1.bf16.msra.mxu0 %v1770
          %2215 = vmatprep.subr.bf16.mxu0 %v1775
          %2216 = vmatpush1.bf16.msra.mxu0 %v1774
          %2217 = vmatprep.subr.bf16.mxu0 %v1779
          %2218 = vmatpush1.bf16.msra.mxu0 %v1778
          %2219 = vmatprep.subr.bf16.mxu0 %v1783
          %2220 = vmatpush1.bf16.msra.mxu0 %v1782
          %2221 = vmatprep.subr.bf16.mxu0 %v1787
          %2222 = vmatpush1.bf16.msra.mxu0 %v1786
          %2223 = vmatprep.subr.bf16.mxu0 %v1791
          %2224 = vmatpush1.bf16.msra.mxu0 %v1790
          %2225 = vmatprep.subr.bf16.mxu0 %v1795
          %2226 = vmatpush1.bf16.msra.mxu0 %v1794
          %2227 = vmatprep.subr.bf16.mxu0 %v1799
          %2228 = vmatpush1.bf16.msra.mxu0 %v1798
          %2229 = vmatprep.mubr.bf16.mxu0 %v1023
          %2230 = vmatmul.mubr.bf16.gmra.mrb[0].mxu0 %v1009
          %v2231 = vpop.f32.mrb[0].mxu0
          %v2232 = vadd.f32 %v2191, %v2231
          %v2233 = vpop.f32.mrb[0].mxu0
          %v2234 = vadd.f32 %v2193, %v2233
          %v2235 = vpop.f32.mrb[0].mxu0
          %v2236 = vpop.f32.mrb[0].mxu0
          %2237 = vdwg.mxu0
          %v2242 = vcombine.low %v2109, %v2111
          %v2243 = vcombine.low %v2232, %v2234
          %v2245 = vunpack.c.l.s4 1983009808
          %v2246 = vunpack.c.0.s8 %v2245
          %v2247 = vlaneseq
          %v2248 = vshrl.u32 %v2247, 7
          %v2249 = vsub.s32 %v2246, %v2248
          %v2250 = vrot.slane %v2242, %v2249
          %v2252 = vunpack.c.l.s4 1983009808
          %v2253 = vunpack.c.0.s8 %v2252
          %v2254 = vlaneseq
          %v2255 = vshrl.u32 %v2254, 7
          %v2256 = vsub.s32 %v2253, %v2255
          %v2257 = vrot.slane %v2243, %v2256
          %v2258 = vcombine.low %v2250, %v2257
          %v2260 = vadd.f32 %v976, %v2258
          %2261 = vst [vmem:[#allocation2] sm:$0xff] %v2260
          %v2262 = vld [vmem:[#allocation2 + $0x8] sm:$0x3]
          %v2359 = vunpack.c.l.b16 %v686
          %v2360 = vunpack.c.l.b16 %v689
          %v2361 = vunpack.c.l.b16 %v692
          %v2362 = vunpack.c.l.b16 %v695
          %v2363 = vunpack.c.l.b16 %v698
          %v2364 = vunpack.c.l.b16 %v701
          %v2365 = vunpack.c.l.b16 %v704
          %v2366 = vunpack.c.l.b16 %v707
          %v2367 = vunpack.c.l.b16 %v710
          %v2368 = vunpack.c.l.b16 %v713
          %v2369 = vunpack.c.l.b16 %v716
          %v2370 = vunpack.c.l.b16 %v719
          %v2371 = vunpack.c.l.b16 %v722
          %v2372 = vunpack.c.l.b16 %v725
          %v2373 = vunpack.c.l.b16 %v728
          %v2374 = vunpack.c.l.b16 %v731
          %v2375 = vunpack.c.l.b16 %v734
          %v2376 = vunpack.c.l.b16 %v737
          %v2377 = vunpack.c.l.b16 %v740
          %v2378 = vunpack.c.l.b16 %v743
          %v2379 = vunpack.c.l.b16 %v746
          %v2380 = vunpack.c.l.b16 %v749
          %v2381 = vunpack.c.l.b16 %v752
          %v2382 = vunpack.c.l.b16 %v755
          %v2383 = vunpack.c.l.b16 %v758
          %v2384 = vunpack.c.l.b16 %v761
          %v2385 = vunpack.c.l.b16 %v764
          %v2386 = vunpack.c.l.b16 %v767
          %v2387 = vunpack.c.l.b16 %v770
          %v2388 = vunpack.c.l.b16 %v773
          %v2389 = vunpack.c.l.b16 %v776
          %v2390 = vunpack.c.l.b16 %v779
          %v2391 = vunpack.c.l.b16 %v782
          %v2392 = vunpack.c.l.b16 %v785
          %v2393 = vunpack.c.l.b16 %v788
          %v2394 = vunpack.c.l.b16 %v791
          %v2395 = vunpack.c.l.b16 %v794
          %v2396 = vunpack.c.l.b16 %v797
          %v2397 = vunpack.c.l.b16 %v800
          %v2398 = vunpack.c.l.b16 %v803
          %v2399 = vunpack.c.l.b16 %v806
          %v2400 = vunpack.c.l.b16 %v809
          %v2401 = vunpack.c.l.b16 %v812
          %v2402 = vunpack.c.l.b16 %v815
          %v2403 = vunpack.c.l.b16 %v818
          %v2404 = vunpack.c.l.b16 %v821
          %v2405 = vunpack.c.l.b16 %v824
          %v2406 = vunpack.c.l.b16 %v827
          %v2407 = vunpack.c.l.b16 %v830
          %v2408 = vunpack.c.l.b16 %v833
          %v2409 = vunpack.c.l.b16 %v836
          %v2410 = vunpack.c.l.b16 %v839
          %v2411 = vunpack.c.l.b16 %v842
          %v2412 = vunpack.c.l.b16 %v845
          %v2413 = vunpack.c.l.b16 %v848
          %v2414 = vunpack.c.l.b16 %v851
          %v2415 = vunpack.c.l.b16 %v854
          %v2416 = vunpack.c.l.b16 %v857
          %v2417 = vunpack.c.l.b16 %v860
          %v2418 = vunpack.c.l.b16 %v863
          %v2419 = vunpack.c.l.b16 %v866
          %v2420 = vunpack.c.l.b16 %v869
          %v2421 = vunpack.c.l.b16 %v872
          %v2422 = vunpack.c.l.b16 %v875
          %v2423 = vunpack.c.l.b16 %v878
          %v2424 = vunpack.c.l.b16 %v881
          %v2425 = vunpack.c.l.b16 %v884
          %v2426 = vunpack.c.l.b16 %v887
          %v2427 = vunpack.c.l.b16 %v890
          %v2428 = vunpack.c.l.b16 %v893
          %v2429 = vunpack.c.l.b16 %v896
          %v2430 = vunpack.c.l.b16 %v899
          %v2431 = vunpack.c.l.b16 %v902
          %v2432 = vunpack.c.l.b16 %v905
          %v2433 = vunpack.c.l.b16 %v908
          %v2434 = vunpack.c.l.b16 %v911
          %v2435 = vunpack.c.l.b16 %v914
          %v2436 = vunpack.c.l.b16 %v917
          %v2437 = vunpack.c.l.b16 %v920
          %v2438 = vunpack.c.l.b16 %v923
          %v2439 = vunpack.c.l.b16 %v926
          %v2440 = vunpack.c.l.b16 %v929
          %v2441 = vunpack.c.l.b16 %v932
          %v2442 = vunpack.c.l.b16 %v935
          %v2443 = vunpack.c.l.b16 %v938
          %v2444 = vunpack.c.l.b16 %v941
          %v2445 = vunpack.c.l.b16 %v944
          %v2446 = vunpack.c.l.b16 %v947
          %v2447 = vunpack.c.l.b16 %v950
          %v2448 = vunpack.c.l.b16 %v953
          %v2449 = vunpack.c.l.b16 %v956
          %v2450 = vunpack.c.l.b16 %v959
          %v2451 = vunpack.c.l.b16 %v962
          %v2452 = vunpack.c.l.b16 %v965
          %v2453 = vunpack.c.l.b16 %v968
          %v2454 = vunpack.c.l.b16 %v971
          %v2455 = vpack.c.b16 %v2360, %v2359
          %v2456 = vpack.c.b16 %v2362, %v2361
          %v2457 = vpack.c.b16 %v2364, %v2363
          %v2458 = vpack.c.b16 %v2366, %v2365
          %v2459 = vpack.c.b16 %v2368, %v2367
          %v2460 = vpack.c.b16 %v2370, %v2369
          %v2461 = vpack.c.b16 %v2372, %v2371
          %v2462 = vpack.c.b16 %v2374, %v2373
          %v2463 = vpack.c.b16 %v2376, %v2375
          %v2464 = vpack.c.b16 %v2378, %v2377
          %v2465 = vpack.c.b16 %v2380, %v2379
          %v2466 = vpack.c.b16 %v2382, %v2381
          %v2467 = vpack.c.b16 %v2384, %v2383
          %v2468 = vpack.c.b16 %v2386, %v2385
          %v2469 = vpack.c.b16 %v2388, %v2387
          %v2470 = vpack.c.b16 %v2390, %v2389
          %v2471 = vpack.c.b16 %v2392, %v2391
          %v2472 = vpack.c.b16 %v2394, %v2393
          %v2473 = vpack.c.b16 %v2396, %v2395
          %v2474 = vpack.c.b16 %v2398, %v2397
          %v2475 = vpack.c.b16 %v2400, %v2399
          %v2476 = vpack.c.b16 %v2402, %v2401
          %v2477 = vpack.c.b16 %v2404, %v2403
          %v2478 = vpack.c.b16 %v2406, %v2405
          %v2479 = vpack.c.b16 %v2408, %v2407
          %v2480 = vpack.c.b16 %v2410, %v2409
          %v2481 = vpack.c.b16 %v2412, %v2411
          %v2482 = vpack.c.b16 %v2414, %v2413
          %v2483 = vpack.c.b16 %v2416, %v2415
          %v2484 = vpack.c.b16 %v2418, %v2417
          %v2485 = vpack.c.b16 %v2420, %v2419
          %v2486 = vpack.c.b16 %v2422, %v2421
          %v2487 = vpack.c.b16 %v2424, %v2423
          %v2488 = vpack.c.b16 %v2426, %v2425
          %v2489 = vpack.c.b16 %v2428, %v2427
          %v2490 = vpack.c.b16 %v2430, %v2429
          %v2491 = vpack.c.b16 %v2432, %v2431
          %v2492 = vpack.c.b16 %v2434, %v2433
          %v2493 = vpack.c.b16 %v2436, %v2435
          %v2494 = vpack.c.b16 %v2438, %v2437
          %v2495 = vpack.c.b16 %v2440, %v2439
          %v2496 = vpack.c.b16 %v2442, %v2441
          %v2497 = vpack.c.b16 %v2444, %v2443
          %v2498 = vpack.c.b16 %v2446, %v2445
          %v2499 = vpack.c.b16 %v2448, %v2447
          %v2500 = vpack.c.b16 %v2450, %v2449
          %v2501 = vpack.c.b16 %v2452, %v2451
          %v2502 = vpack.c.b16 %v2454, %v2453
          %2551 = vmatprep.subr.bf16.mxu0 0
          %2552 = vmatpush1.bf16.msra.mxu0 %v2455
          %2553 = vmatprep.subr.bf16.mxu0 0
          %2554 = vmatpush1.bf16.msra.mxu0 %v2456
          %2555 = vmatprep.subr.bf16.mxu0 0
          %2556 = vmatpush1.bf16.msra.mxu0 %v2457
          %2557 = vmatprep.subr.bf16.mxu0 0
          %2558 = vmatpush1.bf16.msra.mxu0 %v2458
          %2559 = vmatprep.subr.bf16.mxu0 0
          %2560 = vmatpush1.bf16.msra.mxu0 %v2459
          %2561 = vmatprep.subr.bf16.mxu0 0
          %2562 = vmatpush1.bf16.msra.mxu0 %v2460
          %2563 = vmatprep.subr.bf16.mxu0 0
          %2564 = vmatpush1.bf16.msra.mxu0 %v2461
          %2565 = vmatprep.subr.bf16.mxu0 0
          %2566 = vmatpush1.bf16.msra.mxu0 %v2462
          %2567 = vmatprep.subr.bf16.mxu0 0
          %2568 = vmatpush1.bf16.msra.mxu0 %v2463
          %2569 = vmatprep.subr.bf16.mxu0 0
          %2570 = vmatpush1.bf16.msra.mxu0 %v2464
          %2571 = vmatprep.subr.bf16.mxu0 0
          %2572 = vmatpush1.bf16.msra.mxu0 %v2465
          %2573 = vmatprep.subr.bf16.mxu0 0
          %2574 = vmatpush1.bf16.msra.mxu0 %v2466
          %2575 = vmatprep.subr.bf16.mxu0 0
          %2576 = vmatpush1.bf16.msra.mxu0 %v2467
          %2577 = vmatprep.subr.bf16.mxu0 0
          %2578 = vmatpush1.bf16.msra.mxu0 %v2468
          %2579 = vmatprep.subr.bf16.mxu0 0
          %2580 = vmatpush1.bf16.msra.mxu0 %v2469
          %2581 = vmatprep.subr.bf16.mxu0 0
          %2582 = vmatpush1.bf16.msra.mxu0 %v2470
          %2583 = vmatprep.mubr.bf16.mxu0 %v679
          %2584 = vmatmul.mubr.bf16.gmra.mrb[0].mxu0 %v678
          %v2585 = vpop.f32.mrb[0].mxu0
          %v2586 = vadd.f32 0.0, %v2585
          %v2587 = vpop.f32.mrb[0].mxu0
          %v2588 = vpop.f32.mrb[0].mxu0
          %v2589 = vpop.f32.mrb[0].mxu0
          %2590 = vdwg.mxu0
          %2591 = vmatprep.subr.bf16.mxu0 0
          %2592 = vmatpush1.bf16.msra.mxu0 %v2471
          %2593 = vmatprep.subr.bf16.mxu0 0
          %2594 = vmatpush1.bf16.msra.mxu0 %v2472
          %2595 = vmatprep.subr.bf16.mxu0 0
          %2596 = vmatpush1.bf16.msra.mxu0 %v2473
          %2597 = vmatprep.subr.bf16.mxu0 0
          %2598 = vmatpush1.bf16.msra.mxu0 %v2474
          %2599 = vmatprep.subr.bf16.mxu0 0
          %2600 = vmatpush1.bf16.msra.mxu0 %v2475
          %2601 = vmatprep.subr.bf16.mxu0 0
          %2602 = vmatpush1.bf16.msra.mxu0 %v2476
          %2603 = vmatprep.subr.bf16.mxu0 0
          %2604 = vmatpush1.bf16.msra.mxu0 %v2477
          %2605 = vmatprep.subr.bf16.mxu0 0
          %2606 = vmatpush1.bf16.msra.mxu0 %v2478
          %2607 = vmatprep.subr.bf16.mxu0 0
          %2608 = vmatpush1.bf16.msra.mxu0 %v2479
          %2609 = vmatprep.subr.bf16.mxu0 0
          %2610 = vmatpush1.bf16.msra.mxu0 %v2480
          %2611 = vmatprep.subr.bf16.mxu0 0
          %2612 = vmatpush1.bf16.msra.mxu0 %v2481
          %2613 = vmatprep.subr.bf16.mxu0 0
          %2614 = vmatpush1.bf16.msra.mxu0 %v2482
          %2615 = vmatprep.subr.bf16.mxu0 0
          %2616 = vmatpush1.bf16.msra.mxu0 %v2483
          %2617 = vmatprep.subr.bf16.mxu0 0
          %2618 = vmatpush1.bf16.msra.mxu0 %v2484
          %2619 = vmatprep.subr.bf16.mxu0 0
          %2620 = vmatpush1.bf16.msra.mxu0 %v2485
          %2621 = vmatprep.subr.bf16.mxu0 0
          %2622 = vmatpush1.bf16.msra.mxu0 %v2486
          %2623 = vmatprep.mubr.bf16.mxu0 %v681
          %2624 = vmatmul.mubr.bf16.gmra.mrb[0].mxu0 %v680
          %v2625 = vpop.f32.mrb[0].mxu0
          %v2626 = vadd.f32 %v2586, %v2625
          %v2627 = vpop.f32.mrb[0].mxu0
          %v2628 = vpop.f32.mrb[0].mxu0
          %v2629 = vpop.f32.mrb[0].mxu0
          %2630 = vdwg.mxu0
          %2631 = vmatprep.subr.bf16.mxu0 0
          %2632 = vmatpush1.bf16.msra.mxu0 %v2487
          %2633 = vmatprep.subr.bf16.mxu0 0
          %2634 = vmatpush1.bf16.msra.mxu0 %v2488
          %2635 = vmatprep.subr.bf16.mxu0 0
          %2636 = vmatpush1.bf16.msra.mxu0 %v2489
          %2637 = vmatprep.subr.bf16.mxu0 0
          %2638 = vmatpush1.bf16.msra.mxu0 %v2490
          %2639 = vmatprep.subr.bf16.mxu0 0
          %2640 = vmatpush1.bf16.msra.mxu0 %v2491
          %2641 = vmatprep.subr.bf16.mxu0 0
          %2642 = vmatpush1.bf16.msra.mxu0 %v2492
          %2643 = vmatprep.subr.bf16.mxu0 0
          %2644 = vmatpush1.bf16.msra.mxu0 %v2493
          %2645 = vmatprep.subr.bf16.mxu0 0
          %2646 = vmatpush1.bf16.msra.mxu0 %v2494
          %2647 = vmatprep.subr.bf16.mxu0 0
          %2648 = vmatpush1.bf16.msra.mxu0 %v2495
          %2649 = vmatprep.subr.bf16.mxu0 0
          %2650 = vmatpush1.bf16.msra.mxu0 %v2496
          %2651 = vmatprep.subr.bf16.mxu0 0
          %2652 = vmatpush1.bf16.msra.mxu0 %v2497
          %2653 = vmatprep.subr.bf16.mxu0 0
          %2654 = vmatpush1.bf16.msra.mxu0 %v2498
          %2655 = vmatprep.subr.bf16.mxu0 0
          %2656 = vmatpush1.bf16.msra.mxu0 %v2499
          %2657 = vmatprep.subr.bf16.mxu0 0
          %2658 = vmatpush1.bf16.msra.mxu0 %v2500
          %2659 = vmatprep.subr.bf16.mxu0 0
          %2660 = vmatpush1.bf16.msra.mxu0 %v2501
          %2661 = vmatprep.subr.bf16.mxu0 0
          %2662 = vmatpush1.bf16.msra.mxu0 %v2502
          %2663 = vmatprep.mubr.bf16.mxu0 %v683
          %2664 = vmatmul.mubr.bf16.gmra.mrb[0].mxu0 %v682
          %v2665 = vpop.f32.mrb[0].mxu0
          %v2666 = vadd.f32 %v2626, %v2665
          %v2667 = vpop.f32.mrb[0].mxu0
          %v2668 = vpop.f32.mrb[0].mxu0
          %v2669 = vpop.f32.mrb[0].mxu0
          %2670 = vdwg.mxu0
          %v2671 = vadd.f32 %v2262, %v2666
          %2672 = vst [vmem:[#allocation2 + $0x8] sm:$0x3] %v2671
        $region76: #{tpu_custom_call.1} parent=43 // pred_fallthru
          _
        %p2673 = scmp.eq.s32.totalorder %s28, 1
        // Predicated region
        $region77: #{tpu_custom_call.1} parent=43 // pred_check
          %p2674 = pneg %p2673
        $region78: #{tpu_custom_call.1} parent=43 // pred_check_branch
          %2676 = sbr.rel (%p2674) target = $region80
        $region79: #{tpu_custom_call.1} parent=43 // pred_region
          %v2677 = vld [vmem:[#allocation2] sm:$0xff]
          %v2678 = vld [vmem:[#allocation2 + $0x8] sm:$0x3]
          %v2967 = vunpack.c.l.b16 %v684
          %v2968 = vunpack.c.h.b16 %v684
          %v2969 = vunpack.c.l.b16 %v685
          %v2970 = vunpack.c.h.b16 %v685
          %v2971 = vunpack.c.l.b16 %v686
          %v2972 = vunpack.c.l.b16 %v687
          %v2973 = vunpack.c.h.b16 %v687
          %v2974 = vunpack.c.l.b16 %v688
          %v2975 = vunpack.c.h.b16 %v688
          %v2976 = vunpack.c.l.b16 %v689
          %v2977 = vunpack.c.l.b16 %v690
          %v2978 = vunpack.c.h.b16 %v690
          %v2979 = vunpack.c.l.b16 %v691
          %v2980 = vunpack.c.h.b16 %v691
          %v2981 = vunpack.c.l.b16 %v692
          %v2982 = vunpack.c.l.b16 %v693
          %v2983 = vunpack.c.h.b16 %v693
          %v2984 = vunpack.c.l.b16 %v694
          %v2985 = vunpack.c.h.b16 %v694
          %v2986 = vunpack.c.l.b16 %v695
          %v2987 = vunpack.c.l.b16 %v696
          %v2988 = vunpack.c.h.b16 %v696
          %v2989 = vunpack.c.l.b16 %v697
          %v2990 = vunpack.c.h.b16 %v697
          %v2991 = vunpack.c.l.b16 %v698
          %v2992 = vunpack.c.l.b16 %v699
          %v2993 = vunpack.c.h.b16 %v699
          %v2994 = vunpack.c.l.b16 %v700
          %v2995 = vunpack.c.h.b16 %v700
          %v2996 = vunpack.c.l.b16 %v701
          %v2997 = vunpack.c.l.b16 %v702
          %v2998 = vunpack.c.h.b16 %v702
          %v2999 = vunpack.c.l.b16 %v703
          %v3000 = vunpack.c.h.b16 %v703
          %v3001 = vunpack.c.l.b16 %v704
          %v3002 = vunpack.c.l.b16 %v705
          %v3003 = vunpack.c.h.b16 %v705
          %v3004 = vunpack.c.l.b16 %v706
          %v3005 = vunpack.c.h.b16 %v706
          %v3006 = vunpack.c.l.b16 %v707
          %v3007 = vunpack.c.l.b16 %v708
          %v3008 = vunpack.c.h.b16 %v708
          %v3009 = vunpack.c.l.b16 %v709
          %v3010 = vunpack.c.h.b16 %v709
          %v3011 = vunpack.c.l.b16 %v710
          %v3012 = vunpack.c.l.b16 %v711
          %v3013 = vunpack.c.h.b16 %v711
          %v3014 = vunpack.c.l.b16 %v712
          %v3015 = vunpack.c.h.b16 %v712
          %v3016 = vunpack.c.l.b16 %v713
          %v3017 = vunpack.c.l.b16 %v714
          %v3018 = vunpack.c.h.b16 %v714
          %v3019 = vunpack.c.l.b16 %v715
          %v3020 = vunpack.c.h.b16 %v715
          %v3021 = vunpack.c.l.b16 %v716
          %v3022 = vunpack.c.l.b16 %v717
          %v3023 = vunpack.c.h.b16 %v717
          %v3024 = vunpack.c.l.b16 %v718
          %v3025 = vunpack.c.h.b16 %v718
          %v3026 = vunpack.c.l.b16 %v719
          %v3027 = vunpack.c.l.b16 %v720
          %v3028 = vunpack.c.h.b16 %v720
          %v3029 = vunpack.c.l.b16 %v721
          %v3030 = vunpack.c.h.b16 %v721
          %v3031 = vunpack.c.l.b16 %v722
          %v3032 = vunpack.c.l.b16 %v723
          %v3033 = vunpack.c.h.b16 %v723
          %v3034 = vunpack.c.l.b16 %v724
          %v3035 = vunpack.c.h.b16 %v724
          %v3036 = vunpack.c.l.b16 %v725
          %v3037 = vunpack.c.l.b16 %v726
          %v3038 = vunpack.c.h.b16 %v726
          %v3039 = vunpack.c.l.b16 %v727
          %v3040 = vunpack.c.h.b16 %v727
          %v3041 = vunpack.c.l.b16 %v728
          %v3042 = vunpack.c.l.b16 %v729
          %v3043 = vunpack.c.h.b16 %v729
          %v3044 = vunpack.c.l.b16 %v730
          %v3045 = vunpack.c.h.b16 %v730
          %v3046 = vunpack.c.l.b16 %v731
          %v3047 = vunpack.c.l.b16 %v732
          %v3048 = vunpack.c.h.b16 %v732
          %v3049 = vunpack.c.l.b16 %v733
          %v3050 = vunpack.c.h.b16 %v733
          %v3051 = vunpack.c.l.b16 %v734
          %v3052 = vunpack.c.l.b16 %v735
          %v3053 = vunpack.c.h.b16 %v735
          %v3054 = vunpack.c.l.b16 %v736
          %v3055 = vunpack.c.h.b16 %v736
          %v3056 = vunpack.c.l.b16 %v737
          %v3057 = vunpack.c.l.b16 %v738
          %v3058 = vunpack.c.h.b16 %v738
          %v3059 = vunpack.c.l.b16 %v739
          %v3060 = vunpack.c.h.b16 %v739
          %v3061 = vunpack.c.l.b16 %v740
          %v3062 = vunpack.c.l.b16 %v741
          %v3063 = vunpack.c.h.b16 %v741
          %v3064 = vunpack.c.l.b16 %v742
          %v3065 = vunpack.c.h.b16 %v742
          %v3066 = vunpack.c.l.b16 %v743
          %v3067 = vunpack.c.l.b16 %v744
          %v3068 = vunpack.c.h.b16 %v744
          %v3069 = vunpack.c.l.b16 %v745
          %v3070 = vunpack.c.h.b16 %v745
          %v3071 = vunpack.c.l.b16 %v746
          %v3072 = vunpack.c.l.b16 %v747
          %v3073 = vunpack.c.h.b16 %v747
          %v3074 = vunpack.c.l.b16 %v748
          %v3075 = vunpack.c.h.b16 %v748
          %v3076 = vunpack.c.l.b16 %v749
          %v3077 = vunpack.c.l.b16 %v750
          %v3078 = vunpack.c.h.b16 %v750
          %v3079 = vunpack.c.l.b16 %v751
          %v3080 = vunpack.c.h.b16 %v751
          %v3081 = vunpack.c.l.b16 %v752
          %v3082 = vunpack.c.l.b16 %v753
          %v3083 = vunpack.c.h.b16 %v753
          %v3084 = vunpack.c.l.b16 %v754
          %v3085 = vunpack.c.h.b16 %v754
          %v3086 = vunpack.c.l.b16 %v755
          %v3087 = vunpack.c.l.b16 %v756
          %v3088 = vunpack.c.h.b16 %v756
          %v3089 = vunpack.c.l.b16 %v757
          %v3090 = vunpack.c.h.b16 %v757
          %v3091 = vunpack.c.l.b16 %v758
          %v3092 = vunpack.c.l.b16 %v759
          %v3093 = vunpack.c.h.b16 %v759
          %v3094 = vunpack.c.l.b16 %v760
          %v3095 = vunpack.c.h.b16 %v760
          %v3096 = vunpack.c.l.b16 %v761
          %v3097 = vunpack.c.l.b16 %v762
          %v3098 = vunpack.c.h.b16 %v762
          %v3099 = vunpack.c.l.b16 %v763
          %v3100 = vunpack.c.h.b16 %v763
          %v3101 = vunpack.c.l.b16 %v764
          %v3102 = vunpack.c.l.b16 %v765
          %v3103 = vunpack.c.h.b16 %v765
          %v3104 = vunpack.c.l.b16 %v766
          %v3105 = vunpack.c.h.b16 %v766
          %v3106 = vunpack.c.l.b16 %v767
          %v3107 = vunpack.c.l.b16 %v768
          %v3108 = vunpack.c.h.b16 %v768
          %v3109 = vunpack.c.l.b16 %v769
          %v3110 = vunpack.c.h.b16 %v769
          %v3111 = vunpack.c.l.b16 %v770
          %v3112 = vunpack.c.l.b16 %v771
          %v3113 = vunpack.c.h.b16 %v771
          %v3114 = vunpack.c.l.b16 %v772
          %v3115 = vunpack.c.h.b16 %v772
          %v3116 = vunpack.c.l.b16 %v773
          %v3117 = vunpack.c.l.b16 %v774
          %v3118 = vunpack.c.h.b16 %v774
          %v3119 = vunpack.c.l.b16 %v775
          %v3120 = vunpack.c.h.b16 %v775
          %v3121 = vunpack.c.l.b16 %v776
          %v3122 = vunpack.c.l.b16 %v777
          %v3123 = vunpack.c.h.b16 %v777
          %v3124 = vunpack.c.l.b16 %v778
          %v3125 = vunpack.c.h.b16 %v778
          %v3126 = vunpack.c.l.b16 %v779
          %v3127 = vunpack.c.l.b16 %v780
          %v3128 = vunpack.c.h.b16 %v780
          %v3129 = vunpack.c.l.b16 %v781
          %v3130 = vunpack.c.h.b16 %v781
          %v3131 = vunpack.c.l.b16 %v782
          %v3132 = vunpack.c.l.b16 %v783
          %v3133 = vunpack.c.h.b16 %v783
          %v3134 = vunpack.c.l.b16 %v784
          %v3135 = vunpack.c.h.b16 %v784
          %v3136 = vunpack.c.l.b16 %v785
          %v3137 = vunpack.c.l.b16 %v786
          %v3138 = vunpack.c.h.b16 %v786
          %v3139 = vunpack.c.l.b16 %v787
          %v3140 = vunpack.c.h.b16 %v787
          %v3141 = vunpack.c.l.b16 %v788
          %v3142 = vunpack.c.l.b16 %v789
          %v3143 = vunpack.c.h.b16 %v789
          %v3144 = vunpack.c.l.b16 %v790
          %v3145 = vunpack.c.h.b16 %v790
          %v3146 = vunpack.c.l.b16 %v791
          %v3147 = vunpack.c.l.b16 %v792
          %v3148 = vunpack.c.h.b16 %v792
          %v3149 = vunpack.c.l.b16 %v793
          %v3150 = vunpack.c.h.b16 %v793
          %v3151 = vunpack.c.l.b16 %v794
          %v3152 = vunpack.c.l.b16 %v795
          %v3153 = vunpack.c.h.b16 %v795
          %v3154 = vunpack.c.l.b16 %v796
          %v3155 = vunpack.c.h.b16 %v796
          %v3156 = vunpack.c.l.b16 %v797
          %v3157 = vunpack.c.l.b16 %v798
          %v3158 = vunpack.c.h.b16 %v798
          %v3159 = vunpack.c.l.b16 %v799
          %v3160 = vunpack.c.h.b16 %v799
          %v3161 = vunpack.c.l.b16 %v800
          %v3162 = vunpack.c.l.b16 %v801
          %v3163 = vunpack.c.h.b16 %v801
          %v3164 = vunpack.c.l.b16 %v802
          %v3165 = vunpack.c.h.b16 %v802
          %v3166 = vunpack.c.l.b16 %v803
          %v3167 = vunpack.c.l.b16 %v804
          %v3168 = vunpack.c.h.b16 %v804
          %v3169 = vunpack.c.l.b16 %v805
          %v3170 = vunpack.c.h.b16 %v805
          %v3171 = vunpack.c.l.b16 %v806
          %v3172 = vunpack.c.l.b16 %v807
          %v3173 = vunpack.c.h.b16 %v807
          %v3174 = vunpack.c.l.b16 %v808
          %v3175 = vunpack.c.h.b16 %v808
          %v3176 = vunpack.c.l.b16 %v809
          %v3177 = vunpack.c.l.b16 %v810
          %v3178 = vunpack.c.h.b16 %v810
          %v3179 = vunpack.c.l.b16 %v811
          %v3180 = vunpack.c.h.b16 %v811
          %v3181 = vunpack.c.l.b16 %v812
          %v3182 = vunpack.c.l.b16 %v813
          %v3183 = vunpack.c.h.b16 %v813
          %v3184 = vunpack.c.l.b16 %v814
          %v3185 = vunpack.c.h.b16 %v814
          %v3186 = vunpack.c.l.b16 %v815
          %v3187 = vunpack.c.l.b16 %v816
          %v3188 = vunpack.c.h.b16 %v816
          %v3189 = vunpack.c.l.b16 %v817
          %v3190 = vunpack.c.h.b16 %v817
          %v3191 = vunpack.c.l.b16 %v818
          %v3192 = vunpack.c.l.b16 %v819
          %v3193 = vunpack.c.h.b16 %v819
          %v3194 = vunpack.c.l.b16 %v820
          %v3195 = vunpack.c.h.b16 %v820
          %v3196 = vunpack.c.l.b16 %v821
          %v3197 = vunpack.c.l.b16 %v822
          %v3198 = vunpack.c.h.b16 %v822
          %v3199 = vunpack.c.l.b16 %v823
          %v3200 = vunpack.c.h.b16 %v823
          %v3201 = vunpack.c.l.b16 %v824
          %v3202 = vunpack.c.l.b16 %v825
          %v3203 = vunpack.c.h.b16 %v825
          %v3204 = vunpack.c.l.b16 %v826
          %v3205 = vunpack.c.h.b16 %v826
          %v3206 = vunpack.c.l.b16 %v827
          %v3207 = vunpack.c.l.b16 %v828
          %v3208 = vunpack.c.h.b16 %v828
          %v3209 = vunpack.c.l.b16 %v829
          %v3210 = vunpack.c.h.b16 %v829
          %v3211 = vunpack.c.l.b16 %v830
          %v3212 = vunpack.c.l.b16 %v831
          %v3213 = vunpack.c.h.b16 %v831
          %v3214 = vunpack.c.l.b16 %v832
          %v3215 = vunpack.c.h.b16 %v832
          %v3216 = vunpack.c.l.b16 %v833
          %v3217 = vunpack.c.l.b16 %v834
          %v3218 = vunpack.c.h.b16 %v834
          %v3219 = vunpack.c.l.b16 %v835
          %v3220 = vunpack.c.h.b16 %v835
          %v3221 = vunpack.c.l.b16 %v836
          %v3222 = vunpack.c.l.b16 %v837
          %v3223 = vunpack.c.h.b16 %v837
          %v3224 = vunpack.c.l.b16 %v838
          %v3225 = vunpack.c.h.b16 %v838
          %v3226 = vunpack.c.l.b16 %v839
          %v3227 = vunpack.c.l.b16 %v840
          %v3228 = vunpack.c.h.b16 %v840
          %v3229 = vunpack.c.l.b16 %v841
          %v3230 = vunpack.c.h.b16 %v841
          %v3231 = vunpack.c.l.b16 %v842
          %v3232 = vunpack.c.l.b16 %v843
          %v3233 = vunpack.c.h.b16 %v843
          %v3234 = vunpack.c.l.b16 %v844
          %v3235 = vunpack.c.h.b16 %v844
          %v3236 = vunpack.c.l.b16 %v845
          %v3237 = vunpack.c.l.b16 %v846
          %v3238 = vunpack.c.h.b16 %v846
          %v3239 = vunpack.c.l.b16 %v847
          %v3240 = vunpack.c.h.b16 %v847
          %v3241 = vunpack.c.l.b16 %v848
          %v3242 = vunpack.c.l.b16 %v849
          %v3243 = vunpack.c.h.b16 %v849
          %v3244 = vunpack.c.l.b16 %v850
          %v3245 = vunpack.c.h.b16 %v850
          %v3246 = vunpack.c.l.b16 %v851
          %v3247 = vunpack.c.l.b16 %v852
          %v3248 = vunpack.c.h.b16 %v852
          %v3249 = vunpack.c.l.b16 %v853
          %v3250 = vunpack.c.h.b16 %v853
          %v3251 = vunpack.c.l.b16 %v854
          %v3252 = vunpack.c.l.b16 %v855
          %v3253 = vunpack.c.h.b16 %v855
          %v3254 = vunpack.c.l.b16 %v856
          %v3255 = vunpack.c.h.b16 %v856
          %v3256 = vunpack.c.l.b16 %v857
          %v3257 = vunpack.c.l.b16 %v858
          %v3258 = vunpack.c.h.b16 %v858
          %v3259 = vunpack.c.l.b16 %v859
          %v3260 = vunpack.c.h.b16 %v859
          %v3261 = vunpack.c.l.b16 %v860
          %v3262 = vunpack.c.l.b16 %v861
          %v3263 = vunpack.c.h.b16 %v861
          %v3264 = vunpack.c.l.b16 %v862
          %v3265 = vunpack.c.h.b16 %v862
          %v3266 = vunpack.c.l.b16 %v863
          %v3267 = vunpack.c.l.b16 %v864
          %v3268 = vunpack.c.h.b16 %v864
          %v3269 = vunpack.c.l.b16 %v865
          %v3270 = vunpack.c.h.b16 %v865
          %v3271 = vunpack.c.l.b16 %v866
          %v3272 = vunpack.c.l.b16 %v867
          %v3273 = vunpack.c.h.b16 %v867
          %v3274 = vunpack.c.l.b16 %v868
          %v3275 = vunpack.c.h.b16 %v868
          %v3276 = vunpack.c.l.b16 %v869
          %v3277 = vunpack.c.l.b16 %v870
          %v3278 = vunpack.c.h.b16 %v870
          %v3279 = vunpack.c.l.b16 %v871
          %v3280 = vunpack.c.h.b16 %v871
          %v3281 = vunpack.c.l.b16 %v872
          %v3282 = vunpack.c.l.b16 %v873
          %v3283 = vunpack.c.h.b16 %v873
          %v3284 = vunpack.c.l.b16 %v874
          %v3285 = vunpack.c.h.b16 %v874
          %v3286 = vunpack.c.l.b16 %v875
          %v3287 = vunpack.c.l.b16 %v876
          %v3288 = vunpack.c.h.b16 %v876
          %v3289 = vunpack.c.l.b16 %v877
          %v3290 = vunpack.c.h.b16 %v877
          %v3291 = vunpack.c.l.b16 %v878
          %v3292 = vunpack.c.l.b16 %v879
          %v3293 = vunpack.c.h.b16 %v879
          %v3294 = vunpack.c.l.b16 %v880
          %v3295 = vunpack.c.h.b16 %v880
          %v3296 = vunpack.c.l.b16 %v881
          %v3297 = vunpack.c.l.b16 %v882
          %v3298 = vunpack.c.h.b16 %v882
          %v3299 = vunpack.c.l.b16 %v883
          %v3300 = vunpack.c.h.b16 %v883
          %v3301 = vunpack.c.l.b16 %v884
          %v3302 = vunpack.c.l.b16 %v885
          %v3303 = vunpack.c.h.b16 %v885
          %v3304 = vunpack.c.l.b16 %v886
          %v3305 = vunpack.c.h.b16 %v886
          %v3306 = vunpack.c.l.b16 %v887
          %v3307 = vunpack.c.l.b16 %v888
          %v3308 = vunpack.c.h.b16 %v888
          %v3309 = vunpack.c.l.b16 %v889
          %v3310 = vunpack.c.h.b16 %v889
          %v3311 = vunpack.c.l.b16 %v890
          %v3312 = vunpack.c.l.b16 %v891
          %v3313 = vunpack.c.h.b16 %v891
          %v3314 = vunpack.c.l.b16 %v892
          %v3315 = vunpack.c.h.b16 %v892
          %v3316 = vunpack.c.l.b16 %v893
          %v3317 = vunpack.c.l.b16 %v894
          %v3318 = vunpack.c.h.b16 %v894
          %v3319 = vunpack.c.l.b16 %v895
          %v3320 = vunpack.c.h.b16 %v895
          %v3321 = vunpack.c.l.b16 %v896
          %v3322 = vunpack.c.l.b16 %v897
          %v3323 = vunpack.c.h.b16 %v897
          %v3324 = vunpack.c.l.b16 %v898
          %v3325 = vunpack.c.h.b16 %v898
          %v3326 = vunpack.c.l.b16 %v899
          %v3327 = vunpack.c.l.b16 %v900
          %v3328 = vunpack.c.h.b16 %v900
          %v3329 = vunpack.c.l.b16 %v901
          %v3330 = vunpack.c.h.b16 %v901
          %v3331 = vunpack.c.l.b16 %v902
          %v3332 = vunpack.c.l.b16 %v903
          %v3333 = vunpack.c.h.b16 %v903
          %v3334 = vunpack.c.l.b16 %v904
          %v3335 = vunpack.c.h.b16 %v904
          %v3336 = vunpack.c.l.b16 %v905
          %v3337 = vunpack.c.l.b16 %v906
          %v3338 = vunpack.c.h.b16 %v906
          %v3339 = vunpack.c.l.b16 %v907
          %v3340 = vunpack.c.h.b16 %v907
          %v3341 = vunpack.c.l.b16 %v908
          %v3342 = vunpack.c.l.b16 %v909
          %v3343 = vunpack.c.h.b16 %v909
          %v3344 = vunpack.c.l.b16 %v910
          %v3345 = vunpack.c.h.b16 %v910
          %v3346 = vunpack.c.l.b16 %v911
          %v3347 = vunpack.c.l.b16 %v912
          %v3348 = vunpack.c.h.b16 %v912
          %v3349 = vunpack.c.l.b16 %v913
          %v3350 = vunpack.c.h.b16 %v913
          %v3351 = vunpack.c.l.b16 %v914
          %v3352 = vunpack.c.l.b16 %v915
          %v3353 = vunpack.c.h.b16 %v915
          %v3354 = vunpack.c.l.b16 %v916
          %v3355 = vunpack.c.h.b16 %v916
          %v3356 = vunpack.c.l.b16 %v917
          %v3357 = vunpack.c.l.b16 %v918
          %v3358 = vunpack.c.h.b16 %v918
          %v3359 = vunpack.c.l.b16 %v919
          %v3360 = vunpack.c.h.b16 %v919
          %v3361 = vunpack.c.l.b16 %v920
          %v3362 = vunpack.c.l.b16 %v921
          %v3363 = vunpack.c.h.b16 %v921
          %v3364 = vunpack.c.l.b16 %v922
          %v3365 = vunpack.c.h.b16 %v922
          %v3366 = vunpack.c.l.b16 %v923
          %v3367 = vunpack.c.l.b16 %v924
          %v3368 = vunpack.c.h.b16 %v924
          %v3369 = vunpack.c.l.b16 %v925
          %v3370 = vunpack.c.h.b16 %v925
          %v3371 = vunpack.c.l.b16 %v926
          %v3372 = vunpack.c.l.b16 %v927
          %v3373 = vunpack.c.h.b16 %v927
          %v3374 = vunpack.c.l.b16 %v928
          %v3375 = vunpack.c.h.b16 %v928
          %v3376 = vunpack.c.l.b16 %v929
          %v3377 = vunpack.c.l.b16 %v930
          %v3378 = vunpack.c.h.b16 %v930
          %v3379 = vunpack.c.l.b16 %v931
          %v3380 = vunpack.c.h.b16 %v931
          %v3381 = vunpack.c.l.b16 %v932
          %v3382 = vunpack.c.l.b16 %v933
          %v3383 = vunpack.c.h.b16 %v933
          %v3384 = vunpack.c.l.b16 %v934
          %v3385 = vunpack.c.h.b16 %v934
          %v3386 = vunpack.c.l.b16 %v935
          %v3387 = vunpack.c.l.b16 %v936
          %v3388 = vunpack.c.h.b16 %v936
          %v3389 = vunpack.c.l.b16 %v937
          %v3390 = vunpack.c.h.b16 %v937
          %v3391 = vunpack.c.l.b16 %v938
          %v3392 = vunpack.c.l.b16 %v939
          %v3393 = vunpack.c.h.b16 %v939
          %v3394 = vunpack.c.l.b16 %v940
          %v3395 = vunpack.c.h.b16 %v940
          %v3396 = vunpack.c.l.b16 %v941
          %v3397 = vunpack.c.l.b16 %v942
          %v3398 = vunpack.c.h.b16 %v942
          %v3399 = vunpack.c.l.b16 %v943
          %v3400 = vunpack.c.h.b16 %v943
          %v3401 = vunpack.c.l.b16 %v944
          %v3402 = vunpack.c.l.b16 %v945
          %v3403 = vunpack.c.h.b16 %v945
          %v3404 = vunpack.c.l.b16 %v946
          %v3405 = vunpack.c.h.b16 %v946
          %v3406 = vunpack.c.l.b16 %v947
          %v3407 = vunpack.c.l.b16 %v948
          %v3408 = vunpack.c.h.b16 %v948
          %v3409 = vunpack.c.l.b16 %v949
          %v3410 = vunpack.c.h.b16 %v949
          %v3411 = vunpack.c.l.b16 %v950
          %v3412 = vunpack.c.l.b16 %v951
          %v3413 = vunpack.c.h.b16 %v951
          %v3414 = vunpack.c.l.b16 %v952
          %v3415 = vunpack.c.h.b16 %v952
          %v3416 = vunpack.c.l.b16 %v953
          %v3417 = vunpack.c.l.b16 %v954
          %v3418 = vunpack.c.h.b16 %v954
          %v3419 = vunpack.c.l.b16 %v955
          %v3420 = vunpack.c.h.b16 %v955
          %v3421 = vunpack.c.l.b16 %v956
          %v3422 = vunpack.c.l.b16 %v957
          %v3423 = vunpack.c.h.b16 %v957
          %v3424 = vunpack.c.l.b16 %v958
          %v3425 = vunpack.c.h.b16 %v958
          %v3426 = vunpack.c.l.b16 %v959
          %v3427 = vunpack.c.l.b16 %v960
          %v3428 = vunpack.c.h.b16 %v960
          %v3429 = vunpack.c.l.b16 %v961
          %v3430 = vunpack.c.h.b16 %v961
          %v3431 = vunpack.c.l.b16 %v962
          %v3432 = vunpack.c.l.b16 %v963
          %v3433 = vunpack.c.h.b16 %v963
          %v3434 = vunpack.c.l.b16 %v964
          %v3435 = vunpack.c.h.b16 %v964
          %v3436 = vunpack.c.l.b16 %v965
          %v3437 = vunpack.c.l.b16 %v966
          %v3438 = vunpack.c.h.b16 %v966
          %v3439 = vunpack.c.l.b16 %v967
          %v3440 = vunpack.c.h.b16 %v967
          %v3441 = vunpack.c.l.b16 %v968
          %v3442 = vunpack.c.l.b16 %v969
          %v3443 = vunpack.c.h.b16 %v969
          %v3444 = vunpack.c.l.b16 %v970
          %v3445 = vunpack.c.h.b16 %v970
          %v3446 = vunpack.c.l.b16 %v971
          %v3447 = vpack.c.b16 %v2972, %v2967
          %v3448 = vpack.c.b16 %v2973, %v2968
          %v3449 = vpack.c.b16 %v2974, %v2969
          %v3450 = vpack.c.b16 %v2975, %v2970
          %v3451 = vpack.c.b16 %v2976, %v2971
          %v3452 = vpack.c.b16 %v2982, %v2977
          %v3453 = vpack.c.b16 %v2983, %v2978
          %v3454 = vpack.c.b16 %v2984, %v2979
          %v3455 = vpack.c.b16 %v2985, %v2980
          %v3456 = vpack.c.b16 %v2986, %v2981
          %v3457 = vpack.c.b16 %v2992, %v2987
          %v3458 = vpack.c.b16 %v2993, %v2988
          %v3459 = vpack.c.b16 %v2994, %v2989
          %v3460 = vpack.c.b16 %v2995, %v2990
          %v3461 = vpack.c.b16 %v2996, %v2991
          %v3462 = vpack.c.b16 %v3002, %v2997
          %v3463 = vpack.c.b16 %v3003, %v2998
          %v3464 = vpack.c.b16 %v3004, %v2999
          %v3465 = vpack.c.b16 %v3005, %v3000
          %v3466 = vpack.c.b16 %v3006, %v3001
          %v3467 = vpack.c.b16 %v3012, %v3007
          %v3468 = vpack.c.b16 %v3013, %v3008
          %v3469 = vpack.c.b16 %v3014, %v3009
          %v3470 = vpack.c.b16 %v3015, %v3010
          %v3471 = vpack.c.b16 %v3016, %v3011
          %v3472 = vpack.c.b16 %v3022, %v3017
          %v3473 = vpack.c.b16 %v3023, %v3018
          %v3474 = vpack.c.b16 %v3024, %v3019
          %v3475 = vpack.c.b16 %v3025, %v3020
          %v3476 = vpack.c.b16 %v3026, %v3021
          %v3477 = vpack.c.b16 %v3032, %v3027
          %v3478 = vpack.c.b16 %v3033, %v3028
          %v3479 = vpack.c.b16 %v3034, %v3029
          %v3480 = vpack.c.b16 %v3035, %v3030
          %v3481 = vpack.c.b16 %v3036, %v3031
          %v3482 = vpack.c.b16 %v3042, %v3037
          %v3483 = vpack.c.b16 %v3043, %v3038
          %v3484 = vpack.c.b16 %v3044, %v3039
          %v3485 = vpack.c.b16 %v3045, %v3040
          %v3486 = vpack.c.b16 %v3046, %v3041
          %v3487 = vpack.c.b16 %v3052, %v3047
          %v3488 = vpack.c.b16 %v3053, %v3048
          %v3489 = vpack.c.b16 %v3054, %v3049
          %v3490 = vpack.c.b16 %v3055, %v3050
          %v3491 = vpack.c.b16 %v3056, %v3051
          %v3492 = vpack.c.b16 %v3062, %v3057
          %v3493 = vpack.c.b16 %v3063, %v3058
          %v3494 = vpack.c.b16 %v3064, %v3059
          %v3495 = vpack.c.b16 %v3065, %v3060
          %v3496 = vpack.c.b16 %v3066, %v3061
          %v3497 = vpack.c.b16 %v3072, %v3067
          %v3498 = vpack.c.b16 %v3073, %v3068
          %v3499 = vpack.c.b16 %v3074, %v3069
          %v3500 = vpack.c.b16 %v3075, %v3070
          %v3501 = vpack.c.b16 %v3076, %v3071
          %v3502 = vpack.c.b16 %v3082, %v3077
          %v3503 = vpack.c.b16 %v3083, %v3078
          %v3504 = vpack.c.b16 %v3084, %v3079
          %v3505 = vpack.c.b16 %v3085, %v3080
          %v3506 = vpack.c.b16 %v3086, %v3081
          %v3507 = vpack.c.b16 %v3092, %v3087
          %v3508 = vpack.c.b16 %v3093, %v3088
          %v3509 = vpack.c.b16 %v3094, %v3089
          %v3510 = vpack.c.b16 %v3095, %v3090
          %v3511 = vpack.c.b16 %v3096, %v3091
          %v3512 = vpack.c.b16 %v3102, %v3097
          %v3513 = vpack.c.b16 %v3103, %v3098
          %v3514 = vpack.c.b16 %v3104, %v3099
          %v3515 = vpack.c.b16 %v3105, %v3100
          %v3516 = vpack.c.b16 %v3106, %v3101
          %v3517 = vpack.c.b16 %v3112, %v3107
          %v3518 = vpack.c.b16 %v3113, %v3108
          %v3519 = vpack.c.b16 %v3114, %v3109
          %v3520 = vpack.c.b16 %v3115, %v3110
          %v3521 = vpack.c.b16 %v3116, %v3111
          %v3522 = vpack.c.b16 %v3122, %v3117
          %v3523 = vpack.c.b16 %v3123, %v3118
          %v3524 = vpack.c.b16 %v3124, %v3119
          %v3525 = vpack.c.b16 %v3125, %v3120
          %v3526 = vpack.c.b16 %v3126, %v3121
          %v3527 = vpack.c.b16 %v3132, %v3127
          %v3528 = vpack.c.b16 %v3133, %v3128
          %v3529 = vpack.c.b16 %v3134, %v3129
          %v3530 = vpack.c.b16 %v3135, %v3130
          %v3531 = vpack.c.b16 %v3136, %v3131
          %v3532 = vpack.c.b16 %v3142, %v3137
          %v3533 = vpack.c.b16 %v3143, %v3138
          %v3534 = vpack.c.b16 %v3144, %v3139
          %v3535 = vpack.c.b16 %v3145, %v3140
          %v3536 = vpack.c.b16 %v3146, %v3141
          %v3537 = vpack.c.b16 %v3152, %v3147
          %v3538 = vpack.c.b16 %v3153, %v3148
          %v3539 = vpack.c.b16 %v3154, %v3149
          %v3540 = vpack.c.b16 %v3155, %v3150
          %v3541 = vpack.c.b16 %v3156, %v3151
          %v3542 = vpack.c.b16 %v3162, %v3157
          %v3543 = vpack.c.b16 %v3163, %v3158
          %v3544 = vpack.c.b16 %v3164, %v3159
          %v3545 = vpack.c.b16 %v3165, %v3160
          %v3546 = vpack.c.b16 %v3166, %v3161
          %v3547 = vpack.c.b16 %v3172, %v3167
          %v3548 = vpack.c.b16 %v3173, %v3168
          %v3549 = vpack.c.b16 %v3174, %v3169
          %v3550 = vpack.c.b16 %v3175, %v3170
          %v3551 = vpack.c.b16 %v3176, %v3171
          %v3552 = vpack.c.b16 %v3182, %v3177
          %v3553 = vpack.c.b16 %v3183, %v3178
          %v3554 = vpack.c.b16 %v3184, %v3179
          %v3555 = vpack.c.b16 %v3185, %v3180
          %v3556 = vpack.c.b16 %v3186, %v3181
          %v3557 = vpack.c.b16 %v3192, %v3187
          %v3558 = vpack.c.b16 %v3193, %v3188
          %v3559 = vpack.c.b16 %v3194, %v3189
          %v3560 = vpack.c.b16 %v3195, %v3190
          %v3561 = vpack.c.b16 %v3196, %v3191
          %v3562 = vpack.c.b16 %v3202, %v3197
          %v3563 = vpack.c.b16 %v3203, %v3198
          %v3564 = vpack.c.b16 %v3204, %v3199
          %v3565 = vpack.c.b16 %v3205, %v3200
          %v3566 = vpack.c.b16 %v3206, %v3201
          %v3567 = vpack.c.b16 %v3212, %v3207
          %v3568 = vpack.c.b16 %v3213, %v3208
          %v3569 = vpack.c.b16 %v3214, %v3209
          %v3570 = vpack.c.b16 %v3215, %v3210
          %v3571 = vpack.c.b16 %v3216, %v3211
          %v3572 = vpack.c.b16 %v3222, %v3217
          %v3573 = vpack.c.b16 %v3223, %v3218
          %v3574 = vpack.c.b16 %v3224, %v3219
          %v3575 = vpack.c.b16 %v3225, %v3220
          %v3576 = vpack.c.b16 %v3226, %v3221
          %v3577 = vpack.c.b16 %v3232, %v3227
          %v3578 = vpack.c.b16 %v3233, %v3228
          %v3579 = vpack.c.b16 %v3234, %v3229
          %v3580 = vpack.c.b16 %v3235, %v3230
          %v3581 = vpack.c.b16 %v3236, %v3231
          %v3582 = vpack.c.b16 %v3242, %v3237
          %v3583 = vpack.c.b16 %v3243, %v3238
          %v3584 = vpack.c.b16 %v3244, %v3239
          %v3585 = vpack.c.b16 %v3245, %v3240
          %v3586 = vpack.c.b16 %v3246, %v3241
          %v3587 = vpack.c.b16 %v3252, %v3247
          %v3588 = vpack.c.b16 %v3253, %v3248
          %v3589 = vpack.c.b16 %v3254, %v3249
          %v3590 = vpack.c.b16 %v3255, %v3250
          %v3591 = vpack.c.b16 %v3256, %v3251
          %v3592 = vpack.c.b16 %v3262, %v3257
          %v3593 = vpack.c.b16 %v3263, %v3258
          %v3594 = vpack.c.b16 %v3264, %v3259
          %v3595 = vpack.c.b16 %v3265, %v3260
          %v3596 = vpack.c.b16 %v3266, %v3261
          %v3597 = vpack.c.b16 %v3272, %v3267
          %v3598 = vpack.c.b16 %v3273, %v3268
          %v3599 = vpack.c.b16 %v3274, %v3269
          %v3600 = vpack.c.b16 %v3275, %v3270
          %v3601 = vpack.c.b16 %v3276, %v3271
          %v3602 = vpack.c.b16 %v3282, %v3277
          %v3603 = vpack.c.b16 %v3283, %v3278
          %v3604 = vpack.c.b16 %v3284, %v3279
          %v3605 = vpack.c.b16 %v3285, %v3280
          %v3606 = vpack.c.b16 %v3286, %v3281
          %v3607 = vpack.c.b16 %v3292, %v3287
          %v3608 = vpack.c.b16 %v3293, %v3288
          %v3609 = vpack.c.b16 %v3294, %v3289
          %v3610 = vpack.c.b16 %v3295, %v3290
          %v3611 = vpack.c.b16 %v3296, %v3291
          %v3612 = vpack.c.b16 %v3302, %v3297
          %v3613 = vpack.c.b16 %v3303, %v3298
          %v3614 = vpack.c.b16 %v3304, %v3299
          %v3615 = vpack.c.b16 %v3305, %v3300
          %v3616 = vpack.c.b16 %v3306, %v3301
          %v3617 = vpack.c.b16 %v3312, %v3307
          %v3618 = vpack.c.b16 %v3313, %v3308
          %v3619 = vpack.c.b16 %v3314, %v3309
          %v3620 = vpack.c.b16 %v3315, %v3310
          %v3621 = vpack.c.b16 %v3316, %v3311
          %v3622 = vpack.c.b16 %v3322, %v3317
          %v3623 = vpack.c.b16 %v3323, %v3318
          %v3624 = vpack.c.b16 %v3324, %v3319
          %v3625 = vpack.c.b16 %v3325, %v3320
          %v3626 = vpack.c.b16 %v3326, %v3321
          %v3627 = vpack.c.b16 %v3332, %v3327
          %v3628 = vpack.c.b16 %v3333, %v3328
          %v3629 = vpack.c.b16 %v3334, %v3329
          %v3630 = vpack.c.b16 %v3335, %v3330
          %v3631 = vpack.c.b16 %v3336, %v3331
          %v3632 = vpack.c.b16 %v3342, %v3337
          %v3633 = vpack.c.b16 %v3343, %v3338
          %v3634 = vpack.c.b16 %v3344, %v3339
          %v3635 = vpack.c.b16 %v3345, %v3340
          %v3636 = vpack.c.b16 %v3346, %v3341
          %v3637 = vpack.c.b16 %v3352, %v3347
          %v3638 = vpack.c.b16 %v3353, %v3348
          %v3639 = vpack.c.b16 %v3354, %v3349
          %v3640 = vpack.c.b16 %v3355, %v3350
          %v3641 = vpack.c.b16 %v3356, %v3351
          %v3642 = vpack.c.b16 %v3362, %v3357
          %v3643 = vpack.c.b16 %v3363, %v3358
          %v3644 = vpack.c.b16 %v3364, %v3359
          %v3645 = vpack.c.b16 %v3365, %v3360
          %v3646 = vpack.c.b16 %v3366, %v3361
          %v3647 = vpack.c.b16 %v3372, %v3367
          %v3648 = vpack.c.b16 %v3373, %v3368
          %v3649 = vpack.c.b16 %v3374, %v3369
          %v3650 = vpack.c.b16 %v3375, %v3370
          %v3651 = vpack.c.b16 %v3376, %v3371
          %v3652 = vpack.c.b16 %v3382, %v3377
          %v3653 = vpack.c.b16 %v3383, %v3378
          %v3654 = vpack.c.b16 %v3384, %v3379
          %v3655 = vpack.c.b16 %v3385, %v3380
          %v3656 = vpack.c.b16 %v3386, %v3381
          %v3657 = vpack.c.b16 %v3392, %v3387
          %v3658 = vpack.c.b16 %v3393, %v3388
          %v3659 = vpack.c.b16 %v3394, %v3389
          %v3660 = vpack.c.b16 %v3395, %v3390
          %v3661 = vpack.c.b16 %v3396, %v3391
          %v3662 = vpack.c.b16 %v3402, %v3397
          %v3663 = vpack.c.b16 %v3403, %v3398
          %v3664 = vpack.c.b16 %v3404, %v3399
          %v3665 = vpack.c.b16 %v3405, %v3400
          %v3666 = vpack.c.b16 %v3406, %v3401
          %v3667 = vpack.c.b16 %v3412, %v3407
          %v3668 = vpack.c.b16 %v3413, %v3408
          %v3669 = vpack.c.b16 %v3414, %v3409
          %v3670 = vpack.c.b16 %v3415, %v3410
          %v3671 = vpack.c.b16 %v3416, %v3411
          %v3672 = vpack.c.b16 %v3422, %v3417
          %v3673 = vpack.c.b16 %v3423, %v3418
          %v3674 = vpack.c.b16 %v3424, %v3419
          %v3675 = vpack.c.b16 %v3425, %v3420
          %v3676 = vpack.c.b16 %v3426, %v3421
          %v3677 = vpack.c.b16 %v3432, %v3427
          %v3678 = vpack.c.b16 %v3433, %v3428
          %v3679 = vpack.c.b16 %v3434, %v3429
          %v3680 = vpack.c.b16 %v3435, %v3430
          %v3681 = vpack.c.b16 %v3436, %v3431
          %v3682 = vpack.c.b16 %v3442, %v3437
          %v3683 = vpack.c.b16 %v3443, %v3438
          %v3684 = vpack.c.b16 %v3444, %v3439
          %v3685 = vpack.c.b16 %v3445, %v3440
          %v3686 = vpack.c.b16 %v3446, %v3441
          %3927 = vmatprep.subr.bf16.mxu0 %v3448
          %3928 = vmatpush1.bf16.msra.mxu0 %v3447
          %3929 = vmatprep.subr.bf16.mxu0 %v3453
          %3930 = vmatpush1.bf16.msra.mxu0 %v3452
          %3931 = vmatprep.subr.bf16.mxu0 %v3458
          %3932 = vmatpush1.bf16.msra.mxu0 %v3457
          %3933 = vmatprep.subr.bf16.mxu0 %v3463
          %3934 = vmatpush1.bf16.msra.mxu0 %v3462
          %3935 = vmatprep.subr.bf16.mxu0 %v3468
          %3936 = vmatpush1.bf16.msra.mxu0 %v3467
          %3937 = vmatprep.subr.bf16.mxu0 %v3473
          %3938 = vmatpush1.bf16.msra.mxu0 %v3472
          %3939 = vmatprep.subr.bf16.mxu0 %v3478
          %3940 = vmatpush1.bf16.msra.mxu0 %v3477
          %3941 = vmatprep.subr.bf16.mxu0 %v3483
          %3942 = vmatpush1.bf16.msra.mxu0 %v3482
          %3943 = vmatprep.subr.bf16.mxu0 %v3488
          %3944 = vmatpush1.bf16.msra.mxu0 %v3487
          %3945 = vmatprep.subr.bf16.mxu0 %v3493
          %3946 = vmatpush1.bf16.msra.mxu0 %v3492
          %3947 = vmatprep.subr.bf16.mxu0 %v3498
          %3948 = vmatpush1.bf16.msra.mxu0 %v3497
          %3949 = vmatprep.subr.bf16.mxu0 %v3503
          %3950 = vmatpush1.bf16.msra.mxu0 %v3502
          %3951 = vmatprep.subr.bf16.mxu0 %v3508
          %3952 = vmatpush1.bf16.msra.mxu0 %v3507
          %3953 = vmatprep.subr.bf16.mxu0 %v3513
          %3954 = vmatpush1.bf16.msra.mxu0 %v3512
          %3955 = vmatprep.subr.bf16.mxu0 %v3518
          %3956 = vmatpush1.bf16.msra.mxu0 %v3517
          %3957 = vmatprep.subr.bf16.mxu0 %v3523
          %3958 = vmatpush1.bf16.msra.mxu0 %v3522
          %3959 = vmatprep.mubr.bf16.mxu0 %v679
          %3960 = vmatmul.mubr.bf16.gmra.mrb[0].mxu0 %v678
          %v3961 = vpop.f32.mrb[0].mxu0
          %v3962 = vadd.f32 0.0, %v3961
          %v3963 = vpop.f32.mrb[0].mxu0
          %v3964 = vadd.f32 0.0, %v3963
          %v3965 = vpop.f32.mrb[0].mxu0
          %v3966 = vpop.f32.mrb[0].mxu0
          %3967 = vdwg.mxu0
          %3968 = vmatprep.subr.bf16.mxu0 %v3528
          %3969 = vmatpush1.bf16.msra.mxu0 %v3527
          %3970 = vmatprep.subr.bf16.mxu0 %v3533
          %3971 = vmatpush1.bf16.msra.mxu0 %v3532
          %3972 = vmatprep.subr.bf16.mxu0 %v3538
          %3973 = vmatpush1.bf16.msra.mxu0 %v3537
          %3974 = vmatprep.subr.bf16.mxu0 %v3543
          %3975 = vmatpush1.bf16.msra.mxu0 %v3542
          %3976 = vmatprep.subr.bf16.mxu0 %v3548
          %3977 = vmatpush1.bf16.msra.mxu0 %v3547
          %3978 = vmatprep.subr.bf16.mxu0 %v3553
          %3979 = vmatpush1.bf16.msra.mxu0 %v3552
          %3980 = vmatprep.subr.bf16.mxu0 %v3558
          %3981 = vmatpush1.bf16.msra.mxu0 %v3557
          %3982 = vmatprep.subr.bf16.mxu0 %v3563
          %3983 = vmatpush1.bf16.msra.mxu0 %v3562
          %3984 = vmatprep.subr.bf16.mxu0 %v3568
          %3985 = vmatpush1.bf16.msra.mxu0 %v3567
          %3986 = vmatprep.subr.bf16.mxu0 %v3573
          %3987 = vmatpush1.bf16.msra.mxu0 %v3572
          %3988 = vmatprep.subr.bf16.mxu0 %v3578
          %3989 = vmatpush1.bf16.msra.mxu0 %v3577
          %3990 = vmatprep.subr.bf16.mxu0 %v3583
          %3991 = vmatpush1.bf16.msra.mxu0 %v3582
          %3992 = vmatprep.subr.bf16.mxu0 %v3588
          %3993 = vmatpush1.bf16.msra.mxu0 %v3587
          %3994 = vmatprep.subr.bf16.mxu0 %v3593
          %3995 = vmatpush1.bf16.msra.mxu0 %v3592
          %3996 = vmatprep.subr.bf16.mxu0 %v3598
          %3997 = vmatpush1.bf16.msra.mxu0 %v3597
          %3998 = vmatprep.subr.bf16.mxu0 %v3603
          %3999 = vmatpush1.bf16.msra.mxu0 %v3602
          %4000 = vmatprep.mubr.bf16.mxu0 %v681
          %4001 = vmatmul.mubr.bf16.gmra.mrb[0].mxu0 %v680
          %v4002 = vpop.f32.mrb[0].mxu0
          %v4003 = vadd.f32 %v3962, %v4002
          %v4004 = vpop.f32.mrb[0].mxu0
          %v4005 = vadd.f32 %v3964, %v4004
          %v4006 = vpop.f32.mrb[0].mxu0
          %v4007 = vpop.f32.mrb[0].mxu0
          %4008 = vdwg.mxu0
          %4009 = vmatprep.subr.bf16.mxu0 %v3608
          %4010 = vmatpush1.bf16.msra.mxu0 %v3607
          %4011 = vmatprep.subr.bf16.mxu0 %v3613
          %4012 = vmatpush1.bf16.msra.mxu0 %v3612
          %4013 = vmatprep.subr.bf16.mxu0 %v3618
          %4014 = vmatpush1.bf16.msra.mxu0 %v3617
          %4015 = vmatprep.subr.bf16.mxu0 %v3623
          %4016 = vmatpush1.bf16.msra.mxu0 %v3622
          %4017 = vmatprep.subr.bf16.mxu0 %v3628
          %4018 = vmatpush1.bf16.msra.mxu0 %v3627
          %4019 = vmatprep.subr.bf16.mxu0 %v3633
          %4020 = vmatpush1.bf16.msra.mxu0 %v3632
          %4021 = vmatprep.subr.bf16.mxu0 %v3638
          %4022 = vmatpush1.bf16.msra.mxu0 %v3637
          %4023 = vmatprep.subr.bf16.mxu0 %v3643
          %4024 = vmatpush1.bf16.msra.mxu0 %v3642
          %4025 = vmatprep.subr.bf16.mxu0 %v3648
          %4026 = vmatpush1.bf16.msra.mxu0 %v3647
          %4027 = vmatprep.subr.bf16.mxu0 %v3653
          %4028 = vmatpush1.bf16.msra.mxu0 %v3652
          %4029 = vmatprep.subr.bf16.mxu0 %v3658
          %4030 = vmatpush1.bf16.msra.mxu0 %v3657
          %4031 = vmatprep.subr.bf16.mxu0 %v3663
          %4032 = vmatpush1.bf16.msra.mxu0 %v3662
          %4033 = vmatprep.subr.bf16.mxu0 %v3668
          %4034 = vmatpush1.bf16.msra.mxu0 %v3667
          %4035 = vmatprep.subr.bf16.mxu0 %v3673
          %4036 = vmatpush1.bf16.msra.mxu0 %v3672
          %4037 = vmatprep.subr.bf16.mxu0 %v3678
          %4038 = vmatpush1.bf16.msra.mxu0 %v3677
          %4039 = vmatprep.subr.bf16.mxu0 %v3683
          %4040 = vmatpush1.bf16.msra.mxu0 %v3682
          %4041 = vmatprep.mubr.bf16.mxu0 %v683
          %4042 = vmatmul.mubr.bf16.gmra.mrb[0].mxu0 %v682
          %v4043 = vpop.f32.mrb[0].mxu0
          %v4044 = vadd.f32 %v4003, %v4043
          %v4045 = vpop.f32.mrb[0].mxu0
          %v4046 = vadd.f32 %v4005, %v4045
          %v4047 = vpop.f32.mrb[0].mxu0
          %v4048 = vpop.f32.mrb[0].mxu0
          %4049 = vdwg.mxu0
          %4050 = vmatprep.subr.bf16.mxu0 %v3450
          %4051 = vmatpush1.bf16.msra.mxu0 %v3449
          %4052 = vmatprep.subr.bf16.mxu0 %v3455
          %4053 = vmatpush1.bf16.msra.mxu0 %v3454
          %4054 = vmatprep.subr.bf16.mxu0 %v3460
          %4055 = vmatpush1.bf16.msra.mxu0 %v3459
          %4056 = vmatprep.subr.bf16.mxu0 %v3465
          %4057 = vmatpush1.bf16.msra.mxu0 %v3464
          %4058 = vmatprep.subr.bf16.mxu0 %v3470
          %4059 = vmatpush1.bf16.msra.mxu0 %v3469
          %4060 = vmatprep.subr.bf16.mxu0 %v3475
          %4061 = vmatpush1.bf16.msra.mxu0 %v3474
          %4062 = vmatprep.subr.bf16.mxu0 %v3480
          %4063 = vmatpush1.bf16.msra.mxu0 %v3479
          %4064 = vmatprep.subr.bf16.mxu0 %v3485
          %4065 = vmatpush1.bf16.msra.mxu0 %v3484
          %4066 = vmatprep.subr.bf16.mxu0 %v3490
          %4067 = vmatpush1.bf16.msra.mxu0 %v3489
          %4068 = vmatprep.subr.bf16.mxu0 %v3495
          %4069 = vmatpush1.bf16.msra.mxu0 %v3494
          %4070 = vmatprep.subr.bf16.mxu0 %v3500
          %4071 = vmatpush1.bf16.msra.mxu0 %v3499
          %4072 = vmatprep.subr.bf16.mxu0 %v3505
          %4073 = vmatpush1.bf16.msra.mxu0 %v3504
          %4074 = vmatprep.subr.bf16.mxu0 %v3510
          %4075 = vmatpush1.bf16.msra.mxu0 %v3509
          %4076 = vmatprep.subr.bf16.mxu0 %v3515
          %4077 = vmatpush1.bf16.msra.mxu0 %v3514
          %4078 = vmatprep.subr.bf16.mxu0 %v3520
          %4079 = vmatpush1.bf16.msra.mxu0 %v3519
          %4080 = vmatprep.subr.bf16.mxu0 %v3525
          %4081 = vmatpush1.bf16.msra.mxu0 %v3524
          %4082 = vmatprep.mubr.bf16.mxu0 %v679
          %4083 = vmatmul.mubr.bf16.gmra.mrb[0].mxu0 %v678
          %v4084 = vpop.f32.mrb[0].mxu0
          %v4085 = vadd.f32 0.0, %v4084
          %v4086 = vpop.f32.mrb[0].mxu0
          %v4087 = vadd.f32 0.0, %v4086
          %v4088 = vpop.f32.mrb[0].mxu0
          %v4089 = vpop.f32.mrb[0].mxu0
          %4090 = vdwg.mxu0
          %4091 = vmatprep.subr.bf16.mxu0 %v3530
          %4092 = vmatpush1.bf16.msra.mxu0 %v3529
          %4093 = vmatprep.subr.bf16.mxu0 %v3535
          %4094 = vmatpush1.bf16.msra.mxu0 %v3534
          %4095 = vmatprep.subr.bf16.mxu0 %v3540
          %4096 = vmatpush1.bf16.msra.mxu0 %v3539
          %4097 = vmatprep.subr.bf16.mxu0 %v3545
          %4098 = vmatpush1.bf16.msra.mxu0 %v3544
          %4099 = vmatprep.subr.bf16.mxu0 %v3550
          %4100 = vmatpush1.bf16.msra.mxu0 %v3549
          %4101 = vmatprep.subr.bf16.mxu0 %v3555
          %4102 = vmatpush1.bf16.msra.mxu0 %v3554
          %4103 = vmatprep.subr.bf16.mxu0 %v3560
          %4104 = vmatpush1.bf16.msra.mxu0 %v3559
          %4105 = vmatprep.subr.bf16.mxu0 %v3565
          %4106 = vmatpush1.bf16.msra.mxu0 %v3564
          %4107 = vmatprep.subr.bf16.mxu0 %v3570
          %4108 = vmatpush1.bf16.msra.mxu0 %v3569
          %4109 = vmatprep.subr.bf16.mxu0 %v3575
          %4110 = vmatpush1.bf16.msra.mxu0 %v3574
          %4111 = vmatprep.subr.bf16.mxu0 %v3580
          %4112 = vmatpush1.bf16.msra.mxu0 %v3579
          %4113 = vmatprep.subr.bf16.mxu0 %v3585
          %4114 = vmatpush1.bf16.msra.mxu0 %v3584
          %4115 = vmatprep.subr.bf16.mxu0 %v3590
          %4116 = vmatpush1.bf16.msra.mxu0 %v3589
          %4117 = vmatprep.subr.bf16.mxu0 %v3595
          %4118 = vmatpush1.bf16.msra.mxu0 %v3594
          %4119 = vmatprep.subr.bf16.mxu0 %v3600
          %4120 = vmatpush1.bf16.msra.mxu0 %v3599
          %4121 = vmatprep.subr.bf16.mxu0 %v3605
          %4122 = vmatpush1.bf16.msra.mxu0 %v3604
          %4123 = vmatprep.mubr.bf16.mxu0 %v681
          %4124 = vmatmul.mubr.bf16.gmra.mrb[0].mxu0 %v680
          %v4125 = vpop.f32.mrb[0].mxu0
          %v4126 = vadd.f32 %v4085, %v4125
          %v4127 = vpop.f32.mrb[0].mxu0
          %v4128 = vadd.f32 %v4087, %v4127
          %v4129 = vpop.f32.mrb[0].mxu0
          %v4130 = vpop.f32.mrb[0].mxu0
          %4131 = vdwg.mxu0
          %4132 = vmatprep.subr.bf16.mxu0 %v3610
          %4133 = vmatpush1.bf16.msra.mxu0 %v3609
          %4134 = vmatprep.subr.bf16.mxu0 %v3615
          %4135 = vmatpush1.bf16.msra.mxu0 %v3614
          %4136 = vmatprep.subr.bf16.mxu0 %v3620
          %4137 = vmatpush1.bf16.msra.mxu0 %v3619
          %4138 = vmatprep.subr.bf16.mxu0 %v3625
          %4139 = vmatpush1.bf16.msra.mxu0 %v3624
          %4140 = vmatprep.subr.bf16.mxu0 %v3630
          %4141 = vmatpush1.bf16.msra.mxu0 %v3629
          %4142 = vmatprep.subr.bf16.mxu0 %v3635
          %4143 = vmatpush1.bf16.msra.mxu0 %v3634
          %4144 = vmatprep.subr.bf16.mxu0 %v3640
          %4145 = vmatpush1.bf16.msra.mxu0 %v3639
          %4146 = vmatprep.subr.bf16.mxu0 %v3645
          %4147 = vmatpush1.bf16.msra.mxu0 %v3644
          %4148 = vmatprep.subr.bf16.mxu0 %v3650
          %4149 = vmatpush1.bf16.msra.mxu0 %v3649
          %4150 = vmatprep.subr.bf16.mxu0 %v3655
          %4151 = vmatpush1.bf16.msra.mxu0 %v3654
          %4152 = vmatprep.subr.bf16.mxu0 %v3660
          %4153 = vmatpush1.bf16.msra.mxu0 %v3659
          %4154 = vmatprep.subr.bf16.mxu0 %v3665
          %4155 = vmatpush1.bf16.msra.mxu0 %v3664
          %4156 = vmatprep.subr.bf16.mxu0 %v3670
          %4157 = vmatpush1.bf16.msra.mxu0 %v3669
          %4158 = vmatprep.subr.bf16.mxu0 %v3675
          %4159 = vmatpush1.bf16.msra.mxu0 %v3674
          %4160 = vmatprep.subr.bf16.mxu0 %v3680
          %4161 = vmatpush1.bf16.msra.mxu0 %v3679
          %4162 = vmatprep.subr.bf16.mxu0 %v3685
          %4163 = vmatpush1.bf16.msra.mxu0 %v3684
          %4164 = vmatprep.mubr.bf16.mxu0 %v683
          %4165 = vmatmul.mubr.bf16.gmra.mrb[0].mxu0 %v682
          %v4166 = vpop.f32.mrb[0].mxu0
          %v4167 = vadd.f32 %v4126, %v4166
          %v4168 = vpop.f32.mrb[0].mxu0
          %v4169 = vadd.f32 %v4128, %v4168
          %v4170 = vpop.f32.mrb[0].mxu0
          %v4171 = vpop.f32.mrb[0].mxu0
          %4172 = vdwg.mxu0
          %4173 = vmatprep.subr.bf16.mxu0 0
          %4174 = vmatpush1.bf16.msra.mxu0 %v3451
          %4175 = vmatprep.subr.bf16.mxu0 0
          %4176 = vmatpush1.bf16.msra.mxu0 %v3456
          %4177 = vmatprep.subr.bf16.mxu0 0
          %4178 = vmatpush1.bf16.msra.mxu0 %v3461
          %4179 = vmatprep.subr.bf16.mxu0 0
          %4180 = vmatpush1.bf16.msra.mxu0 %v3466
          %4181 = vmatprep.subr.bf16.mxu0 0
          %4182 = vmatpush1.bf16.msra.mxu0 %v3471
          %4183 = vmatprep.subr.bf16.mxu0 0
          %4184 = vmatpush1.bf16.msra.mxu0 %v3476
          %4185 = vmatprep.subr.bf16.mxu0 0
          %4186 = vmatpush1.bf16.msra.mxu0 %v3481
          %4187 = vmatprep.subr.bf16.mxu0 0
          %4188 = vmatpush1.bf16.msra.mxu0 %v3486
          %4189 = vmatprep.subr.bf16.mxu0 0
          %4190 = vmatpush1.bf16.msra.mxu0 %v3491
          %4191 = vmatprep.subr.bf16.mxu0 0
          %4192 = vmatpush1.bf16.msra.mxu0 %v3496
          %4193 = vmatprep.subr.bf16.mxu0 0
          %4194 = vmatpush1.bf16.msra.mxu0 %v3501
          %4195 = vmatprep.subr.bf16.mxu0 0
          %4196 = vmatpush1.bf16.msra.mxu0 %v3506
          %4197 = vmatprep.subr.bf16.mxu0 0
          %4198 = vmatpush1.bf16.msra.mxu0 %v3511
          %4199 = vmatprep.subr.bf16.mxu0 0
          %4200 = vmatpush1.bf16.msra.mxu0 %v3516
          %4201 = vmatprep.subr.bf16.mxu0 0
          %4202 = vmatpush1.bf16.msra.mxu0 %v3521
          %4203 = vmatprep.subr.bf16.mxu0 0
          %4204 = vmatpush1.bf16.msra.mxu0 %v3526
          %4205 = vmatprep.mubr.bf16.mxu0 %v679
          %4206 = vmatmul.mubr.bf16.gmra.mrb[0].mxu0 %v678
          %v4207 = vpop.f32.mrb[0].mxu0
          %v4208 = vadd.f32 0.0, %v4207
          %v4209 = vpop.f32.mrb[0].mxu0
          %v4210 = vpop.f32.mrb[0].mxu0
          %v4211 = vpop.f32.mrb[0].mxu0
          %4212 = vdwg.mxu0
          %4213 = vmatprep.subr.bf16.mxu0 0
          %4214 = vmatpush1.bf16.msra.mxu0 %v3531
          %4215 = vmatprep.subr.bf16.mxu0 0
          %4216 = vmatpush1.bf16.msra.mxu0 %v3536
          %4217 = vmatprep.subr.bf16.mxu0 0
          %4218 = vmatpush1.bf16.msra.mxu0 %v3541
          %4219 = vmatprep.subr.bf16.mxu0 0
          %4220 = vmatpush1.bf16.msra.mxu0 %v3546
          %4221 = vmatprep.subr.bf16.mxu0 0
          %4222 = vmatpush1.bf16.msra.mxu0 %v3551
          %4223 = vmatprep.subr.bf16.mxu0 0
          %4224 = vmatpush1.bf16.msra.mxu0 %v3556
          %4225 = vmatprep.subr.bf16.mxu0 0
          %4226 = vmatpush1.bf16.msra.mxu0 %v3561
          %4227 = vmatprep.subr.bf16.mxu0 0
          %4228 = vmatpush1.bf16.msra.mxu0 %v3566
          %4229 = vmatprep.subr.bf16.mxu0 0
          %4230 = vmatpush1.bf16.msra.mxu0 %v3571
          %4231 = vmatprep.subr.bf16.mxu0 0
          %4232 = vmatpush1.bf16.msra.mxu0 %v3576
          %4233 = vmatprep.subr.bf16.mxu0 0
          %4234 = vmatpush1.bf16.msra.mxu0 %v3581
          %4235 = vmatprep.subr.bf16.mxu0 0
          %4236 = vmatpush1.bf16.msra.mxu0 %v3586
          %4237 = vmatprep.subr.bf16.mxu0 0
          %4238 = vmatpush1.bf16.msra.mxu0 %v3591
          %4239 = vmatprep.subr.bf16.mxu0 0
          %4240 = vmatpush1.bf16.msra.mxu0 %v3596
          %4241 = vmatprep.subr.bf16.mxu0 0
          %4242 = vmatpush1.bf16.msra.mxu0 %v3601
          %4243 = vmatprep.subr.bf16.mxu0 0
          %4244 = vmatpush1.bf16.msra.mxu0 %v3606
          %4245 = vmatprep.mubr.bf16.mxu0 %v681
          %4246 = vmatmul.mubr.bf16.gmra.mrb[0].mxu0 %v680
          %v4247 = vpop.f32.mrb[0].mxu0
          %v4248 = vadd.f32 %v4208, %v4247
          %v4249 = vpop.f32.mrb[0].mxu0
          %v4250 = vpop.f32.mrb[0].mxu0
          %v4251 = vpop.f32.mrb[0].mxu0
          %4252 = vdwg.mxu0
          %4253 = vmatprep.subr.bf16.mxu0 0
          %4254 = vmatpush1.bf16.msra.mxu0 %v3611
          %4255 = vmatprep.subr.bf16.mxu0 0
          %4256 = vmatpush1.bf16.msra.mxu0 %v3616
          %4257 = vmatprep.subr.bf16.mxu0 0
          %4258 = vmatpush1.bf16.msra.mxu0 %v3621
          %4259 = vmatprep.subr.bf16.mxu0 0
          %4260 = vmatpush1.bf16.msra.mxu0 %v3626
          %4261 = vmatprep.subr.bf16.mxu0 0
          %4262 = vmatpush1.bf16.msra.mxu0 %v3631
          %4263 = vmatprep.subr.bf16.mxu0 0
          %4264 = vmatpush1.bf16.msra.mxu0 %v3636
          %4265 = vmatprep.subr.bf16.mxu0 0
          %4266 = vmatpush1.bf16.msra.mxu0 %v3641
          %4267 = vmatprep.subr.bf16.mxu0 0
          %4268 = vmatpush1.bf16.msra.mxu0 %v3646
          %4269 = vmatprep.subr.bf16.mxu0 0
          %4270 = vmatpush1.bf16.msra.mxu0 %v3651
          %4271 = vmatprep.subr.bf16.mxu0 0
          %4272 = vmatpush1.bf16.msra.mxu0 %v3656
          %4273 = vmatprep.subr.bf16.mxu0 0
          %4274 = vmatpush1.bf16.msra.mxu0 %v3661
          %4275 = vmatprep.subr.bf16.mxu0 0
          %4276 = vmatpush1.bf16.msra.mxu0 %v3666
          %4277 = vmatprep.subr.bf16.mxu0 0
          %4278 = vmatpush1.bf16.msra.mxu0 %v3671
          %4279 = vmatprep.subr.bf16.mxu0 0
          %4280 = vmatpush1.bf16.msra.mxu0 %v3676
          %4281 = vmatprep.subr.bf16.mxu0 0
          %4282 = vmatpush1.bf16.msra.mxu0 %v3681
          %4283 = vmatprep.subr.bf16.mxu0 0
          %4284 = vmatpush1.bf16.msra.mxu0 %v3686
          %4285 = vmatprep.mubr.bf16.mxu0 %v683
          %4286 = vmatmul.mubr.bf16.gmra.mrb[0].mxu0 %v682
          %v4287 = vpop.f32.mrb[0].mxu0
          %v4288 = vadd.f32 %v4248, %v4287
          %v4289 = vpop.f32.mrb[0].mxu0
          %v4290 = vpop.f32.mrb[0].mxu0
          %v4291 = vpop.f32.mrb[0].mxu0
          %4292 = vdwg.mxu0
          %v4298 = vcombine.low %v4044, %v4046
          %v4299 = vcombine.low %v4167, %v4169
          %v4301 = vunpack.c.l.s4 1983009808
          %v4302 = vunpack.c.0.s8 %v4301
          %v4303 = vlaneseq
          %v4304 = vshrl.u32 %v4303, 7
          %v4305 = vsub.s32 %v4302, %v4304
          %v4306 = vrot.slane %v4298, %v4305
          %v4308 = vunpack.c.l.s4 1983009808
          %v4309 = vunpack.c.0.s8 %v4308
          %v4310 = vlaneseq
          %v4311 = vshrl.u32 %v4310, 7
          %v4312 = vsub.s32 %v4309, %v4311
          %v4313 = vrot.slane %v4299, %v4312
          %v4314 = vcombine.low %v4306, %v4313
          %v4316 = vunpack.c.l.s4 1983009808
          %v4317 = vunpack.c.0.s8 %v4316
          %v4318 = vlaneseq
          %v4319 = vshrl.u32 %v4318, 7
          %v4320 = vsub.s32 %v4317, %v4319
          %v4321 = vrot.slane %v4288, %v4320
          %v4324 = vadd.f32 %v2677, %v4314
          %v4325 = vadd.f32 %v2678, %v4321
          %4326 = vst [vmem:[#allocation2] sm:$0xff] %v4324
          %4327 = vst [vmem:[#allocation2 + $0x8] sm:$0x3] %v4325
        $region80: #{tpu_custom_call.1} parent=43 // pred_fallthru
          _
        // Predicated region
        $region81: #{tpu_custom_call.1} parent=43 // pred_check
          %p4328 = pneg %p522
        $region82: #{tpu_custom_call.1} parent=43 // pred_check_branch
          %4330 = sbr.rel (%p4328) target = $region84
        $region83: #{tpu_custom_call.1} parent=43 // pred_region
          %v4331 = vld [vmem:[#allocation2] sm:$0xff]
          %v4332 = vld [vmem:[#allocation2 + $0x8] sm:$0x3]
          %v4333 = vld [vmem:[%s447] sm:$0x1f]
          %v4334 = vlaneseq
          %v4335 = vand.u32 %v4334, 127
          %v4336 = vadd.s32 %v4335, 128
          %v4337 = vadd.s32 %v4335, 256
          %v4338 = vadd.s32 %v4335, 384
          %v4339 = vadd.s32 %v4335, 512
          %s4340 = smul.u32 %s28, 640
          %v4341 = vstv %s4340
          %v4342 = vadd.s32 %v4335, %v4341
          %v4343 = vadd.s32 %v4336, %v4341
          %v4344 = vadd.s32 %v4337, %v4341
          %v4345 = vadd.s32 %v4338, %v4341
          %v4346 = vadd.s32 %v4339, %v4341
          %vm4347 = vcmp.lt.s32.totalorder %v4342, 512
          %vm4348 = vcmp.lt.s32.totalorder %v4343, 512
          %vm4349 = vcmp.lt.s32.totalorder %v4344, 512
          %vm4350 = vcmp.lt.s32.totalorder %v4345, 512
          %vm4351 = vcmp.lt.s32.totalorder %v4346, 512
          %v4353 = vlaneseq
          %v4354 = vshrl.u32 %v4353, 7
          %v4355 = vsub.s32 0, %v4354
          %v4356 = vrot.slane %v4333, %v4355
          %v4357 = vlaneseq
          %v4358 = vshrl.u32 %v4357, 7
          %v4359 = vsub.s32 1, %v4358
          %v4360 = vrot.slane %v4333, %v4359
          %v4361 = vlaneseq
          %v4362 = vshrl.u32 %v4361, 7
          %v4363 = vsub.s32 2, %v4362
          %v4364 = vrot.slane %v4333, %v4363
          %v4365 = vlaneseq
          %v4366 = vshrl.u32 %v4365, 7
          %v4367 = vsub.s32 3, %v4366
          %v4368 = vrot.slane %v4333, %v4367
          %v4369 = vlaneseq
          %v4370 = vshrl.u32 %v4369, 7
          %v4371 = vsub.s32 4, %v4370
          %v4372 = vrot.slane %v4333, %v4371
          %v4373 = vcombine.low %v4356, %v4360
          %v4374 = vcombine.low %v4364, %v4368
          %v4376 = vunpack.c.l.s4 1983009808
          %v4377 = vunpack.c.0.s8 %v4376
          %v4378 = vlaneseq
          %v4379 = vshrl.u32 %v4378, 7
          %v4380 = vsub.s32 %v4377, %v4379
          %v4381 = vrot.slane %v4373, %v4380
          %v4383 = vunpack.c.l.s4 1983009808
          %v4384 = vunpack.c.0.s8 %v4383
          %v4385 = vlaneseq
          %v4386 = vshrl.u32 %v4385, 7
          %v4387 = vsub.s32 %v4384, %v4386
          %v4388 = vrot.slane %v4374, %v4387
          %v4389 = vcombine.low %v4381, %v4388
          %v4391 = vunpack.c.l.s4 1983009808
          %v4392 = vunpack.c.0.s8 %v4391
          %v4393 = vlaneseq
          %v4394 = vshrl.u32 %v4393, 7
          %v4395 = vsub.s32 %v4392, %v4394
          %v4396 = vrot.slane %v4372, %v4395
          %v4399 = vmul.f32 %v4331, %v4389
          %v4400 = vmul.f32 %v4332, %v4396
          %v4401 = vmul.f32 %v4331, %v4331
          %v4402 = vmul.f32 %v4332, %v4332
          %v4405 = vcombine.high %v4399, %v4399
          %v4407 = vunpack.c.l.s4 1983009808
          %v4408 = vunpack.c.0.s8 %v4407
          %v4409 = vlaneseq
          %v4410 = vshrl.u32 %v4409, 7
          %v4411 = vsub.s32 %v4408, %v4410
          %v4412 = vrot.slane %v4399, %v4411
          %v4414 = vunpack.c.l.s4 1983009808
          %v4415 = vunpack.c.0.s8 %v4414
          %v4416 = vlaneseq
          %v4417 = vshrl.u32 %v4416, 7
          %v4418 = vsub.s32 %v4415, %v4417
          %v4419 = vrot.slane %v4405, %v4418
          %v4420 = vcombine.high %v4412, %v4412
          %v4421 = vcombine.high %v4419, %v4419
          %v4423 = vunpack.c.l.s4 1983009808
          %v4424 = vunpack.c.0.s8 %v4423
          %v4425 = vlaneseq
          %v4426 = vshrl.u32 %v4425, 7
          %v4427 = vsub.s32 %v4424, %v4426
          %v4428 = vrot.slane %v4400, %v4427
          %v4434 = vsel %vm4347, %v4412, 0.0
          %v4435 = vsel %vm4348, %v4420, 0.0
          %v4436 = vsel %vm4349, %v4419, 0.0
          %v4437 = vsel %vm4350, %v4421, 0.0
          %v4438 = vsel %vm4351, %v4428, 0.0
          %vm4439 = vcmask 1041408
          %v4440 = vsel %vm4439, %v4434, 0.0
          %v4441 = vsel %vm4439, %v4435, 0.0
          %v4442 = vadd.f32 %v4440, %v4441
          %v4443 = vsel %vm4439, %v4436, 0.0
          %v4444 = vadd.f32 %v4442, %v4443
          %v4445 = vsel %vm4439, %v4437, 0.0
          %v4446 = vadd.f32 %v4444, %v4445
          %v4447 = vsel %vm4439, %v4438, 0.0
          %v4448 = vadd.f32 %v4446, %v4447
          %4449 = vadd.xlane.f32.xlu0 %v4448
          %v4450 = vpop.xlane.xlu0 %4449
          %vm4451 = vcmask 1024
          %4452 = vst.msk [vmem:[%s508] sm:$0x3] %vm4451, %v4450
          %v4453 = vsel %vm4347, 0.0, %v4412
          %v4454 = vsel %vm4348, 0.0, %v4420
          %v4455 = vsel %vm4349, 0.0, %v4419
          %v4456 = vsel %vm4350, 0.0, %v4421
          %v4457 = vsel %vm4351, 0.0, %v4428
          %v4458 = vsel %vm4439, %v4453, 0.0
          %v4459 = vsel %vm4439, %v4454, 0.0
          %v4460 = vadd.f32 %v4458, %v4459
          %v4461 = vsel %vm4439, %v4455, 0.0
          %v4462 = vadd.f32 %v4460, %v4461
          %v4463 = vsel %vm4439, %v4456, 0.0
          %v4464 = vadd.f32 %v4462, %v4463
          %v4465 = vsel %vm4439, %v4457, 0.0
          %v4466 = vadd.f32 %v4464, %v4465
          %4467 = vadd.xlane.f32.xlu0 %v4466
          %v4468 = vpop.xlane.xlu0 %4467
          %4469 = vst.msk [vmem:[%s512] sm:$0x3] %vm4451, %v4468
          %v4472 = vcombine.high %v4401, %v4401
          %v4474 = vunpack.c.l.s4 1983009808
          %v4475 = vunpack.c.0.s8 %v4474
          %v4476 = vlaneseq
          %v4477 = vshrl.u32 %v4476, 7
          %v4478 = vsub.s32 %v4475, %v4477
          %v4479 = vrot.slane %v4401, %v4478
          %v4481 = vunpack.c.l.s4 1983009808
          %v4482 = vunpack.c.0.s8 %v4481
          %v4483 = vlaneseq
          %v4484 = vshrl.u32 %v4483, 7
          %v4485 = vsub.s32 %v4482, %v4484
          %v4486 = vrot.slane %v4472, %v4485
          %v4487 = vcombine.high %v4479, %v4479
          %v4488 = vcombine.high %v4486, %v4486
          %v4490 = vunpack.c.l.s4 1983009808
          %v4491 = vunpack.c.0.s8 %v4490
          %v4492 = vlaneseq
          %v4493 = vshrl.u32 %v4492, 7
          %v4494 = vsub.s32 %v4491, %v4493
          %v4495 = vrot.slane %v4402, %v4494
          %v4501 = vsel %vm4347, %v4479, 0.0
          %v4502 = vsel %vm4348, %v4487, 0.0
          %v4503 = vsel %vm4349, %v4486, 0.0
          %v4504 = vsel %vm4350, %v4488, 0.0
          %v4505 = vsel %vm4351, %v4495, 0.0
          %v4506 = vsel %vm4439, %v4501, 0.0
          %v4507 = vsel %vm4439, %v4502, 0.0
          %v4508 = vadd.f32 %v4506, %v4507
          %v4509 = vsel %vm4439, %v4503, 0.0
          %v4510 = vadd.f32 %v4508, %v4509
          %v4511 = vsel %vm4439, %v4504, 0.0
          %v4512 = vadd.f32 %v4510, %v4511
          %v4513 = vsel %vm4439, %v4505, 0.0
          %v4514 = vadd.f32 %v4512, %v4513
          %4515 = vadd.xlane.f32.xlu0 %v4514
          %v4516 = vpop.xlane.xlu0 %4515
          %4517 = vst.msk [vmem:[%s516] sm:$0x3] %vm4451, %v4516
          %v4518 = vsel %vm4347, 0.0, %v4479
          %v4519 = vsel %vm4348, 0.0, %v4487
          %v4520 = vsel %vm4349, 0.0, %v4486
          %v4521 = vsel %vm4350, 0.0, %v4488
          %v4522 = vsel %vm4351, 0.0, %v4495
          %v4523 = vsel %vm4439, %v4518, 0.0
          %v4524 = vsel %vm4439, %v4519, 0.0
          %v4525 = vadd.f32 %v4523, %v4524
          %v4526 = vsel %vm4439, %v4520, 0.0
          %v4527 = vadd.f32 %v4525, %v4526
          %v4528 = vsel %vm4439, %v4521, 0.0
          %v4529 = vadd.f32 %v4527, %v4528
          %v4530 = vsel %vm4439, %v4522, 0.0
          %v4531 = vadd.f32 %v4529, %v4530
          %4532 = vadd.xlane.f32.xlu0 %v4531
          %v4533 = vpop.xlane.xlu0 %4532
          %4534 = vst.msk [vmem:[%s520] sm:$0x3] %vm4451, %v4533
        $region84: #{tpu_custom_call.1} parent=43 // pred_fallthru
          _
        %p4535 = scmp.lt.s32.totalorder %s28, 1
        %s4536 = scalar_select %p4535, %s28, 1
        %s4537 = smul.addr %s4536, 2
        %s4538 = scalar_lea.vmem %s6, %s4537
        %p4539 = scmp.lt.s32.totalorder %s28, 1
        %s4540 = scalar_select %p4539, %s28, 1
        %s4541 = smul.addr %s4540, 2
        %s4542 = scalar_lea.vmem %s7, %s4541
        %p4543 = scmp.lt.s32.totalorder %s28, 1
        %s4544 = scalar_select %p4543, %s28, 1
        %s4545 = smul.addr %s4544, 2
        %s4546 = scalar_lea.vmem %s8, %s4545
        %p4547 = scmp.lt.s32.totalorder %s28, 1
        %s4548 = scalar_select %p4547, %s28, 1
        %s4549 = smul.addr %s4548, 2
        %s4550 = scalar_lea.vmem %s9, %s4549
        // Predicated region
        $region85: #{tpu_custom_call.1} parent=43 // pred_check
          %p4551 = pneg %p212
        $region86: #{tpu_custom_call.1} parent=43 // pred_check_branch
          %4553 = sbr.rel (%p4551) target = $region88
        $region87: #{tpu_custom_call.1} parent=43 // pred_region
          _
        $region88: #{tpu_custom_call.1} parent=43 // pred_fallthru
          _
        // Predicated region
        $region89: #{tpu_custom_call.1} parent=43 // pred_check
          %p4554 = pneg %p238
        $region90: #{tpu_custom_call.1} parent=43 // pred_check_branch
          %4556 = sbr.rel (%p4554) target = $region92
        $region91: #{tpu_custom_call.1} parent=43 // pred_region
          _
        $region92: #{tpu_custom_call.1} parent=43 // pred_fallthru
          _
        // Predicated region
        $region93: #{tpu_custom_call.1} parent=43 // pred_check
          %p4557 = pneg %p264
        $region94: #{tpu_custom_call.1} parent=43 // pred_check_branch
          %4559 = sbr.rel (%p4557) target = $region96
        $region95: #{tpu_custom_call.1} parent=43 // pred_region
          _
        $region96: #{tpu_custom_call.1} parent=43 // pred_fallthru
          _
        // Predicated region
        $region97: #{tpu_custom_call.1} parent=43 // pred_check
          %p4560 = pneg %p290
        $region98: #{tpu_custom_call.1} parent=43 // pred_check_branch
          %4562 = sbr.rel (%p4560) target = $region100
        $region99: #{tpu_custom_call.1} parent=43 // pred_region
          _
        $region100: #{tpu_custom_call.1} parent=43 // pred_fallthru
          _
      $region44: #{tpu_custom_call.1} parent=5 // pred_fallthru
        _
      %p4563 = scmp.le.s32.totalorder 2, %s19
      // Predicated region
      $region101: #{tpu_custom_call.1} parent=5 // pred_check
        %p4564 = pneg %p4563
      $region102: #{tpu_custom_call.1} parent=5 // pred_check_branch
        %4566 = sbr.rel (%p4564) target = $region104
      $region103: #{tpu_custom_call.1} parent=5 // pred_region
        %s4567 = ssub.s32 %s19, 2
        // Predicated region
        $region105: #{tpu_custom_call.1} parent=103 // pred_check
          %p4568 = pneg %p218
        $region106: #{tpu_custom_call.1} parent=103 // pred_check_branch
          %4570 = sbr.rel (%p4568) target = $region108
        $region107: #{tpu_custom_call.1} parent=103 // pred_region
          %p4571 = scmp.lt.s32.totalorder %s30, 1
          %s4572 = scalar_select %p4571, %s30, 1
          %s4573 = smul.addr %s4572, 2
          %s4574 = scalar_lea.vmem %s6, %s4573
        $region108: #{tpu_custom_call.1} parent=103 // pred_fallthru
          _
        // Predicated region
        $region109: #{tpu_custom_call.1} parent=103 // pred_check
          %p4575 = pneg %p244
        $region110: #{tpu_custom_call.1} parent=103 // pred_check_branch
          %4577 = sbr.rel (%p4575) target = $region112
        $region111: #{tpu_custom_call.1} parent=103 // pred_region
          %p4578 = scmp.lt.s32.totalorder %s30, 1
          %s4579 = scalar_select %p4578, %s30, 1
          %s4580 = smul.addr %s4579, 2
          %s4581 = scalar_lea.vmem %s7, %s4580
        $region112: #{tpu_custom_call.1} parent=103 // pred_fallthru
          _
        // Predicated region
        $region113: #{tpu_custom_call.1} parent=103 // pred_check
          %p4582 = pneg %p270
        $region114: #{tpu_custom_call.1} parent=103 // pred_check_branch
          %4584 = sbr.rel (%p4582) target = $region116
        $region115: #{tpu_custom_call.1} parent=103 // pred_region
          %p4585 = scmp.lt.s32.totalorder %s30, 1
          %s4586 = scalar_select %p4585, %s30, 1
          %s4587 = smul.addr %s4586, 2
          %s4588 = scalar_lea.vmem %s8, %s4587
        $region116: #{tpu_custom_call.1} parent=103 // pred_fallthru
          _
        // Predicated region
        $region117: #{tpu_custom_call.1} parent=103 // pred_check
          %p4589 = pneg %p296
        $region118: #{tpu_custom_call.1} parent=103 // pred_check_branch
          %4591 = sbr.rel (%p4589) target = $region120
        $region119: #{tpu_custom_call.1} parent=103 // pred_region
          %p4592 = scmp.lt.s32.totalorder %s30, 1
          %s4593 = scalar_select %p4592, %s30, 1
          %s4594 = smul.addr %s4593, 2
          %s4595 = scalar_lea.vmem %s9, %s4594
        $region120: #{tpu_custom_call.1} parent=103 // pred_fallthru
          _
      $region104: #{tpu_custom_call.1} parent=5 // pred_fallthru
        _
    $region6: #{tpu_custom_call.1} parent=1 // loop_footer
      %s23 = sadd.s32 1, %s19
    $region7: #{tpu_custom_call.1} parent=1 // loop_footer_branch
      %18 = sbr.rel target = $region3
    $region8: #{tpu_custom_call.1} parent=1 // loop_exit
      _
    %4596 = vsyncpa [#allocation4], 1
    %s4597 = scalar_lea.sflag [#allocation4], 1
    %4598 = vsyncpa %s4597, 1
    %4599 = vsyncpa [#allocation6], 1
    %4600 = vsyncpa [#allocation9], 1

</llo_original>
